<compile_context>
chip_gen: v7x
topology: tpu7x:2x2x1
jax: 0.10.0
libtpu: 0.0.40
codegen_flags: <defaults>
</compile_context>

<pallas_src>
import functools

import jax
import jax.numpy as jnp
from jax.experimental import pallas as pl
from jax.experimental.pallas import tpu as pltpu


def attention_dec_kernel(q_stack_ref, x_ref, wk_ref, wv_ref, wp_ref, bp_ref,
                         o_ref, *, num_heads, head_dim, block_b):
    C = num_heads * head_dim
    N = x_ref.shape[1]
    Tq = q_stack_ref.shape[0] // num_heads

    # Grid-invariant inputs (softmax scale and per-head masks already folded
    # into q_stack by the wrapper).
    q_stack = q_stack_ref[...]          # (num_heads * Tq, C)
    wk = wk_ref[...]                    # (C, C)
    wv = wv_ref[...]                    # (C, C)
    wp = wp_ref[...]                    # (C, C)
    bias = bp_ref[...]                  # (1, C)

    # k / v projections for the whole batch block, one matmul per weight
    # (no bias: qkv_bias=False in the module).
    x_flat = x_ref[...].reshape(block_b * N, C)
    k_all = jnp.dot(x_flat, wk, preferred_element_type=jnp.float32)   # (Bt*N, C)
    v_all = jnp.dot(x_flat, wv, preferred_element_type=jnp.float32)   # (Bt*N, C)

    # Per-head lane masks, built once per grid step (hoisted out of the b loop).
    lane = jax.lax.broadcasted_iota(jnp.int32, (1, C), 1)
    head_masks = [((lane >= h * head_dim) & (lane < (h + 1) * head_dim))
                  .astype(jnp.float32) for h in range(num_heads)]

    accs = []
    for b in range(block_b):
        k_b = k_all[b * N:(b + 1) * N, :]      # static sublane-aligned slices
        v_b = v_all[b * N:(b + 1) * N, :]

        # ONE stacked score matmul for all heads: rows [h*Tq:(h+1)*Tq] of
        # q_stack hold q * mask_h, so the full-C contraction equals head h's
        # head_dim-wide contraction (cross-head terms are zeroed).
        s = jax.lax.dot_general(q_stack, k_b, (((1,), (1,)), ((), ())),
                                preferred_element_type=jnp.float32)   # (H*Tq, N)
        s = s - jnp.max(s, axis=-1, keepdims=True)
        p = jnp.exp(s)
        p = p * pl.reciprocal(jnp.sum(p, axis=-1, keepdims=True), approx=True)

        # ONE stacked PV matmul for all heads.
        pv = jnp.dot(p, v_b, preferred_element_type=jnp.float32)      # (H*Tq, C)

        # Head combine: head h contributes only its own C-columns (cheap VPU).
        acc = jnp.zeros((Tq, C), jnp.float32)
        for h in range(num_heads):
            acc = acc + pv[h * Tq:(h + 1) * Tq, :] * head_masks[h]
        accs.append(acc)

    # Hoisted output projection + bias, then ONE bulk store for the block.
    acc_all = accs[0] if block_b == 1 else jnp.concatenate(accs, axis=0)
    out = jnp.dot(acc_all, wp, preferred_element_type=jnp.float32) + bias
    o_ref[...] = out.reshape(block_b, N, C).astype(o_ref.dtype)


def _num_tensorcores():
    """Best-effort TensorCores-per-chip (2 only on v7x); defaults to 1."""
    try:
        d = jax.devices()[0]
        kind = str(getattr(d, "device_kind", "")).lower()
        if "v7" in kind:
            return 2
        n = getattr(d, "num_cores", None)
        if isinstance(n, int) and n > 1:
            return n
    except Exception:  # pragma: no cover - defensive (interpret mode etc.)
        pass
    return 1


# Conservative budget: stays within the default scoped-VMEM limit everywhere,
# so a block sized on v6e (128 MiB physical) never overflows v7x (64 MiB).
_VMEM_BUDGET_BYTES = 24 * 1024 * 1024


def _vmem_bytes(block_b, N, Tq, C, num_heads, itemsize=4):
    """Rough VMEM footprint: double-buffered blocks + invariants + live temps."""
    xo_blocks = 2 * 2 * block_b * N * C * itemsize              # x in + out
    invariants = 2 * (num_heads * Tq * C + 3 * C * C + C) * itemsize
    live = (2 * block_b * N * C                                 # k_all, v_all
            + num_heads * Tq * (N + C)                          # scores + pv
            + block_b * Tq * C) * 4                             # acc_all
    return xo_blocks + invariants + live


def _pick_block_b(B, N, Tq, C, num_heads):
    """Generation-aware batch-block choice.

    One grid step amortizes the ~0.35us/step pipeline overhead (dominant at
    small shapes); split the batch only when (a) a second TensorCore exists
    (v7x) and each half still carries >~5 MFLOP of MXU work, or (b) the
    full-batch block would not fit the conservative VMEM budget.
    """
    flops_per_b = (2 * N * C * 2 * C             # kv projection
                   + 2 * num_heads * Tq * C * N  # stacked scores (full-C trick)
                   + 2 * num_heads * Tq * N * C  # stacked PV
                   + 2 * Tq * C * C)             # output projection
    block_b = B
    if (_num_tensorcores() >= 2 and B % 2 == 0
            and (B // 2) * flops_per_b >= 5_000_000):
        block_b = B // 2
    while (block_b > 1
           and _vmem_bytes(block_b, N, Tq, C, num_heads) > _VMEM_BUDGET_BYTES):
        block_b = max(d for d in range(1, block_b) if B % d == 0)
    return block_b


def attention_dec(x, task_query, wq_t, wkv_t, wp_t, bp, *, num_heads, block_b=None):
    """x: (B, N, C); task_query: (Tq, C) with Tq == N; weights pre-transposed
    so that y = x @ W_t (+ b)."""
    B, N, C = x.shape
    Tq = task_query.shape[0]
    assert Tq == N, "task_query length must equal N for the reshape in forward()"
    assert C % num_heads == 0
    head_dim = C // num_heads
    scale = head_dim ** (-0.5)

    # Hoisted batch-invariant q projection with the softmax scale folded in,
    # pre-stacked per head with that head's lane mask applied:
    #   q_stack[h*Tq + t, :] = scale * (task_query @ Wq^T)[t, :] * mask_h
    q_scaled = (task_query @ wq_t) * jnp.asarray(scale, task_query.dtype)  # (Tq, C)
    head_of_lane = jnp.arange(C) // head_dim
    masks = (head_of_lane[None, :] ==
             jnp.arange(num_heads)[:, None]).astype(q_scaled.dtype)        # (H, C)
    q_stack = (q_scaled[None, :, :] * masks[:, None, :]).reshape(num_heads * Tq, C)

    # Split the fused kv weight once outside the kernel (C=32 lane slices are
    # not vreg-aligned in-kernel).  TODO(synk): at C >= 128 keep the fused
    # (C, 2C) weight and lane-slice inside the kernel instead.
    wk_t = wkv_t[:, :C]
    wv_t = wkv_t[:, C:]
    bias = bp.reshape(1, C)

    if block_b is None:
        block_b = _pick_block_b(B, N, Tq, C, num_heads)
    assert B % block_b == 0, "batch must be divisible by the batch block size"
    grid = (B // block_b,)

    kernel = functools.partial(
        attention_dec_kernel,
        num_heads=num_heads, head_dim=head_dim, block_b=block_b)

    return pl.pallas_call(
        kernel,
        out_shape=jax.ShapeDtypeStruct((B, N, C), x.dtype),
        grid=grid,
        in_specs=[
            pl.BlockSpec((num_heads * Tq, C), lambda i: (0, 0)),   # stacked q
            pl.BlockSpec((block_b, N, C), lambda i: (i, 0, 0)),    # x block
            pl.BlockSpec((C, C), lambda i: (0, 0)),                # Wk^T
            pl.BlockSpec((C, C), lambda i: (0, 0)),                # Wv^T
            pl.BlockSpec((C, C), lambda i: (0, 0)),                # Wproj^T
            pl.BlockSpec((1, C), lambda i: (0, 0)),                # bproj
        ],
        out_specs=pl.BlockSpec((block_b, N, C), lambda i: (i, 0, 0)),
        compiler_params=pltpu.CompilerParams(
            dimension_semantics=("parallel",)),
    )(q_stack, x, wk_t, wv_t, wp_t, bias)


def attention_dec_ref(x, task_query, wq_t, wkv_t, wp_t, bp, *, num_heads):
    """Pure-JAX reference mirroring the PyTorch forward (sr_ratio=1)."""
    B, N, C = x.shape
    d = C // num_heads
    scale = d ** (-0.5)
    tq = jnp.broadcast_to(task_query[None], (B,) + task_query.shape)      # (B,Tq,C)
    q = (tq @ wq_t).reshape(B, -1, num_heads, d).transpose(0, 2, 1, 3)    # (B,h,Tq,d)
    kv = (x @ wkv_t).reshape(B, N, 2, num_heads, d).transpose(2, 0, 3, 1, 4)
    k, v = kv[0], kv[1]                                                   # (B,h,N,d)
    attn = jnp.einsum('bhqd,bhkd->bhqk', q, k) * scale
    attn = jax.nn.softmax(attn, axis=-1)
    o = jnp.einsum('bhqk,bhkd->bhqd', attn, v).transpose(0, 2, 1, 3).reshape(B, N, C)
    return o @ wp_t + bp


if __name__ == "__main__":
    # Module-consistent small shapes:
    # dim=32, num_heads=8, input_resolution=8 -> N = 8*8 = 64, batch=2.
    B, C, num_heads, input_res = 2, 32, 8, 8
    H = W = input_res
    N = H * W

    key = jax.random.PRNGKey(0)
    k_x, k_tq, k_q, k_kv, k_p, k_bias = jax.random.split(key, 6)

    x = jax.random.normal(k_x, (B, N, C), dtype=jnp.float32)

    # Deterministic "trunc_normal(std=0.02)"-style init (synthetic).
    task_query = jax.random.normal(k_tq, (input_res * input_res, C), jnp.float32)
    wq_t = 0.02 * jax.random.normal(k_q, (C, C), jnp.float32)        # Wq^T
    wkv_t = 0.02 * jax.random.normal(k_kv, (C, 2 * C), jnp.float32)  # Wkv^T
    wp_t = 0.02 * jax.random.normal(k_p, (C, C), jnp.float32)        # Wproj^T
    bp = 0.02 * jax.random.normal(k_bias, (C,), jnp.float32)         # proj bias

    out = attention_dec(x, task_query, wq_t, wkv_t, wp_t, bp, num_heads=num_heads)
    out = jax.block_until_ready(out)

    ref = attention_dec_ref(x, task_query, wq_t, wkv_t, wp_t, bp, num_heads=num_heads)
    assert out.shape == (B, N, C)
    # approx reciprocal (~2^-12 rel err) in the softmax -> slightly loosened tol.
    assert jnp.allclose(out, ref, atol=1e-3, rtol=1e-3), "mismatch vs reference"

    print("KERNEL_OK")
</pallas_src>

<mosaic_0001>
module attributes {stable_mosaic.version = 11 : i64} {
  func.func @attention_dec_kernel(%arg0: i32, %arg1: memref<512x32xf32, #tpu.memory_space<vmem>>, %arg2: memref<2x64x32xf32, #tpu.memory_space<vmem>>, %arg3: memref<32x32xf32, #tpu.memory_space<vmem>>, %arg4: memref<32x32xf32, #tpu.memory_space<vmem>>, %arg5: memref<32x32xf32, #tpu.memory_space<vmem>>, %arg6: memref<1x32xf32, #tpu.memory_space<vmem>>, %arg7: memref<2x64x32xf32, #tpu.memory_space<vmem>>) attributes {dimension_semantics = [#tpu.dimension_semantics<parallel>], iteration_bounds = array<i64: 1>, scalar_prefetch = 0 : i64, scratch_operands = 0 : i64, tpu.core_type = #tpu.core_type<tc>, window_params = [{pipeline_mode = #tpu.pipeline_mode<synchronous>, transform_indices = @transform_0, window_bounds = array<i64: 512, 32>}, {transform_indices = @transform_1, window_bounds = array<i64: 2, 64, 32>}, {pipeline_mode = #tpu.pipeline_mode<synchronous>, transform_indices = @transform_2, window_bounds = array<i64: 32, 32>}, {pipeline_mode = #tpu.pipeline_mode<synchronous>, transform_indices = @transform_3, window_bounds = array<i64: 32, 32>}, {pipeline_mode = #tpu.pipeline_mode<synchronous>, transform_indices = @transform_4, window_bounds = array<i64: 32, 32>}, {pipeline_mode = #tpu.pipeline_mode<synchronous>, transform_indices = @transform_5, window_bounds = array<i64: 1, 32>}, {transform_indices = @transform_6, window_bounds = array<i64: 2, 64, 32>}]} {
    %c0 = arith.constant 0 : index
    %c0_0 = arith.constant 0 : index
    %0 = vector.load %arg1[%c0, %c0_0] : memref<512x32xf32, #tpu.memory_space<vmem>>, vector<512x32xf32>
    %c0_1 = arith.constant 0 : index
    %c0_2 = arith.constant 0 : index
    %1 = vector.load %arg3[%c0_1, %c0_2] : memref<32x32xf32, #tpu.memory_space<vmem>>, vector<32x32xf32>
    %c0_3 = arith.constant 0 : index
    %c0_4 = arith.constant 0 : index
    %2 = vector.load %arg4[%c0_3, %c0_4] : memref<32x32xf32, #tpu.memory_space<vmem>>, vector<32x32xf32>
    %c0_5 = arith.constant 0 : index
    %c0_6 = arith.constant 0 : index
    %3 = vector.load %arg5[%c0_5, %c0_6] : memref<32x32xf32, #tpu.memory_space<vmem>>, vector<32x32xf32>
    %c0_7 = arith.constant 0 : index
    %c0_8 = arith.constant 0 : index
    %4 = vector.load %arg6[%c0_7, %c0_8] : memref<1x32xf32, #tpu.memory_space<vmem>>, vector<1x32xf32>
    %c0_9 = arith.constant 0 : index
    %c0_10 = arith.constant 0 : index
    %c0_11 = arith.constant 0 : index
    %5 = vector.load %arg2[%c0_9, %c0_10, %c0_11] : memref<2x64x32xf32, #tpu.memory_space<vmem>>, vector<2x64x32xf32>
    %6 = vector.shape_cast %5 : vector<2x64x32xf32> to vector<128x32xf32>
    %cst = arith.constant dense<0.000000e+00> : vector<128x32xf32>
    %7 = tpu.matmul %6, %1, %cst {dimension_numbers = #tpu.dot_dimension_numbers<[1], [0], [0], [1], [0, 0, 1, 1], [], []>} : vector<128x32xf32>, vector<32x32xf32>, vector<128x32xf32> -> vector<128x32xf32>
    %cst_12 = arith.constant dense<0.000000e+00> : vector<128x32xf32>
    %8 = tpu.matmul %6, %2, %cst_12 {dimension_numbers = #tpu.dot_dimension_numbers<[1], [0], [0], [1], [0, 0, 1, 1], [], []>} : vector<128x32xf32>, vector<32x32xf32>, vector<128x32xf32> -> vector<128x32xf32>
    %9 = tpu.iota {dimensions = array<i32: 1>} : vector<1x32xi32>
    %c0_i32 = arith.constant 0 : i32
    %10 = vector.broadcast %c0_i32 : i32 to vector<1x32xi32>
    %11 = arith.cmpi sge, %9, %10 : vector<1x32xi32>
    %c4_i32 = arith.constant 4 : i32
    %12 = vector.broadcast %c4_i32 : i32 to vector<1x32xi32>
    %13 = arith.cmpi slt, %9, %12 : vector<1x32xi32>
    %14 = arith.andi %11, %13 : vector<1x32xi1>
    %15 = arith.extui %14 : vector<1x32xi1> to vector<1x32xi32>
    %16 = arith.sitofp %15 : vector<1x32xi32> to vector<1x32xf32>
    %c4_i32_13 = arith.constant 4 : i32
    %17 = vector.broadcast %c4_i32_13 : i32 to vector<1x32xi32>
    %18 = arith.cmpi sge, %9, %17 : vector<1x32xi32>
    %c8_i32 = arith.constant 8 : i32
    %19 = vector.broadcast %c8_i32 : i32 to vector<1x32xi32>
    %20 = arith.cmpi slt, %9, %19 : vector<1x32xi32>
    %21 = arith.andi %18, %20 : vector<1x32xi1>
    %22 = arith.extui %21 : vector<1x32xi1> to vector<1x32xi32>
    %23 = arith.sitofp %22 : vector<1x32xi32> to vector<1x32xf32>
    %c8_i32_14 = arith.constant 8 : i32
    %24 = vector.broadcast %c8_i32_14 : i32 to vector<1x32xi32>
    %25 = arith.cmpi sge, %9, %24 : vector<1x32xi32>
    %c12_i32 = arith.constant 12 : i32
    %26 = vector.broadcast %c12_i32 : i32 to vector<1x32xi32>
    %27 = arith.cmpi slt, %9, %26 : vector<1x32xi32>
    %28 = arith.andi %25, %27 : vector<1x32xi1>
    %29 = arith.extui %28 : vector<1x32xi1> to vector<1x32xi32>
    %30 = arith.sitofp %29 : vector<1x32xi32> to vector<1x32xf32>
    %c12_i32_15 = arith.constant 12 : i32
    %31 = vector.broadcast %c12_i32_15 : i32 to vector<1x32xi32>
    %32 = arith.cmpi sge, %9, %31 : vector<1x32xi32>
    %c16_i32 = arith.constant 16 : i32
    %33 = vector.broadcast %c16_i32 : i32 to vector<1x32xi32>
    %34 = arith.cmpi slt, %9, %33 : vector<1x32xi32>
    %35 = arith.andi %32, %34 : vector<1x32xi1>
    %36 = arith.extui %35 : vector<1x32xi1> to vector<1x32xi32>
    %37 = arith.sitofp %36 : vector<1x32xi32> to vector<1x32xf32>
    %c16_i32_16 = arith.constant 16 : i32
    %38 = vector.broadcast %c16_i32_16 : i32 to vector<1x32xi32>
    %39 = arith.cmpi sge, %9, %38 : vector<1x32xi32>
    %c20_i32 = arith.constant 20 : i32
    %40 = vector.broadcast %c20_i32 : i32 to vector<1x32xi32>
    %41 = arith.cmpi slt, %9, %40 : vector<1x32xi32>
    %42 = arith.andi %39, %41 : vector<1x32xi1>
    %43 = arith.extui %42 : vector<1x32xi1> to vector<1x32xi32>
    %44 = arith.sitofp %43 : vector<1x32xi32> to vector<1x32xf32>
    %c20_i32_17 = arith.constant 20 : i32
    %45 = vector.broadcast %c20_i32_17 : i32 to vector<1x32xi32>
    %46 = arith.cmpi sge, %9, %45 : vector<1x32xi32>
    %c24_i32 = arith.constant 24 : i32
    %47 = vector.broadcast %c24_i32 : i32 to vector<1x32xi32>
    %48 = arith.cmpi slt, %9, %47 : vector<1x32xi32>
    %49 = arith.andi %46, %48 : vector<1x32xi1>
    %50 = arith.extui %49 : vector<1x32xi1> to vector<1x32xi32>
    %51 = arith.sitofp %50 : vector<1x32xi32> to vector<1x32xf32>
    %c24_i32_18 = arith.constant 24 : i32
    %52 = vector.broadcast %c24_i32_18 : i32 to vector<1x32xi32>
    %53 = arith.cmpi sge, %9, %52 : vector<1x32xi32>
    %c28_i32 = arith.constant 28 : i32
    %54 = vector.broadcast %c28_i32 : i32 to vector<1x32xi32>
    %55 = arith.cmpi slt, %9, %54 : vector<1x32xi32>
    %56 = arith.andi %53, %55 : vector<1x32xi1>
    %57 = arith.extui %56 : vector<1x32xi1> to vector<1x32xi32>
    %58 = arith.sitofp %57 : vector<1x32xi32> to vector<1x32xf32>
    %c28_i32_19 = arith.constant 28 : i32
    %59 = vector.broadcast %c28_i32_19 : i32 to vector<1x32xi32>
    %60 = arith.cmpi sge, %9, %59 : vector<1x32xi32>
    %c32_i32 = arith.constant 32 : i32
    %61 = vector.broadcast %c32_i32 : i32 to vector<1x32xi32>
    %62 = arith.cmpi slt, %9, %61 : vector<1x32xi32>
    %63 = arith.andi %60, %62 : vector<1x32xi1>
    %64 = arith.extui %63 : vector<1x32xi1> to vector<1x32xi32>
    %65 = arith.sitofp %64 : vector<1x32xi32> to vector<1x32xf32>
    %66 = vector.extract_strided_slice %7 {offsets = [0, 0], sizes = [64, 32], strides = [1, 1]} : vector<128x32xf32> to vector<64x32xf32>
    %67 = vector.extract_strided_slice %8 {offsets = [0, 0], sizes = [64, 32], strides = [1, 1]} : vector<128x32xf32> to vector<64x32xf32>
    %cst_20 = arith.constant dense<0.000000e+00> : vector<512x64xf32>
    %68 = tpu.matmul %0, %66, %cst_20 {dimension_numbers = #tpu.dot_dimension_numbers<[1], [1], [0], [0], [0, 0, 1, 0], [], []>} : vector<512x32xf32>, vector<64x32xf32>, vector<512x64xf32> -> vector<512x64xf32>
    %cst_21 = arith.constant dense<0xFF800000> : vector<512xf32>
    %69 = vector.multi_reduction <maximumf>, %68, %cst_21 [1] : vector<512x64xf32> to vector<512xf32>
    %70 = vector.shape_cast %69 : vector<512xf32> to vector<512x1xf32>
    %71 = vector.broadcast %70 : vector<512x1xf32> to vector<512x64xf32>
    %72 = arith.subf %68, %71 : vector<512x64xf32>
    %73 = math.exp %72 : vector<512x64xf32>
    %cst_22 = arith.constant dense<0.000000e+00> : vector<512xf32>
    %74 = vector.multi_reduction <add>, %73, %cst_22 [1] : vector<512x64xf32> to vector<512xf32>
    %75 = vector.shape_cast %74 : vector<512xf32> to vector<512x1xf32>
    %76 = tpu.reciprocal %75 {approx = true} : vector<512x1xf32> -> vector<512x1xf32>
    %77 = vector.broadcast %76 : vector<512x1xf32> to vector<512x64xf32>
    %78 = arith.mulf %73, %77 : vector<512x64xf32>
    %cst_23 = arith.constant dense<0.000000e+00> : vector<512x32xf32>
    %79 = tpu.matmul %78, %67, %cst_23 {dimension_numbers = #tpu.dot_dimension_numbers<[1], [0], [0], [1], [0, 0, 1, 1], [], []>} : vector<512x64xf32>, vector<64x32xf32>, vector<512x32xf32> -> vector<512x32xf32>
    %cst_24 = arith.constant 0.000000e+00 : f32
    %80 = vector.broadcast %cst_24 : f32 to vector<64x32xf32>
    %81 = vector.extract_strided_slice %79 {offsets = [0, 0], sizes = [64, 32], strides = [1, 1]} : vector<512x32xf32> to vector<64x32xf32>
    %82 = vector.broadcast %16 : vector<1x32xf32> to vector<64x32xf32>
    %83 = arith.mulf %81, %82 : vector<64x32xf32>
    %84 = arith.addf %80, %83 : vector<64x32xf32>
    %85 = vector.extract_strided_slice %79 {offsets = [64, 0], sizes = [64, 32], strides = [1, 1]} : vector<512x32xf32> to vector<64x32xf32>
    %86 = vector.broadcast %23 : vector<1x32xf32> to vector<64x32xf32>
    %87 = arith.mulf %85, %86 : vector<64x32xf32>
    %88 = arith.addf %84, %87 : vector<64x32xf32>
    %89 = vector.extract_strided_slice %79 {offsets = [128, 0], sizes = [64, 32], strides = [1, 1]} : vector<512x32xf32> to vector<64x32xf32>
    %90 = vector.broadcast %30 : vector<1x32xf32> to vector<64x32xf32>
    %91 = arith.mulf %89, %90 : vector<64x32xf32>
    %92 = arith.addf %88, %91 : vector<64x32xf32>
    %93 = vector.extract_strided_slice %79 {offsets = [192, 0], sizes = [64, 32], strides = [1, 1]} : vector<512x32xf32> to vector<64x32xf32>
    %94 = vector.broadcast %37 : vector<1x32xf32> to vector<64x32xf32>
    %95 = arith.mulf %93, %94 : vector<64x32xf32>
    %96 = arith.addf %92, %95 : vector<64x32xf32>
    %97 = vector.extract_strided_slice %79 {offsets = [256, 0], sizes = [64, 32], strides = [1, 1]} : vector<512x32xf32> to vector<64x32xf32>
    %98 = vector.broadcast %44 : vector<1x32xf32> to vector<64x32xf32>
    %99 = arith.mulf %97, %98 : vector<64x32xf32>
    %100 = arith.addf %96, %99 : vector<64x32xf32>
    %101 = vector.extract_strided_slice %79 {offsets = [320, 0], sizes = [64, 32], strides = [1, 1]} : vector<512x32xf32> to vector<64x32xf32>
    %102 = vector.broadcast %51 : vector<1x32xf32> to vector<64x32xf32>
    %103 = arith.mulf %101, %102 : vector<64x32xf32>
    %104 = arith.addf %100, %103 : vector<64x32xf32>
    %105 = vector.extract_strided_slice %79 {offsets = [384, 0], sizes = [64, 32], strides = [1, 1]} : vector<512x32xf32> to vector<64x32xf32>
    %106 = vector.broadcast %58 : vector<1x32xf32> to vector<64x32xf32>
    %107 = arith.mulf %105, %106 : vector<64x32xf32>
    %108 = arith.addf %104, %107 : vector<64x32xf32>
    %109 = vector.extract_strided_slice %79 {offsets = [448, 0], sizes = [64, 32], strides = [1, 1]} : vector<512x32xf32> to vector<64x32xf32>
    %110 = vector.broadcast %65 : vector<1x32xf32> to vector<64x32xf32>
    %111 = arith.mulf %109, %110 : vector<64x32xf32>
    %112 = arith.addf %108, %111 : vector<64x32xf32>
    %113 = vector.extract_strided_slice %7 {offsets = [64, 0], sizes = [64, 32], strides = [1, 1]} : vector<128x32xf32> to vector<64x32xf32>
    %114 = vector.extract_strided_slice %8 {offsets = [64, 0], sizes = [64, 32], strides = [1, 1]} : vector<128x32xf32> to vector<64x32xf32>
    %cst_25 = arith.constant dense<0.000000e+00> : vector<512x64xf32>
    %115 = tpu.matmul %0, %113, %cst_25 {dimension_numbers = #tpu.dot_dimension_numbers<[1], [1], [0], [0], [0, 0, 1, 0], [], []>} : vector<512x32xf32>, vector<64x32xf32>, vector<512x64xf32> -> vector<512x64xf32>
    %cst_26 = arith.constant dense<0xFF800000> : vector<512xf32>
    %116 = vector.multi_reduction <maximumf>, %115, %cst_26 [1] : vector<512x64xf32> to vector<512xf32>
    %117 = vector.shape_cast %116 : vector<512xf32> to vector<512x1xf32>
    %118 = vector.broadcast %117 : vector<512x1xf32> to vector<512x64xf32>
    %119 = arith.subf %115, %118 : vector<512x64xf32>
    %120 = math.exp %119 : vector<512x64xf32>
    %cst_27 = arith.constant dense<0.000000e+00> : vector<512xf32>
    %121 = vector.multi_reduction <add>, %120, %cst_27 [1] : vector<512x64xf32> to vector<512xf32>
    %122 = vector.shape_cast %121 : vector<512xf32> to vector<512x1xf32>
    %123 = tpu.reciprocal %122 {approx = true} : vector<512x1xf32> -> vector<512x1xf32>
    %124 = vector.broadcast %123 : vector<512x1xf32> to vector<512x64xf32>
    %125 = arith.mulf %120, %124 : vector<512x64xf32>
    %cst_28 = arith.constant dense<0.000000e+00> : vector<512x32xf32>
    %126 = tpu.matmul %125, %114, %cst_28 {dimension_numbers = #tpu.dot_dimension_numbers<[1], [0], [0], [1], [0, 0, 1, 1], [], []>} : vector<512x64xf32>, vector<64x32xf32>, vector<512x32xf32> -> vector<512x32xf32>
    %cst_29 = arith.constant 0.000000e+00 : f32
    %127 = vector.broadcast %cst_29 : f32 to vector<64x32xf32>
    %128 = vector.extract_strided_slice %126 {offsets = [0, 0], sizes = [64, 32], strides = [1, 1]} : vector<512x32xf32> to vector<64x32xf32>
    %129 = vector.broadcast %16 : vector<1x32xf32> to vector<64x32xf32>
    %130 = arith.mulf %128, %129 : vector<64x32xf32>
    %131 = arith.addf %127, %130 : vector<64x32xf32>
    %132 = vector.extract_strided_slice %126 {offsets = [64, 0], sizes = [64, 32], strides = [1, 1]} : vector<512x32xf32> to vector<64x32xf32>
    %133 = vector.broadcast %23 : vector<1x32xf32> to vector<64x32xf32>
    %134 = arith.mulf %132, %133 : vector<64x32xf32>
    %135 = arith.addf %131, %134 : vector<64x32xf32>
    %136 = vector.extract_strided_slice %126 {offsets = [128, 0], sizes = [64, 32], strides = [1, 1]} : vector<512x32xf32> to vector<64x32xf32>
    %137 = vector.broadcast %30 : vector<1x32xf32> to vector<64x32xf32>
    %138 = arith.mulf %136, %137 : vector<64x32xf32>
    %139 = arith.addf %135, %138 : vector<64x32xf32>
    %140 = vector.extract_strided_slice %126 {offsets = [192, 0], sizes = [64, 32], strides = [1, 1]} : vector<512x32xf32> to vector<64x32xf32>
    %141 = vector.broadcast %37 : vector<1x32xf32> to vector<64x32xf32>
    %142 = arith.mulf %140, %141 : vector<64x32xf32>
    %143 = arith.addf %139, %142 : vector<64x32xf32>
    %144 = vector.extract_strided_slice %126 {offsets = [256, 0], sizes = [64, 32], strides = [1, 1]} : vector<512x32xf32> to vector<64x32xf32>
    %145 = vector.broadcast %44 : vector<1x32xf32> to vector<64x32xf32>
    %146 = arith.mulf %144, %145 : vector<64x32xf32>
    %147 = arith.addf %143, %146 : vector<64x32xf32>
    %148 = vector.extract_strided_slice %126 {offsets = [320, 0], sizes = [64, 32], strides = [1, 1]} : vector<512x32xf32> to vector<64x32xf32>
    %149 = vector.broadcast %51 : vector<1x32xf32> to vector<64x32xf32>
    %150 = arith.mulf %148, %149 : vector<64x32xf32>
    %151 = arith.addf %147, %150 : vector<64x32xf32>
    %152 = vector.extract_strided_slice %126 {offsets = [384, 0], sizes = [64, 32], strides = [1, 1]} : vector<512x32xf32> to vector<64x32xf32>
    %153 = vector.broadcast %58 : vector<1x32xf32> to vector<64x32xf32>
    %154 = arith.mulf %152, %153 : vector<64x32xf32>
    %155 = arith.addf %151, %154 : vector<64x32xf32>
    %156 = vector.extract_strided_slice %126 {offsets = [448, 0], sizes = [64, 32], strides = [1, 1]} : vector<512x32xf32> to vector<64x32xf32>
    %157 = vector.broadcast %65 : vector<1x32xf32> to vector<64x32xf32>
    %158 = arith.mulf %156, %157 : vector<64x32xf32>
    %159 = arith.addf %155, %158 : vector<64x32xf32>
    %160 = tpu.concatenate %112, %159 in 0 : vector<64x32xf32>, vector<64x32xf32> -> vector<128x32xf32>
    %cst_30 = arith.constant dense<0.000000e+00> : vector<128x32xf32>
    %161 = tpu.matmul %160, %3, %cst_30 {dimension_numbers = #tpu.dot_dimension_numbers<[1], [0], [0], [1], [0, 0, 1, 1], [], []>} : vector<128x32xf32>, vector<32x32xf32>, vector<128x32xf32> -> vector<128x32xf32>
    %162 = vector.broadcast %4 : vector<1x32xf32> to vector<128x32xf32>
    %163 = arith.addf %161, %162 : vector<128x32xf32>
    %164 = vector.shape_cast %163 : vector<128x32xf32> to vector<2x64x32xf32>
    %c0_31 = arith.constant 0 : index
    %c0_32 = arith.constant 0 : index
    %c0_33 = arith.constant 0 : index
    %165 = vector.load %arg7[%c0_31, %c0_32, %c0_33] : memref<2x64x32xf32, #tpu.memory_space<vmem>>, vector<2x64x32xf32>
    tpu.vector_store %arg7[%c0_31, %c0_32, %c0_33], %164 {strides = array<i32>} : memref<2x64x32xf32, #tpu.memory_space<vmem>>, vector<2x64x32xf32>,
    return
  }
  func.func @transform_0(%arg0: i32) -> (i32, i32) {
    %c0_i32 = arith.constant 0 : i32
    %c0_i32_0 = arith.constant 0 : i32
    %c0_i32_1 = arith.constant 0 : i32
    return %c0_i32, %c0_i32_0 : i32, i32
  }
  func.func @transform_1(%arg0: i32) -> (i32, i32, i32) {
    %c0_i32 = arith.constant 0 : i32
    %c0_i32_0 = arith.constant 0 : i32
    %c0_i32_1 = arith.constant 0 : i32
    return %arg0, %c0_i32, %c0_i32_0 : i32, i32, i32
  }
  func.func @transform_2(%arg0: i32) -> (i32, i32) {
    %c0_i32 = arith.constant 0 : i32
    %c0_i32_0 = arith.constant 0 : i32
    %c0_i32_1 = arith.constant 0 : i32
    return %c0_i32, %c0_i32_0 : i32, i32
  }
  func.func @transform_3(%arg0: i32) -> (i32, i32) {
    %c0_i32 = arith.constant 0 : i32
    %c0_i32_0 = arith.constant 0 : i32
    %c0_i32_1 = arith.constant 0 : i32
    return %c0_i32, %c0_i32_0 : i32, i32
  }
  func.func @transform_4(%arg0: i32) -> (i32, i32) {
    %c0_i32 = arith.constant 0 : i32
    %c0_i32_0 = arith.constant 0 : i32
    %c0_i32_1 = arith.constant 0 : i32
    return %c0_i32, %c0_i32_0 : i32, i32
  }
  func.func @transform_5(%arg0: i32) -> (i32, i32) {
    %c0_i32 = arith.constant 0 : i32
    %c0_i32_0 = arith.constant 0 : i32
    %c0_i32_1 = arith.constant 0 : i32
    return %c0_i32, %c0_i32_0 : i32, i32
  }
  func.func @transform_6(%arg0: i32) -> (i32, i32, i32) {
    %c0_i32 = arith.constant 0 : i32
    %c0_i32_0 = arith.constant 0 : i32
    %c0_i32_1 = arith.constant 0 : i32
    return %arg0, %c0_i32, %c0_i32_0 : i32, i32, i32
  }
}

</mosaic_0001>

<llo_original>
// kernel: tpu_custom_call.1
$region0: #{tpu_custom_call.1}
  #allocation0 [shape = 'u32[]', space=smem, size = 0x4, offset = 0x4, fixed_abs, tag = 'smem constant byte address 0x4 - core index']
  #allocation1 [shape = 'u32[144,128]{1,0:T(1,128)}', space=vmem, size = 0x12000, scoped, tag = 'internal scratch']
  %s0 = inlined_call_operand.vmem [shape: f32[512,32], index: 0, kind: input, shape index: {}]
  %s1 = inlined_call_operand.vmem [shape: f32[2,64,32], index: 1, kind: input, shape index: {}]
  %s2 = inlined_call_operand.vmem [shape: f32[32,32], index: 2, kind: input, shape index: {}]
  %s3 = inlined_call_operand.vmem [shape: f32[32,32], index: 3, kind: input, shape index: {}]
  %s4 = inlined_call_operand.vmem [shape: f32[32,32], index: 4, kind: input, shape index: {}]
  %s5 = inlined_call_operand.vmem [shape: f32[1,32], index: 5, kind: input, shape index: {}]
  %s6 = inlined_call_operand.vmem [shape: f32[2,64,32], index: 6, kind: output, shape index: {}]
  %s7 = sld [smem:[#allocation0]]
  $region34: #{tpu_custom_call.1} parent=0
    _
  %s9 = ssub.s32 1, %s7
  %s10 = scalar_select 0, %s9, %s7
  // Predicated region
  $region2: #{tpu_custom_call.1} parent=0 // pred_check
    _
  $region3: #{tpu_custom_call.1} parent=0 // pred_check_branch
    %12 = sbr.rel (0) target = $region5
  $region4: #{tpu_custom_call.1} parent=0 // pred_region
    _
  $region5: #{tpu_custom_call.1} parent=0 // pred_fallthru
    _
  // Predicated region
  $region6: #{tpu_custom_call.1} parent=0 // pred_check
    _
  $region7: #{tpu_custom_call.1} parent=0 // pred_check_branch
    %14 = sbr.rel (0) target = $region9
  $region8: #{tpu_custom_call.1} parent=0 // pred_region
    _
  $region9: #{tpu_custom_call.1} parent=0 // pred_fallthru
    _
  // Predicated region
  $region10: #{tpu_custom_call.1} parent=0 // pred_check
    _
  $region11: #{tpu_custom_call.1} parent=0 // pred_check_branch
    %16 = sbr.rel (0) target = $region13
  $region12: #{tpu_custom_call.1} parent=0 // pred_region
    _
  $region13: #{tpu_custom_call.1} parent=0 // pred_fallthru
    _
  // Predicated region
  $region14: #{tpu_custom_call.1} parent=0 // pred_check
    _
  $region15: #{tpu_custom_call.1} parent=0 // pred_check_branch
    %18 = sbr.rel (0) target = $region17
  $region16: #{tpu_custom_call.1} parent=0 // pred_region
    _
  $region17: #{tpu_custom_call.1} parent=0 // pred_fallthru
    _
  // Predicated region
  $region18: #{tpu_custom_call.1} parent=0 // pred_check
    _
  $region19: #{tpu_custom_call.1} parent=0 // pred_check_branch
    %20 = sbr.rel (0) target = $region21
  $region20: #{tpu_custom_call.1} parent=0 // pred_region
    _
  $region21: #{tpu_custom_call.1} parent=0 // pred_fallthru
    _
  // Predicated region
  $region22: #{tpu_custom_call.1} parent=0 // pred_check
    _
  $region23: #{tpu_custom_call.1} parent=0 // pred_check_branch
    %22 = sbr.rel (0) target = $region25
  $region24: #{tpu_custom_call.1} parent=0 // pred_region
    _
  $region25: #{tpu_custom_call.1} parent=0 // pred_fallthru
    _
  %v23 = vld [vmem:[%s0] sm:$0xff]
  %v24 = vld [vmem:[%s0 + $0x8] sm:$0xff]
  %v25 = vld [vmem:[%s0 + $0x10] sm:$0xff]
  %v26 = vld [vmem:[%s0 + $0x18] sm:$0xff]
  %v27 = vld [vmem:[%s0 + $0x20] sm:$0xff]
  %v28 = vld [vmem:[%s0 + $0x28] sm:$0xff]
  %v29 = vld [vmem:[%s0 + $0x30] sm:$0xff]
  %v30 = vld [vmem:[%s0 + $0x38] sm:$0xff]
  %v31 = vld [vmem:[%s0 + $0x40] sm:$0xff]
  %v32 = vld [vmem:[%s0 + $0x48] sm:$0xff]
  %v33 = vld [vmem:[%s0 + $0x50] sm:$0xff]
  %v34 = vld [vmem:[%s0 + $0x58] sm:$0xff]
  %v35 = vld [vmem:[%s0 + $0x60] sm:$0xff]
  %v36 = vld [vmem:[%s0 + $0x68] sm:$0xff]
  %v37 = vld [vmem:[%s0 + $0x70] sm:$0xff]
  %v38 = vld [vmem:[%s0 + $0x78] sm:$0xff]
  %v39 = vld [vmem:[%s0 + $0x80] sm:$0xff]
  %v40 = vld [vmem:[%s0 + $0x88] sm:$0xff]
  %v41 = vld [vmem:[%s0 + $0x90] sm:$0xff]
  %v42 = vld [vmem:[%s0 + $0x98] sm:$0xff]
  %v43 = vld [vmem:[%s0 + $0xa0] sm:$0xff]
  %v44 = vld [vmem:[%s0 + $0xa8] sm:$0xff]
  %v45 = vld [vmem:[%s0 + $0xb0] sm:$0xff]
  %v46 = vld [vmem:[%s0 + $0xb8] sm:$0xff]
  %v47 = vld [vmem:[%s0 + $0xc0] sm:$0xff]
  %v48 = vld [vmem:[%s0 + $0xc8] sm:$0xff]
  %v49 = vld [vmem:[%s0 + $0xd0] sm:$0xff]
  %v50 = vld [vmem:[%s0 + $0xd8] sm:$0xff]
  %v51 = vld [vmem:[%s0 + $0xe0] sm:$0xff]
  %v52 = vld [vmem:[%s0 + $0xe8] sm:$0xff]
  %v53 = vld [vmem:[%s0 + $0xf0] sm:$0xff]
  %v54 = vld [vmem:[%s0 + $0xf8] sm:$0xff]
  %v55 = vld [vmem:[%s0 + $0x100] sm:$0xff]
  %v56 = vld [vmem:[%s0 + $0x108] sm:$0xff]
  %v57 = vld [vmem:[%s0 + $0x110] sm:$0xff]
  %v58 = vld [vmem:[%s0 + $0x118] sm:$0xff]
  %v59 = vld [vmem:[%s0 + $0x120] sm:$0xff]
  %v60 = vld [vmem:[%s0 + $0x128] sm:$0xff]
  %v61 = vld [vmem:[%s0 + $0x130] sm:$0xff]
  %v62 = vld [vmem:[%s0 + $0x138] sm:$0xff]
  %v63 = vld [vmem:[%s0 + $0x140] sm:$0xff]
  %v64 = vld [vmem:[%s0 + $0x148] sm:$0xff]
  %v65 = vld [vmem:[%s0 + $0x150] sm:$0xff]
  %v66 = vld [vmem:[%s0 + $0x158] sm:$0xff]
  %v67 = vld [vmem:[%s0 + $0x160] sm:$0xff]
  %v68 = vld [vmem:[%s0 + $0x168] sm:$0xff]
  %v69 = vld [vmem:[%s0 + $0x170] sm:$0xff]
  %v70 = vld [vmem:[%s0 + $0x178] sm:$0xff]
  %v71 = vld [vmem:[%s0 + $0x180] sm:$0xff]
  %v72 = vld [vmem:[%s0 + $0x188] sm:$0xff]
  %v73 = vld [vmem:[%s0 + $0x190] sm:$0xff]
  %v74 = vld [vmem:[%s0 + $0x198] sm:$0xff]
  %v75 = vld [vmem:[%s0 + $0x1a0] sm:$0xff]
  %v76 = vld [vmem:[%s0 + $0x1a8] sm:$0xff]
  %v77 = vld [vmem:[%s0 + $0x1b0] sm:$0xff]
  %v78 = vld [vmem:[%s0 + $0x1b8] sm:$0xff]
  %v79 = vld [vmem:[%s0 + $0x1c0] sm:$0xff]
  %v80 = vld [vmem:[%s0 + $0x1c8] sm:$0xff]
  %v81 = vld [vmem:[%s0 + $0x1d0] sm:$0xff]
  %v82 = vld [vmem:[%s0 + $0x1d8] sm:$0xff]
  %v83 = vld [vmem:[%s0 + $0x1e0] sm:$0xff]
  %v84 = vld [vmem:[%s0 + $0x1e8] sm:$0xff]
  %v85 = vld [vmem:[%s0 + $0x1f0] sm:$0xff]
  %v86 = vld [vmem:[%s0 + $0x1f8] sm:$0xff]
  %v87 = vld [vmem:[%s2] sm:$0xff]
  %v88 = vld [vmem:[%s2 + $0x8] sm:$0xff]
  %v89 = vld [vmem:[%s2 + $0x10] sm:$0xff]
  %v90 = vld [vmem:[%s2 + $0x18] sm:$0xff]
  %v91 = vld [vmem:[%s3] sm:$0xff]
  %v92 = vld [vmem:[%s3 + $0x8] sm:$0xff]
  %v93 = vld [vmem:[%s3 + $0x10] sm:$0xff]
  %v94 = vld [vmem:[%s3 + $0x18] sm:$0xff]
  %v95 = vld [vmem:[%s4] sm:$0xff]
  %v96 = vld [vmem:[%s4 + $0x8] sm:$0xff]
  %v97 = vld [vmem:[%s4 + $0x10] sm:$0xff]
  %v98 = vld [vmem:[%s4 + $0x18] sm:$0xff]
  %v99 = vld [vmem:[%s5] sm:$0x1]
  %v100 = vld [vmem:[%s1] sm:$0xff]
  %v101 = vld [vmem:[%s1 + $0x8] sm:$0xff]
  %v102 = vld [vmem:[%s1 + $0x10] sm:$0xff]
  %v103 = vld [vmem:[%s1 + $0x18] sm:$0xff]
  %v104 = vld [vmem:[%s1 + $0x20] sm:$0xff]
  %v105 = vld [vmem:[%s1 + $0x28] sm:$0xff]
  %v106 = vld [vmem:[%s1 + $0x30] sm:$0xff]
  %v107 = vld [vmem:[%s1 + $0x38] sm:$0xff]
  %v108 = vld [vmem:[%s1 + $0x40] sm:$0xff]
  %v109 = vld [vmem:[%s1 + $0x48] sm:$0xff]
  %v110 = vld [vmem:[%s1 + $0x50] sm:$0xff]
  %v111 = vld [vmem:[%s1 + $0x58] sm:$0xff]
  %v112 = vld [vmem:[%s1 + $0x60] sm:$0xff]
  %v113 = vld [vmem:[%s1 + $0x68] sm:$0xff]
  %v114 = vld [vmem:[%s1 + $0x70] sm:$0xff]
  %v115 = vld [vmem:[%s1 + $0x78] sm:$0xff]
  %vm116 = vcmask 261120
  %v118 = vsel %vm116, %v100, 0
  %v121 = vsel %vm116, %v101, 0
  %v124 = vsel %vm116, %v102, 0
  %v127 = vsel %vm116, %v103, 0
  %v130 = vsel %vm116, %v104, 0
  %v133 = vsel %vm116, %v105, 0
  %v136 = vsel %vm116, %v106, 0
  %v139 = vsel %vm116, %v107, 0
  %v142 = vsel %vm116, %v108, 0
  %v145 = vsel %vm116, %v109, 0
  %v148 = vsel %vm116, %v110, 0
  %v151 = vsel %vm116, %v111, 0
  %v154 = vsel %vm116, %v112, 0
  %v157 = vsel %vm116, %v113, 0
  %v160 = vsel %vm116, %v114, 0
  %v163 = vsel %vm116, %v115, 0
  %165 = vmatprep.subr.mxu0 0.0
  %166 = vmatpush1.msra.mxu0 %v87
  %167 = vmatprep.subr.mxu0 0.0
  %168 = vmatpush1.msra.mxu0 %v88
  %169 = vmatprep.subr.mxu0 0.0
  %170 = vmatpush1.msra.mxu0 %v89
  %171 = vmatprep.subr.mxu0 0.0
  %172 = vmatpush1.msra.mxu0 %v90
  %173 = vmatprep.subr.mxu0 0.0
  %174 = vmatpush1.msra.mxu0 0.0
  %175 = vmatprep.subr.mxu0 0.0
  %176 = vmatpush1.msra.mxu0 0.0
  %177 = vmatprep.subr.mxu0 0.0
  %178 = vmatpush1.msra.mxu0 0.0
  %179 = vmatprep.subr.mxu0 0.0
  %180 = vmatpush1.msra.mxu0 0.0
  %181 = vmatprep.subr.mxu0 0.0
  %182 = vmatpush1.msra.mxu0 0.0
  %183 = vmatprep.subr.mxu0 0.0
  %184 = vmatpush1.msra.mxu0 0.0
  %185 = vmatprep.subr.mxu0 0.0
  %186 = vmatpush1.msra.mxu0 0.0
  %187 = vmatprep.subr.mxu0 0.0
  %188 = vmatpush1.msra.mxu0 0.0
  %189 = vmatprep.subr.mxu0 0.0
  %190 = vmatpush1.msra.mxu0 0.0
  %191 = vmatprep.subr.mxu0 0.0
  %192 = vmatpush1.msra.mxu0 0.0
  %193 = vmatprep.subr.mxu0 0.0
  %194 = vmatpush1.msra.mxu0 0.0
  %195 = vmatprep.subr.mxu0 0.0
  %196 = vmatpush1.msra.mxu0 0.0
  %197 = vmatprep.subr.mxu0 0.0
  %198 = vmatpush1.msra.mxu0 0.0
  %199 = vmatprep.subr.mxu0 0.0
  %200 = vmatpush1.msra.mxu0 0.0
  %201 = vmatprep.subr.mxu0 0.0
  %202 = vmatpush1.msra.mxu0 0.0
  %203 = vmatprep.subr.mxu0 0.0
  %204 = vmatpush1.msra.mxu0 0.0
  %205 = vmatprep.subr.mxu0 0.0
  %206 = vmatpush1.msra.mxu0 0.0
  %207 = vmatprep.subr.mxu0 0.0
  %208 = vmatpush1.msra.mxu0 0.0
  %209 = vmatprep.subr.mxu0 0.0
  %210 = vmatpush1.msra.mxu0 0.0
  %211 = vmatprep.subr.mxu0 0.0
  %212 = vmatpush1.msra.mxu0 0.0
  %213 = vmatprep.subr.mxu0 0.0
  %214 = vmatpush1.msra.mxu0 0.0
  %215 = vmatprep.subr.mxu0 0.0
  %216 = vmatpush1.msra.mxu0 0.0
  %217 = vmatprep.subr.mxu0 0.0
  %218 = vmatpush1.msra.mxu0 0.0
  %219 = vmatprep.subr.mxu0 0.0
  %220 = vmatpush1.msra.mxu0 0.0
  %221 = vmatprep.subr.mxu0 0.0
  %222 = vmatpush1.msra.mxu0 0.0
  %223 = vmatprep.subr.mxu0 0.0
  %224 = vmatpush1.msra.mxu0 0.0
  %225 = vmatprep.subr.mxu0 0.0
  %226 = vmatpush1.msra.mxu0 0.0
  %227 = vmatprep.subr.mxu0 0.0
  %228 = vmatpush1.msra.mxu0 0.0
  %229 = vmatprep.mubr.f32.mxu0 0.0
  %230 = vmatmul.mubr.f32.gmra.mrb[0].mxu0 %v118
  %v231 = vpop.f32.mrb[0].mxu0
  %v232 = vadd.f32 0.0, %v231
  %v233 = vpop.f32.mrb[0].mxu0
  %234 = vmatprep.mubr.f32.mxu0 0.0
  %235 = vmatmul.mubr.f32.gmra.mrb[0].mxu0 %v121
  %v236 = vpop.f32.mrb[0].mxu0
  %v237 = vadd.f32 0.0, %v236
  %v238 = vpop.f32.mrb[0].mxu0
  %239 = vmatprep.mubr.f32.mxu0 0.0
  %240 = vmatmul.mubr.f32.gmra.mrb[0].mxu0 %v124
  %v241 = vpop.f32.mrb[0].mxu0
  %v242 = vadd.f32 0.0, %v241
  %v243 = vpop.f32.mrb[0].mxu0
  %244 = vmatprep.mubr.f32.mxu0 0.0
  %245 = vmatmul.mubr.f32.gmra.mrb[0].mxu0 %v127
  %v246 = vpop.f32.mrb[0].mxu0
  %v247 = vadd.f32 0.0, %v246
  %v248 = vpop.f32.mrb[0].mxu0
  %249 = vmatprep.mubr.f32.mxu0 0.0
  %250 = vmatmul.mubr.f32.gmra.mrb[0].mxu0 %v130
  %v251 = vpop.f32.mrb[0].mxu0
  %v252 = vadd.f32 0.0, %v251
  %v253 = vpop.f32.mrb[0].mxu0
  %254 = vmatprep.mubr.f32.mxu0 0.0
  %255 = vmatmul.mubr.f32.gmra.mrb[0].mxu0 %v133
  %v256 = vpop.f32.mrb[0].mxu0
  %v257 = vadd.f32 0.0, %v256
  %v258 = vpop.f32.mrb[0].mxu0
  %259 = vmatprep.mubr.f32.mxu0 0.0
  %260 = vmatmul.mubr.f32.gmra.mrb[0].mxu0 %v136
  %v261 = vpop.f32.mrb[0].mxu0
  %v262 = vadd.f32 0.0, %v261
  %v263 = vpop.f32.mrb[0].mxu0
  %264 = vmatprep.mubr.f32.mxu0 0.0
  %265 = vmatmul.mubr.f32.gmra.mrb[0].mxu0 %v139
  %v266 = vpop.f32.mrb[0].mxu0
  %v267 = vadd.f32 0.0, %v266
  %v268 = vpop.f32.mrb[0].mxu0
  %269 = vmatprep.mubr.f32.mxu0 0.0
  %270 = vmatmul.mubr.f32.gmra.mrb[0].mxu0 %v142
  %v271 = vpop.f32.mrb[0].mxu0
  %v272 = vadd.f32 0.0, %v271
  %v273 = vpop.f32.mrb[0].mxu0
  %274 = vmatprep.mubr.f32.mxu0 0.0
  %275 = vmatmul.mubr.f32.gmra.mrb[0].mxu0 %v145
  %v276 = vpop.f32.mrb[0].mxu0
  %v277 = vadd.f32 0.0, %v276
  %v278 = vpop.f32.mrb[0].mxu0
  %279 = vmatprep.mubr.f32.mxu0 0.0
  %280 = vmatmul.mubr.f32.gmra.mrb[0].mxu0 %v148
  %v281 = vpop.f32.mrb[0].mxu0
  %v282 = vadd.f32 0.0, %v281
  %v283 = vpop.f32.mrb[0].mxu0
  %284 = vmatprep.mubr.f32.mxu0 0.0
  %285 = vmatmul.mubr.f32.gmra.mrb[0].mxu0 %v151
  %v286 = vpop.f32.mrb[0].mxu0
  %v287 = vadd.f32 0.0, %v286
  %v288 = vpop.f32.mrb[0].mxu0
  %289 = vmatprep.mubr.f32.mxu0 0.0
  %290 = vmatmul.mubr.f32.gmra.mrb[0].mxu0 %v154
  %v291 = vpop.f32.mrb[0].mxu0
  %v292 = vadd.f32 0.0, %v291
  %v293 = vpop.f32.mrb[0].mxu0
  %294 = vmatprep.mubr.f32.mxu0 0.0
  %295 = vmatmul.mubr.f32.gmra.mrb[0].mxu0 %v157
  %v296 = vpop.f32.mrb[0].mxu0
  %v297 = vadd.f32 0.0, %v296
  %v298 = vpop.f32.mrb[0].mxu0
  %299 = vmatprep.mubr.f32.mxu0 0.0
  %300 = vmatmul.mubr.f32.gmra.mrb[0].mxu0 %v160
  %v301 = vpop.f32.mrb[0].mxu0
  %v302 = vadd.f32 0.0, %v301
  %v303 = vpop.f32.mrb[0].mxu0
  %304 = vmatprep.mubr.f32.mxu0 0.0
  %305 = vmatmul.mubr.f32.gmra.mrb[0].mxu0 %v163
  %v306 = vpop.f32.mrb[0].mxu0
  %v307 = vadd.f32 0.0, %v306
  %v308 = vpop.f32.mrb[0].mxu0
  %309 = vdwg.mxu0
  %310 = vmatprep.subr.mxu0 0.0
  %311 = vmatpush1.msra.mxu0 %v91
  %312 = vmatprep.subr.mxu0 0.0
  %313 = vmatpush1.msra.mxu0 %v92
  %314 = vmatprep.subr.mxu0 0.0
  %315 = vmatpush1.msra.mxu0 %v93
  %316 = vmatprep.subr.mxu0 0.0
  %317 = vmatpush1.msra.mxu0 %v94
  %318 = vmatprep.subr.mxu0 0.0
  %319 = vmatpush1.msra.mxu0 0.0
  %320 = vmatprep.subr.mxu0 0.0
  %321 = vmatpush1.msra.mxu0 0.0
  %322 = vmatprep.subr.mxu0 0.0
  %323 = vmatpush1.msra.mxu0 0.0
  %324 = vmatprep.subr.mxu0 0.0
  %325 = vmatpush1.msra.mxu0 0.0
  %326 = vmatprep.subr.mxu0 0.0
  %327 = vmatpush1.msra.mxu0 0.0
  %328 = vmatprep.subr.mxu0 0.0
  %329 = vmatpush1.msra.mxu0 0.0
  %330 = vmatprep.subr.mxu0 0.0
  %331 = vmatpush1.msra.mxu0 0.0
  %332 = vmatprep.subr.mxu0 0.0
  %333 = vmatpush1.msra.mxu0 0.0
  %334 = vmatprep.subr.mxu0 0.0
  %335 = vmatpush1.msra.mxu0 0.0
  %336 = vmatprep.subr.mxu0 0.0
  %337 = vmatpush1.msra.mxu0 0.0
  %338 = vmatprep.subr.mxu0 0.0
  %339 = vmatpush1.msra.mxu0 0.0
  %340 = vmatprep.subr.mxu0 0.0
  %341 = vmatpush1.msra.mxu0 0.0
  %342 = vmatprep.subr.mxu0 0.0
  %343 = vmatpush1.msra.mxu0 0.0
  %344 = vmatprep.subr.mxu0 0.0
  %345 = vmatpush1.msra.mxu0 0.0
  %346 = vmatprep.subr.mxu0 0.0
  %347 = vmatpush1.msra.mxu0 0.0
  %348 = vmatprep.subr.mxu0 0.0
  %349 = vmatpush1.msra.mxu0 0.0
  %350 = vmatprep.subr.mxu0 0.0
  %351 = vmatpush1.msra.mxu0 0.0
  %352 = vmatprep.subr.mxu0 0.0
  %353 = vmatpush1.msra.mxu0 0.0
  %354 = vmatprep.subr.mxu0 0.0
  %355 = vmatpush1.msra.mxu0 0.0
  %356 = vmatprep.subr.mxu0 0.0
  %357 = vmatpush1.msra.mxu0 0.0
  %358 = vmatprep.subr.mxu0 0.0
  %359 = vmatpush1.msra.mxu0 0.0
  %360 = vmatprep.subr.mxu0 0.0
  %361 = vmatpush1.msra.mxu0 0.0
  %362 = vmatprep.subr.mxu0 0.0
  %363 = vmatpush1.msra.mxu0 0.0
  %364 = vmatprep.subr.mxu0 0.0
  %365 = vmatpush1.msra.mxu0 0.0
  %366 = vmatprep.subr.mxu0 0.0
  %367 = vmatpush1.msra.mxu0 0.0
  %368 = vmatprep.subr.mxu0 0.0
  %369 = vmatpush1.msra.mxu0 0.0
  %370 = vmatprep.subr.mxu0 0.0
  %371 = vmatpush1.msra.mxu0 0.0
  %372 = vmatprep.subr.mxu0 0.0
  %373 = vmatpush1.msra.mxu0 0.0
  %374 = vmatprep.mubr.f32.mxu0 0.0
  %375 = vmatmul.mubr.f32.gmra.mrb[0].mxu0 %v118
  %v376 = vpop.f32.mrb[0].mxu0
  %v377 = vadd.f32 0.0, %v376
  %v378 = vpop.f32.mrb[0].mxu0
  %379 = vmatprep.mubr.f32.mxu0 0.0
  %380 = vmatmul.mubr.f32.gmra.mrb[0].mxu0 %v121
  %v381 = vpop.f32.mrb[0].mxu0
  %v382 = vadd.f32 0.0, %v381
  %v383 = vpop.f32.mrb[0].mxu0
  %384 = vmatprep.mubr.f32.mxu0 0.0
  %385 = vmatmul.mubr.f32.gmra.mrb[0].mxu0 %v124
  %v386 = vpop.f32.mrb[0].mxu0
  %v387 = vadd.f32 0.0, %v386
  %v388 = vpop.f32.mrb[0].mxu0
  %389 = vmatprep.mubr.f32.mxu0 0.0
  %390 = vmatmul.mubr.f32.gmra.mrb[0].mxu0 %v127
  %v391 = vpop.f32.mrb[0].mxu0
  %v392 = vadd.f32 0.0, %v391
  %v393 = vpop.f32.mrb[0].mxu0
  %394 = vmatprep.mubr.f32.mxu0 0.0
  %395 = vmatmul.mubr.f32.gmra.mrb[0].mxu0 %v130
  %v396 = vpop.f32.mrb[0].mxu0
  %v397 = vadd.f32 0.0, %v396
  %v398 = vpop.f32.mrb[0].mxu0
  %399 = vmatprep.mubr.f32.mxu0 0.0
  %400 = vmatmul.mubr.f32.gmra.mrb[0].mxu0 %v133
  %v401 = vpop.f32.mrb[0].mxu0
  %v402 = vadd.f32 0.0, %v401
  %v403 = vpop.f32.mrb[0].mxu0
  %404 = vmatprep.mubr.f32.mxu0 0.0
  %405 = vmatmul.mubr.f32.gmra.mrb[0].mxu0 %v136
  %v406 = vpop.f32.mrb[0].mxu0
  %v407 = vadd.f32 0.0, %v406
  %v408 = vpop.f32.mrb[0].mxu0
  %409 = vmatprep.mubr.f32.mxu0 0.0
  %410 = vmatmul.mubr.f32.gmra.mrb[0].mxu0 %v139
  %v411 = vpop.f32.mrb[0].mxu0
  %v412 = vadd.f32 0.0, %v411
  %v413 = vpop.f32.mrb[0].mxu0
  %414 = vmatprep.mubr.f32.mxu0 0.0
  %415 = vmatmul.mubr.f32.gmra.mrb[0].mxu0 %v142
  %v416 = vpop.f32.mrb[0].mxu0
  %v417 = vadd.f32 0.0, %v416
  %v418 = vpop.f32.mrb[0].mxu0
  %419 = vmatprep.mubr.f32.mxu0 0.0
  %420 = vmatmul.mubr.f32.gmra.mrb[0].mxu0 %v145
  %v421 = vpop.f32.mrb[0].mxu0
  %v422 = vadd.f32 0.0, %v421
  %v423 = vpop.f32.mrb[0].mxu0
  %424 = vmatprep.mubr.f32.mxu0 0.0
  %425 = vmatmul.mubr.f32.gmra.mrb[0].mxu0 %v148
  %v426 = vpop.f32.mrb[0].mxu0
  %v427 = vadd.f32 0.0, %v426
  %v428 = vpop.f32.mrb[0].mxu0
  %429 = vmatprep.mubr.f32.mxu0 0.0
  %430 = vmatmul.mubr.f32.gmra.mrb[0].mxu0 %v151
  %v431 = vpop.f32.mrb[0].mxu0
  %v432 = vadd.f32 0.0, %v431
  %v433 = vpop.f32.mrb[0].mxu0
  %434 = vmatprep.mubr.f32.mxu0 0.0
  %435 = vmatmul.mubr.f32.gmra.mrb[0].mxu0 %v154
  %v436 = vpop.f32.mrb[0].mxu0
  %v437 = vadd.f32 0.0, %v436
  %v438 = vpop.f32.mrb[0].mxu0
  %439 = vmatprep.mubr.f32.mxu0 0.0
  %440 = vmatmul.mubr.f32.gmra.mrb[0].mxu0 %v157
  %v441 = vpop.f32.mrb[0].mxu0
  %v442 = vadd.f32 0.0, %v441
  %v443 = vpop.f32.mrb[0].mxu0
  %444 = vmatprep.mubr.f32.mxu0 0.0
  %445 = vmatmul.mubr.f32.gmra.mrb[0].mxu0 %v160
  %v446 = vpop.f32.mrb[0].mxu0
  %v447 = vadd.f32 0.0, %v446
  %v448 = vpop.f32.mrb[0].mxu0
  %449 = vmatprep.mubr.f32.mxu0 0.0
  %450 = vmatmul.mubr.f32.gmra.mrb[0].mxu0 %v163
  %v451 = vpop.f32.mrb[0].mxu0
  %v452 = vadd.f32 0.0, %v451
  %v453 = vpop.f32.mrb[0].mxu0
  %454 = vdwg.mxu0
  %v455 = vlaneseq
  %v456 = vand.u32 %v455, 127
  %vm457 = vcmp.ge.s32.totalorder %v456, 0
  %vm458 = vcmp.lt.s32.totalorder %v456, 4
  %vm459 = vmand %vm457, %vm458
  %v460 = vsel %vm459, 1, 0
  %v461 = vcvt.s32.f32 %v460
  %vm462 = vcmp.ge.s32.totalorder %v456, 4
  %vm463 = vcmp.lt.s32.totalorder %v456, 8
  %vm464 = vmand %vm462, %vm463
  %v465 = vsel %vm464, 1, 0
  %v466 = vcvt.s32.f32 %v465
  %vm467 = vcmp.ge.s32.totalorder %v456, 8
  %vm468 = vcmp.lt.s32.totalorder %v456, 12
  %vm469 = vmand %vm467, %vm468
  %v470 = vsel %vm469, 1, 0
  %v471 = vcvt.s32.f32 %v470
  %vm472 = vcmp.ge.s32.totalorder %v456, 12
  %vm473 = vcmp.lt.s32.totalorder %v456, 16
  %vm474 = vmand %vm472, %vm473
  %v475 = vsel %vm474, 1, 0
  %v476 = vcvt.s32.f32 %v475
  %vm477 = vcmp.ge.s32.totalorder %v456, 16
  %vm478 = vcmp.lt.s32.totalorder %v456, 20
  %vm479 = vmand %vm477, %vm478
  %v480 = vsel %vm479, 1, 0
  %v481 = vcvt.s32.f32 %v480
  %vm482 = vcmp.ge.s32.totalorder %v456, 20
  %vm483 = vcmp.lt.s32.totalorder %v456, 24
  %vm484 = vmand %vm482, %vm483
  %v485 = vsel %vm484, 1, 0
  %v486 = vcvt.s32.f32 %v485
  %vm487 = vcmp.ge.s32.totalorder %v456, 24
  %vm488 = vcmp.lt.s32.totalorder %v456, 28
  %vm489 = vmand %vm487, %vm488
  %v490 = vsel %vm489, 1, 0
  %v491 = vcvt.s32.f32 %v490
  %vm492 = vcmp.ge.s32.totalorder %v456, 28
  %vm493 = vcmp.lt.s32.totalorder %v456, 32
  %vm494 = vmand %vm492, %vm493
  %v495 = vsel %vm494, 1, 0
  %v496 = vcvt.s32.f32 %v495
  %v498 = vsel %vm116, %v23, 0
  %v501 = vsel %vm116, %v24, 0
  %v504 = vsel %vm116, %v25, 0
  %v507 = vsel %vm116, %v26, 0
  %v510 = vsel %vm116, %v27, 0
  %v513 = vsel %vm116, %v28, 0
  %v516 = vsel %vm116, %v29, 0
  %v519 = vsel %vm116, %v30, 0
  %v522 = vsel %vm116, %v31, 0
  %v525 = vsel %vm116, %v32, 0
  %v528 = vsel %vm116, %v33, 0
  %v531 = vsel %vm116, %v34, 0
  %v534 = vsel %vm116, %v35, 0
  %v537 = vsel %vm116, %v36, 0
  %v540 = vsel %vm116, %v37, 0
  %v543 = vsel %vm116, %v38, 0
  %v546 = vsel %vm116, %v39, 0
  %v549 = vsel %vm116, %v40, 0
  %v552 = vsel %vm116, %v41, 0
  %v555 = vsel %vm116, %v42, 0
  %v558 = vsel %vm116, %v43, 0
  %v561 = vsel %vm116, %v44, 0
  %v564 = vsel %vm116, %v45, 0
  %v567 = vsel %vm116, %v46, 0
  %v570 = vsel %vm116, %v47, 0
  %v573 = vsel %vm116, %v48, 0
  %v576 = vsel %vm116, %v49, 0
  %v579 = vsel %vm116, %v50, 0
  %v582 = vsel %vm116, %v51, 0
  %v585 = vsel %vm116, %v52, 0
  %v588 = vsel %vm116, %v53, 0
  %v591 = vsel %vm116, %v54, 0
  %v594 = vsel %vm116, %v55, 0
  %v597 = vsel %vm116, %v56, 0
  %v600 = vsel %vm116, %v57, 0
  %v603 = vsel %vm116, %v58, 0
  %v606 = vsel %vm116, %v59, 0
  %v609 = vsel %vm116, %v60, 0
  %v612 = vsel %vm116, %v61, 0
  %v615 = vsel %vm116, %v62, 0
  %v618 = vsel %vm116, %v63, 0
  %v621 = vsel %vm116, %v64, 0
  %v624 = vsel %vm116, %v65, 0
  %v627 = vsel %vm116, %v66, 0
  %v630 = vsel %vm116, %v67, 0
  %v633 = vsel %vm116, %v68, 0
  %v636 = vsel %vm116, %v69, 0
  %v639 = vsel %vm116, %v70, 0
  %v642 = vsel %vm116, %v71, 0
  %v645 = vsel %vm116, %v72, 0
  %v648 = vsel %vm116, %v73, 0
  %v651 = vsel %vm116, %v74, 0
  %v654 = vsel %vm116, %v75, 0
  %v657 = vsel %vm116, %v76, 0
  %v660 = vsel %vm116, %v77, 0
  %v663 = vsel %vm116, %v78, 0
  %v666 = vsel %vm116, %v79, 0
  %v669 = vsel %vm116, %v80, 0
  %v672 = vsel %vm116, %v81, 0
  %v675 = vsel %vm116, %v82, 0
  %v678 = vsel %vm116, %v83, 0
  %v681 = vsel %vm116, %v84, 0
  %v684 = vsel %vm116, %v85, 0
  %v687 = vsel %vm116, %v86, 0
  %v690 = vsel %vm116, %v232, 0
  %v693 = vsel %vm116, %v237, 0
  %v696 = vsel %vm116, %v242, 0
  %v699 = vsel %vm116, %v247, 0
  %v702 = vsel %vm116, %v252, 0
  %v705 = vsel %vm116, %v257, 0
  %v708 = vsel %vm116, %v262, 0
  %v711 = vsel %vm116, %v267, 0
  %713 = vmatprep.subr.mxu0 0.0
  %714 = vmatpush1.xpose.msra.mxu0 %v690
  %715 = vmatprep.subr.mxu0 0.0
  %716 = vmatpush1.xpose.msra.mxu0 %v693
  %717 = vmatprep.subr.mxu0 0.0
  %718 = vmatpush1.xpose.msra.mxu0 %v696
  %719 = vmatprep.subr.mxu0 0.0
  %720 = vmatpush1.xpose.msra.mxu0 %v699
  %721 = vmatprep.subr.mxu0 0.0
  %722 = vmatpush1.xpose.msra.mxu0 %v702
  %723 = vmatprep.subr.mxu0 0.0
  %724 = vmatpush1.xpose.msra.mxu0 %v705
  %725 = vmatprep.subr.mxu0 0.0
  %726 = vmatpush1.xpose.msra.mxu0 %v708
  %727 = vmatprep.subr.mxu0 0.0
  %728 = vmatpush1.xpose.msra.mxu0 %v711
  %729 = vmatprep.subr.mxu0 0.0
  %730 = vmatpush1.xpose.msra.mxu0 0.0
  %731 = vmatprep.subr.mxu0 0.0
  %732 = vmatpush1.xpose.msra.mxu0 0.0
  %733 = vmatprep.subr.mxu0 0.0
  %734 = vmatpush1.xpose.msra.mxu0 0.0
  %735 = vmatprep.subr.mxu0 0.0
  %736 = vmatpush1.xpose.msra.mxu0 0.0
  %737 = vmatprep.subr.mxu0 0.0
  %738 = vmatpush1.xpose.msra.mxu0 0.0
  %739 = vmatprep.subr.mxu0 0.0
  %740 = vmatpush1.xpose.msra.mxu0 0.0
  %741 = vmatprep.subr.mxu0 0.0
  %742 = vmatpush1.xpose.msra.mxu0 0.0
  %743 = vmatprep.subr.mxu0 0.0
  %744 = vmatpush1.xpose.msra.mxu0 0.0
  %745 = vmatprep.subr.mxu0 0.0
  %746 = vmatpush1.xpose.msra.mxu0 0.0
  %747 = vmatprep.subr.mxu0 0.0
  %748 = vmatpush1.xpose.msra.mxu0 0.0
  %749 = vmatprep.subr.mxu0 0.0
  %750 = vmatpush1.xpose.msra.mxu0 0.0
  %751 = vmatprep.subr.mxu0 0.0
  %752 = vmatpush1.xpose.msra.mxu0 0.0
  %753 = vmatprep.subr.mxu0 0.0
  %754 = vmatpush1.xpose.msra.mxu0 0.0
  %755 = vmatprep.subr.mxu0 0.0
  %756 = vmatpush1.xpose.msra.mxu0 0.0
  %757 = vmatprep.subr.mxu0 0.0
  %758 = vmatpush1.xpose.msra.mxu0 0.0
  %759 = vmatprep.subr.mxu0 0.0
  %760 = vmatpush1.xpose.msra.mxu0 0.0
  %761 = vmatprep.subr.mxu0 0.0
  %762 = vmatpush1.xpose.msra.mxu0 0.0
  %763 = vmatprep.subr.mxu0 0.0
  %764 = vmatpush1.xpose.msra.mxu0 0.0
  %765 = vmatprep.subr.mxu0 0.0
  %766 = vmatpush1.xpose.msra.mxu0 0.0
  %767 = vmatprep.subr.mxu0 0.0
  %768 = vmatpush1.xpose.msra.mxu0 0.0
  %769 = vmatprep.subr.mxu0 0.0
  %770 = vmatpush1.xpose.msra.mxu0 0.0
  %771 = vmatprep.subr.mxu0 0.0
  %772 = vmatpush1.xpose.msra.mxu0 0.0
  %773 = vmatprep.subr.mxu0 0.0
  %774 = vmatpush1.xpose.msra.mxu0 0.0
  %775 = vmatprep.subr.mxu0 0.0
  %776 = vmatpush1.xpose.msra.mxu0 0.0
  %777 = vmatprep.mubr.f32.mxu0 0.0
  %778 = vmatmul.mubr.f32.gmra.mrb[0].mxu0 %v498
  %v779 = vpop.f32.mrb[0].mxu0
  %v780 = vadd.f32 0.0, %v779
  %v781 = vpop.f32.mrb[0].mxu0
  %782 = vmatprep.mubr.f32.mxu0 0.0
  %783 = vmatmul.mubr.f32.gmra.mrb[0].mxu0 %v501
  %v784 = vpop.f32.mrb[0].mxu0
  %v785 = vadd.f32 0.0, %v784
  %v786 = vpop.f32.mrb[0].mxu0
  %787 = vmatprep.mubr.f32.mxu0 0.0
  %788 = vmatmul.mubr.f32.gmra.mrb[0].mxu0 %v504
  %v789 = vpop.f32.mrb[0].mxu0
  %v790 = vadd.f32 0.0, %v789
  %v791 = vpop.f32.mrb[0].mxu0
  %792 = vmatprep.mubr.f32.mxu0 0.0
  %793 = vmatmul.mubr.f32.gmra.mrb[0].mxu0 %v507
  %v794 = vpop.f32.mrb[0].mxu0
  %v795 = vadd.f32 0.0, %v794
  %v796 = vpop.f32.mrb[0].mxu0
  %797 = vmatprep.mubr.f32.mxu0 0.0
  %798 = vmatmul.mubr.f32.gmra.mrb[0].mxu0 %v510
  %v799 = vpop.f32.mrb[0].mxu0
  %v800 = vadd.f32 0.0, %v799
  %v801 = vpop.f32.mrb[0].mxu0
  %802 = vmatprep.mubr.f32.mxu0 0.0
  %803 = vmatmul.mubr.f32.gmra.mrb[0].mxu0 %v513
  %v804 = vpop.f32.mrb[0].mxu0
  %v805 = vadd.f32 0.0, %v804
  %v806 = vpop.f32.mrb[0].mxu0
  %807 = vmatprep.mubr.f32.mxu0 0.0
  %808 = vmatmul.mubr.f32.gmra.mrb[0].mxu0 %v516
  %v809 = vpop.f32.mrb[0].mxu0
  %v810 = vadd.f32 0.0, %v809
  %v811 = vpop.f32.mrb[0].mxu0
  %812 = vmatprep.mubr.f32.mxu0 0.0
  %813 = vmatmul.mubr.f32.gmra.mrb[0].mxu0 %v519
  %v814 = vpop.f32.mrb[0].mxu0
  %v815 = vadd.f32 0.0, %v814
  %v816 = vpop.f32.mrb[0].mxu0
  %817 = vmatprep.mubr.f32.mxu0 0.0
  %818 = vmatmul.mubr.f32.gmra.mrb[0].mxu0 %v522
  %v819 = vpop.f32.mrb[0].mxu0
  %v820 = vadd.f32 0.0, %v819
  %v821 = vpop.f32.mrb[0].mxu0
  %822 = vmatprep.mubr.f32.mxu0 0.0
  %823 = vmatmul.mubr.f32.gmra.mrb[0].mxu0 %v525
  %v824 = vpop.f32.mrb[0].mxu0
  %v825 = vadd.f32 0.0, %v824
  %v826 = vpop.f32.mrb[0].mxu0
  %827 = vmatprep.mubr.f32.mxu0 0.0
  %828 = vmatmul.mubr.f32.gmra.mrb[0].mxu0 %v528
  %v829 = vpop.f32.mrb[0].mxu0
  %v830 = vadd.f32 0.0, %v829
  %v831 = vpop.f32.mrb[0].mxu0
  %832 = vmatprep.mubr.f32.mxu0 0.0
  %833 = vmatmul.mubr.f32.gmra.mrb[0].mxu0 %v531
  %v834 = vpop.f32.mrb[0].mxu0
  %v835 = vadd.f32 0.0, %v834
  %v836 = vpop.f32.mrb[0].mxu0
  %837 = vmatprep.mubr.f32.mxu0 0.0
  %838 = vmatmul.mubr.f32.gmra.mrb[0].mxu0 %v534
  %v839 = vpop.f32.mrb[0].mxu0
  %v840 = vadd.f32 0.0, %v839
  %v841 = vpop.f32.mrb[0].mxu0
  %842 = vmatprep.mubr.f32.mxu0 0.0
  %843 = vmatmul.mubr.f32.gmra.mrb[0].mxu0 %v537
  %v844 = vpop.f32.mrb[0].mxu0
  %v845 = vadd.f32 0.0, %v844
  %v846 = vpop.f32.mrb[0].mxu0
  %847 = vmatprep.mubr.f32.mxu0 0.0
  %848 = vmatmul.mubr.f32.gmra.mrb[0].mxu0 %v540
  %v849 = vpop.f32.mrb[0].mxu0
  %v850 = vadd.f32 0.0, %v849
  %v851 = vpop.f32.mrb[0].mxu0
  %852 = vmatprep.mubr.f32.mxu0 0.0
  %853 = vmatmul.mubr.f32.gmra.mrb[0].mxu0 %v543
  %v854 = vpop.f32.mrb[0].mxu0
  %v855 = vadd.f32 0.0, %v854
  %v856 = vpop.f32.mrb[0].mxu0
  %857 = vmatprep.mubr.f32.mxu0 0.0
  %858 = vmatmul.mubr.f32.gmra.mrb[0].mxu0 %v546
  %v859 = vpop.f32.mrb[0].mxu0
  %v860 = vadd.f32 0.0, %v859
  %v861 = vpop.f32.mrb[0].mxu0
  %862 = vmatprep.mubr.f32.mxu0 0.0
  %863 = vmatmul.mubr.f32.gmra.mrb[0].mxu0 %v549
  %v864 = vpop.f32.mrb[0].mxu0
  %v865 = vadd.f32 0.0, %v864
  %v866 = vpop.f32.mrb[0].mxu0
  %867 = vmatprep.mubr.f32.mxu0 0.0
  %868 = vmatmul.mubr.f32.gmra.mrb[0].mxu0 %v552
  %v869 = vpop.f32.mrb[0].mxu0
  %v870 = vadd.f32 0.0, %v869
  %v871 = vpop.f32.mrb[0].mxu0
  %872 = vmatprep.mubr.f32.mxu0 0.0
  %873 = vmatmul.mubr.f32.gmra.mrb[0].mxu0 %v555
  %v874 = vpop.f32.mrb[0].mxu0
  %v875 = vadd.f32 0.0, %v874
  %v876 = vpop.f32.mrb[0].mxu0
  %877 = vmatprep.mubr.f32.mxu0 0.0
  %878 = vmatmul.mubr.f32.gmra.mrb[0].mxu0 %v558
  %v879 = vpop.f32.mrb[0].mxu0
  %v880 = vadd.f32 0.0, %v879
  %v881 = vpop.f32.mrb[0].mxu0
  %882 = vmatprep.mubr.f32.mxu0 0.0
  %883 = vmatmul.mubr.f32.gmra.mrb[0].mxu0 %v561
  %v884 = vpop.f32.mrb[0].mxu0
  %v885 = vadd.f32 0.0, %v884
  %v886 = vpop.f32.mrb[0].mxu0
  %887 = vmatprep.mubr.f32.mxu0 0.0
  %888 = vmatmul.mubr.f32.gmra.mrb[0].mxu0 %v564
  %v889 = vpop.f32.mrb[0].mxu0
  %v890 = vadd.f32 0.0, %v889
  %v891 = vpop.f32.mrb[0].mxu0
  %892 = vmatprep.mubr.f32.mxu0 0.0
  %893 = vmatmul.mubr.f32.gmra.mrb[0].mxu0 %v567
  %v894 = vpop.f32.mrb[0].mxu0
  %v895 = vadd.f32 0.0, %v894
  %v896 = vpop.f32.mrb[0].mxu0
  %897 = vmatprep.mubr.f32.mxu0 0.0
  %898 = vmatmul.mubr.f32.gmra.mrb[0].mxu0 %v570
  %v899 = vpop.f32.mrb[0].mxu0
  %v900 = vadd.f32 0.0, %v899
  %v901 = vpop.f32.mrb[0].mxu0
  %902 = vmatprep.mubr.f32.mxu0 0.0
  %903 = vmatmul.mubr.f32.gmra.mrb[0].mxu0 %v573
  %v904 = vpop.f32.mrb[0].mxu0
  %v905 = vadd.f32 0.0, %v904
  %v906 = vpop.f32.mrb[0].mxu0
  %907 = vmatprep.mubr.f32.mxu0 0.0
  %908 = vmatmul.mubr.f32.gmra.mrb[0].mxu0 %v576
  %v909 = vpop.f32.mrb[0].mxu0
  %v910 = vadd.f32 0.0, %v909
  %v911 = vpop.f32.mrb[0].mxu0
  %912 = vmatprep.mubr.f32.mxu0 0.0
  %913 = vmatmul.mubr.f32.gmra.mrb[0].mxu0 %v579
  %v914 = vpop.f32.mrb[0].mxu0
  %v915 = vadd.f32 0.0, %v914
  %v916 = vpop.f32.mrb[0].mxu0
  %917 = vmatprep.mubr.f32.mxu0 0.0
  %918 = vmatmul.mubr.f32.gmra.mrb[0].mxu0 %v582
  %v919 = vpop.f32.mrb[0].mxu0
  %v920 = vadd.f32 0.0, %v919
  %v921 = vpop.f32.mrb[0].mxu0
  %922 = vmatprep.mubr.f32.mxu0 0.0
  %923 = vmatmul.mubr.f32.gmra.mrb[0].mxu0 %v585
  %v924 = vpop.f32.mrb[0].mxu0
  %v925 = vadd.f32 0.0, %v924
  %v926 = vpop.f32.mrb[0].mxu0
  %927 = vmatprep.mubr.f32.mxu0 0.0
  %928 = vmatmul.mubr.f32.gmra.mrb[0].mxu0 %v588
  %v929 = vpop.f32.mrb[0].mxu0
  %v930 = vadd.f32 0.0, %v929
  %v931 = vpop.f32.mrb[0].mxu0
  %932 = vmatprep.mubr.f32.mxu0 0.0
  %933 = vmatmul.mubr.f32.gmra.mrb[0].mxu0 %v591
  %v934 = vpop.f32.mrb[0].mxu0
  %v935 = vadd.f32 0.0, %v934
  %v936 = vpop.f32.mrb[0].mxu0
  %937 = vmatprep.mubr.f32.mxu0 0.0
  %938 = vmatmul.mubr.f32.gmra.mrb[0].mxu0 %v594
  %v939 = vpop.f32.mrb[0].mxu0
  %v940 = vadd.f32 0.0, %v939
  %v941 = vpop.f32.mrb[0].mxu0
  %942 = vmatprep.mubr.f32.mxu0 0.0
  %943 = vmatmul.mubr.f32.gmra.mrb[0].mxu0 %v597
  %v944 = vpop.f32.mrb[0].mxu0
  %v945 = vadd.f32 0.0, %v944
  %v946 = vpop.f32.mrb[0].mxu0
  %947 = vmatprep.mubr.f32.mxu0 0.0
  %948 = vmatmul.mubr.f32.gmra.mrb[0].mxu0 %v600
  %v949 = vpop.f32.mrb[0].mxu0
  %v950 = vadd.f32 0.0, %v949
  %v951 = vpop.f32.mrb[0].mxu0
  %952 = vmatprep.mubr.f32.mxu0 0.0
  %953 = vmatmul.mubr.f32.gmra.mrb[0].mxu0 %v603
  %v954 = vpop.f32.mrb[0].mxu0
  %v955 = vadd.f32 0.0, %v954
  %v956 = vpop.f32.mrb[0].mxu0
  %957 = vmatprep.mubr.f32.mxu0 0.0
  %958 = vmatmul.mubr.f32.gmra.mrb[0].mxu0 %v606
  %v959 = vpop.f32.mrb[0].mxu0
  %v960 = vadd.f32 0.0, %v959
  %v961 = vpop.f32.mrb[0].mxu0
  %962 = vmatprep.mubr.f32.mxu0 0.0
  %963 = vmatmul.mubr.f32.gmra.mrb[0].mxu0 %v609
  %v964 = vpop.f32.mrb[0].mxu0
  %v965 = vadd.f32 0.0, %v964
  %v966 = vpop.f32.mrb[0].mxu0
  %967 = vmatprep.mubr.f32.mxu0 0.0
  %968 = vmatmul.mubr.f32.gmra.mrb[0].mxu0 %v612
  %v969 = vpop.f32.mrb[0].mxu0
  %v970 = vadd.f32 0.0, %v969
  %v971 = vpop.f32.mrb[0].mxu0
  %972 = vmatprep.mubr.f32.mxu0 0.0
  %973 = vmatmul.mubr.f32.gmra.mrb[0].mxu0 %v615
  %v974 = vpop.f32.mrb[0].mxu0
  %v975 = vadd.f32 0.0, %v974
  %v976 = vpop.f32.mrb[0].mxu0
  %977 = vmatprep.mubr.f32.mxu0 0.0
  %978 = vmatmul.mubr.f32.gmra.mrb[0].mxu0 %v618
  %v979 = vpop.f32.mrb[0].mxu0
  %v980 = vadd.f32 0.0, %v979
  %v981 = vpop.f32.mrb[0].mxu0
  %982 = vmatprep.mubr.f32.mxu0 0.0
  %983 = vmatmul.mubr.f32.gmra.mrb[0].mxu0 %v621
  %v984 = vpop.f32.mrb[0].mxu0
  %v985 = vadd.f32 0.0, %v984
  %v986 = vpop.f32.mrb[0].mxu0
  %987 = vmatprep.mubr.f32.mxu0 0.0
  %988 = vmatmul.mubr.f32.gmra.mrb[0].mxu0 %v624
  %v989 = vpop.f32.mrb[0].mxu0
  %v990 = vadd.f32 0.0, %v989
  %v991 = vpop.f32.mrb[0].mxu0
  %992 = vmatprep.mubr.f32.mxu0 0.0
  %993 = vmatmul.mubr.f32.gmra.mrb[0].mxu0 %v627
  %v994 = vpop.f32.mrb[0].mxu0
  %v995 = vadd.f32 0.0, %v994
  %v996 = vpop.f32.mrb[0].mxu0
  %997 = vmatprep.mubr.f32.mxu0 0.0
  %998 = vmatmul.mubr.f32.gmra.mrb[0].mxu0 %v630
  %v999 = vpop.f32.mrb[0].mxu0
  %v1000 = vadd.f32 0.0, %v999
  %v1001 = vpop.f32.mrb[0].mxu0
  %1002 = vmatprep.mubr.f32.mxu0 0.0
  %1003 = vmatmul.mubr.f32.gmra.mrb[0].mxu0 %v633
  %v1004 = vpop.f32.mrb[0].mxu0
  %v1005 = vadd.f32 0.0, %v1004
  %v1006 = vpop.f32.mrb[0].mxu0
  %1007 = vmatprep.mubr.f32.mxu0 0.0
  %1008 = vmatmul.mubr.f32.gmra.mrb[0].mxu0 %v636
  %v1009 = vpop.f32.mrb[0].mxu0
  %v1010 = vadd.f32 0.0, %v1009
  %v1011 = vpop.f32.mrb[0].mxu0
  %1012 = vmatprep.mubr.f32.mxu0 0.0
  %1013 = vmatmul.mubr.f32.gmra.mrb[0].mxu0 %v639
  %v1014 = vpop.f32.mrb[0].mxu0
  %v1015 = vadd.f32 0.0, %v1014
  %v1016 = vpop.f32.mrb[0].mxu0
  %1017 = vmatprep.mubr.f32.mxu0 0.0
  %1018 = vmatmul.mubr.f32.gmra.mrb[0].mxu0 %v642
  %v1019 = vpop.f32.mrb[0].mxu0
  %v1020 = vadd.f32 0.0, %v1019
  %v1021 = vpop.f32.mrb[0].mxu0
  %1022 = vmatprep.mubr.f32.mxu0 0.0
  %1023 = vmatmul.mubr.f32.gmra.mrb[0].mxu0 %v645
  %v1024 = vpop.f32.mrb[0].mxu0
  %v1025 = vadd.f32 0.0, %v1024
  %v1026 = vpop.f32.mrb[0].mxu0
  %1027 = vmatprep.mubr.f32.mxu0 0.0
  %1028 = vmatmul.mubr.f32.gmra.mrb[0].mxu0 %v648
  %v1029 = vpop.f32.mrb[0].mxu0
  %v1030 = vadd.f32 0.0, %v1029
  %v1031 = vpop.f32.mrb[0].mxu0
  %1032 = vmatprep.mubr.f32.mxu0 0.0
  %1033 = vmatmul.mubr.f32.gmra.mrb[0].mxu0 %v651
  %v1034 = vpop.f32.mrb[0].mxu0
  %v1035 = vadd.f32 0.0, %v1034
  %v1036 = vpop.f32.mrb[0].mxu0
  %1037 = vmatprep.mubr.f32.mxu0 0.0
  %1038 = vmatmul.mubr.f32.gmra.mrb[0].mxu0 %v654
  %v1039 = vpop.f32.mrb[0].mxu0
  %v1040 = vadd.f32 0.0, %v1039
  %v1041 = vpop.f32.mrb[0].mxu0
  %1042 = vmatprep.mubr.f32.mxu0 0.0
  %1043 = vmatmul.mubr.f32.gmra.mrb[0].mxu0 %v657
  %v1044 = vpop.f32.mrb[0].mxu0
  %v1045 = vadd.f32 0.0, %v1044
  %v1046 = vpop.f32.mrb[0].mxu0
  %1047 = vmatprep.mubr.f32.mxu0 0.0
  %1048 = vmatmul.mubr.f32.gmra.mrb[0].mxu0 %v660
  %v1049 = vpop.f32.mrb[0].mxu0
  %v1050 = vadd.f32 0.0, %v1049
  %v1051 = vpop.f32.mrb[0].mxu0
  %1052 = vmatprep.mubr.f32.mxu0 0.0
  %1053 = vmatmul.mubr.f32.gmra.mrb[0].mxu0 %v663
  %v1054 = vpop.f32.mrb[0].mxu0
  %v1055 = vadd.f32 0.0, %v1054
  %v1056 = vpop.f32.mrb[0].mxu0
  %1057 = vmatprep.mubr.f32.mxu0 0.0
  %1058 = vmatmul.mubr.f32.gmra.mrb[0].mxu0 %v666
  %v1059 = vpop.f32.mrb[0].mxu0
  %v1060 = vadd.f32 0.0, %v1059
  %v1061 = vpop.f32.mrb[0].mxu0
  %1062 = vmatprep.mubr.f32.mxu0 0.0
  %1063 = vmatmul.mubr.f32.gmra.mrb[0].mxu0 %v669
  %v1064 = vpop.f32.mrb[0].mxu0
  %v1065 = vadd.f32 0.0, %v1064
  %v1066 = vpop.f32.mrb[0].mxu0
  %1067 = vmatprep.mubr.f32.mxu0 0.0
  %1068 = vmatmul.mubr.f32.gmra.mrb[0].mxu0 %v672
  %v1069 = vpop.f32.mrb[0].mxu0
  %v1070 = vadd.f32 0.0, %v1069
  %v1071 = vpop.f32.mrb[0].mxu0
  %1072 = vmatprep.mubr.f32.mxu0 0.0
  %1073 = vmatmul.mubr.f32.gmra.mrb[0].mxu0 %v675
  %v1074 = vpop.f32.mrb[0].mxu0
  %v1075 = vadd.f32 0.0, %v1074
  %v1076 = vpop.f32.mrb[0].mxu0
  %1077 = vmatprep.mubr.f32.mxu0 0.0
  %1078 = vmatmul.mubr.f32.gmra.mrb[0].mxu0 %v678
  %v1079 = vpop.f32.mrb[0].mxu0
  %v1080 = vadd.f32 0.0, %v1079
  %v1081 = vpop.f32.mrb[0].mxu0
  %1082 = vmatprep.mubr.f32.mxu0 0.0
  %1083 = vmatmul.mubr.f32.gmra.mrb[0].mxu0 %v681
  %v1084 = vpop.f32.mrb[0].mxu0
  %v1085 = vadd.f32 0.0, %v1084
  %v1086 = vpop.f32.mrb[0].mxu0
  %1087 = vmatprep.mubr.f32.mxu0 0.0
  %1088 = vmatmul.mubr.f32.gmra.mrb[0].mxu0 %v684
  %v1089 = vpop.f32.mrb[0].mxu0
  %v1090 = vadd.f32 0.0, %v1089
  %v1091 = vpop.f32.mrb[0].mxu0
  %1092 = vmatprep.mubr.f32.mxu0 0.0
  %1093 = vmatmul.mubr.f32.gmra.mrb[0].mxu0 %v687
  %v1094 = vpop.f32.mrb[0].mxu0
  %v1095 = vadd.f32 0.0, %v1094
  %v1096 = vpop.f32.mrb[0].mxu0
  %1097 = vdwg.mxu0
  %vm1098 = vcmask 523264
  %v1099 = vsel %vm1098, %v780, -inf
  %1100 = vmax.xlane.f32.xlu0 %v1099
  %v1101 = vpop.xlane.xlu0 %1100
  %v1102 = vsel %vm1098, %v785, -inf
  %1103 = vmax.xlane.f32.xlu0 %v1102
  %v1104 = vpop.xlane.xlu0 %1103
  %v1105 = vsel %vm1098, %v790, -inf
  %1106 = vmax.xlane.f32.xlu0 %v1105
  %v1107 = vpop.xlane.xlu0 %1106
  %v1108 = vsel %vm1098, %v795, -inf
  %1109 = vmax.xlane.f32.xlu0 %v1108
  %v1110 = vpop.xlane.xlu0 %1109
  %v1111 = vsel %vm1098, %v800, -inf
  %1112 = vmax.xlane.f32.xlu0 %v1111
  %v1113 = vpop.xlane.xlu0 %1112
  %v1114 = vsel %vm1098, %v805, -inf
  %1115 = vmax.xlane.f32.xlu0 %v1114
  %v1116 = vpop.xlane.xlu0 %1115
  %v1117 = vsel %vm1098, %v810, -inf
  %1118 = vmax.xlane.f32.xlu0 %v1117
  %v1119 = vpop.xlane.xlu0 %1118
  %v1120 = vsel %vm1098, %v815, -inf
  %1121 = vmax.xlane.f32.xlu0 %v1120
  %v1122 = vpop.xlane.xlu0 %1121
  %v1123 = vsel %vm1098, %v820, -inf
  %1124 = vmax.xlane.f32.xlu0 %v1123
  %v1125 = vpop.xlane.xlu0 %1124
  %v1126 = vsel %vm1098, %v825, -inf
  %1127 = vmax.xlane.f32.xlu0 %v1126
  %v1128 = vpop.xlane.xlu0 %1127
  %v1129 = vsel %vm1098, %v830, -inf
  %1130 = vmax.xlane.f32.xlu0 %v1129
  %v1131 = vpop.xlane.xlu0 %1130
  %v1132 = vsel %vm1098, %v835, -inf
  %1133 = vmax.xlane.f32.xlu0 %v1132
  %v1134 = vpop.xlane.xlu0 %1133
  %v1135 = vsel %vm1098, %v840, -inf
  %1136 = vmax.xlane.f32.xlu0 %v1135
  %v1137 = vpop.xlane.xlu0 %1136
  %v1138 = vsel %vm1098, %v845, -inf
  %1139 = vmax.xlane.f32.xlu0 %v1138
  %v1140 = vpop.xlane.xlu0 %1139
  %v1141 = vsel %vm1098, %v850, -inf
  %1142 = vmax.xlane.f32.xlu0 %v1141
  %v1143 = vpop.xlane.xlu0 %1142
  %v1144 = vsel %vm1098, %v855, -inf
  %1145 = vmax.xlane.f32.xlu0 %v1144
  %v1146 = vpop.xlane.xlu0 %1145
  %v1147 = vsel %vm1098, %v860, -inf
  %1148 = vmax.xlane.f32.xlu0 %v1147
  %v1149 = vpop.xlane.xlu0 %1148
  %v1150 = vsel %vm1098, %v865, -inf
  %1151 = vmax.xlane.f32.xlu0 %v1150
  %v1152 = vpop.xlane.xlu0 %1151
  %v1153 = vsel %vm1098, %v870, -inf
  %1154 = vmax.xlane.f32.xlu0 %v1153
  %v1155 = vpop.xlane.xlu0 %1154
  %v1156 = vsel %vm1098, %v875, -inf
  %1157 = vmax.xlane.f32.xlu0 %v1156
  %v1158 = vpop.xlane.xlu0 %1157
  %v1159 = vsel %vm1098, %v880, -inf
  %1160 = vmax.xlane.f32.xlu0 %v1159
  %v1161 = vpop.xlane.xlu0 %1160
  %v1162 = vsel %vm1098, %v885, -inf
  %1163 = vmax.xlane.f32.xlu0 %v1162
  %v1164 = vpop.xlane.xlu0 %1163
  %v1165 = vsel %vm1098, %v890, -inf
  %1166 = vmax.xlane.f32.xlu0 %v1165
  %v1167 = vpop.xlane.xlu0 %1166
  %v1168 = vsel %vm1098, %v895, -inf
  %1169 = vmax.xlane.f32.xlu0 %v1168
  %v1170 = vpop.xlane.xlu0 %1169
  %v1171 = vsel %vm1098, %v900, -inf
  %1172 = vmax.xlane.f32.xlu0 %v1171
  %v1173 = vpop.xlane.xlu0 %1172
  %v1174 = vsel %vm1098, %v905, -inf
  %1175 = vmax.xlane.f32.xlu0 %v1174
  %v1176 = vpop.xlane.xlu0 %1175
  %v1177 = vsel %vm1098, %v910, -inf
  %1178 = vmax.xlane.f32.xlu0 %v1177
  %v1179 = vpop.xlane.xlu0 %1178
  %v1180 = vsel %vm1098, %v915, -inf
  %1181 = vmax.xlane.f32.xlu0 %v1180
  %v1182 = vpop.xlane.xlu0 %1181
  %v1183 = vsel %vm1098, %v920, -inf
  %1184 = vmax.xlane.f32.xlu0 %v1183
  %v1185 = vpop.xlane.xlu0 %1184
  %v1186 = vsel %vm1098, %v925, -inf
  %1187 = vmax.xlane.f32.xlu0 %v1186
  %v1188 = vpop.xlane.xlu0 %1187
  %v1189 = vsel %vm1098, %v930, -inf
  %1190 = vmax.xlane.f32.xlu0 %v1189
  %v1191 = vpop.xlane.xlu0 %1190
  %v1192 = vsel %vm1098, %v935, -inf
  %1193 = vmax.xlane.f32.xlu0 %v1192
  %v1194 = vpop.xlane.xlu0 %1193
  %v1195 = vsel %vm1098, %v940, -inf
  %1196 = vmax.xlane.f32.xlu0 %v1195
  %v1197 = vpop.xlane.xlu0 %1196
  %v1198 = vsel %vm1098, %v945, -inf
  %1199 = vmax.xlane.f32.xlu0 %v1198
  %v1200 = vpop.xlane.xlu0 %1199
  %v1201 = vsel %vm1098, %v950, -inf
  %1202 = vmax.xlane.f32.xlu0 %v1201
  %v1203 = vpop.xlane.xlu0 %1202
  %v1204 = vsel %vm1098, %v955, -inf
  %1205 = vmax.xlane.f32.xlu0 %v1204
  %v1206 = vpop.xlane.xlu0 %1205
  %v1207 = vsel %vm1098, %v960, -inf
  %1208 = vmax.xlane.f32.xlu0 %v1207
  %v1209 = vpop.xlane.xlu0 %1208
  %v1210 = vsel %vm1098, %v965, -inf
  %1211 = vmax.xlane.f32.xlu0 %v1210
  %v1212 = vpop.xlane.xlu0 %1211
  %v1213 = vsel %vm1098, %v970, -inf
  %1214 = vmax.xlane.f32.xlu0 %v1213
  %v1215 = vpop.xlane.xlu0 %1214
  %v1216 = vsel %vm1098, %v975, -inf
  %1217 = vmax.xlane.f32.xlu0 %v1216
  %v1218 = vpop.xlane.xlu0 %1217
  %v1219 = vsel %vm1098, %v980, -inf
  %1220 = vmax.xlane.f32.xlu0 %v1219
  %v1221 = vpop.xlane.xlu0 %1220
  %v1222 = vsel %vm1098, %v985, -inf
  %1223 = vmax.xlane.f32.xlu0 %v1222
  %v1224 = vpop.xlane.xlu0 %1223
  %v1225 = vsel %vm1098, %v990, -inf
  %1226 = vmax.xlane.f32.xlu0 %v1225
  %v1227 = vpop.xlane.xlu0 %1226
  %v1228 = vsel %vm1098, %v995, -inf
  %1229 = vmax.xlane.f32.xlu0 %v1228
  %v1230 = vpop.xlane.xlu0 %1229
  %v1231 = vsel %vm1098, %v1000, -inf
  %1232 = vmax.xlane.f32.xlu0 %v1231
  %v1233 = vpop.xlane.xlu0 %1232
  %v1234 = vsel %vm1098, %v1005, -inf
  %1235 = vmax.xlane.f32.xlu0 %v1234
  %v1236 = vpop.xlane.xlu0 %1235
  %v1237 = vsel %vm1098, %v1010, -inf
  %1238 = vmax.xlane.f32.xlu0 %v1237
  %v1239 = vpop.xlane.xlu0 %1238
  %v1240 = vsel %vm1098, %v1015, -inf
  %1241 = vmax.xlane.f32.xlu0 %v1240
  %v1242 = vpop.xlane.xlu0 %1241
  %v1243 = vsel %vm1098, %v1020, -inf
  %1244 = vmax.xlane.f32.xlu0 %v1243
  %v1245 = vpop.xlane.xlu0 %1244
  %v1246 = vsel %vm1098, %v1025, -inf
  %1247 = vmax.xlane.f32.xlu0 %v1246
  %v1248 = vpop.xlane.xlu0 %1247
  %v1249 = vsel %vm1098, %v1030, -inf
  %1250 = vmax.xlane.f32.xlu0 %v1249
  %v1251 = vpop.xlane.xlu0 %1250
  %v1252 = vsel %vm1098, %v1035, -inf
  %1253 = vmax.xlane.f32.xlu0 %v1252
  %v1254 = vpop.xlane.xlu0 %1253
  %v1255 = vsel %vm1098, %v1040, -inf
  %1256 = vmax.xlane.f32.xlu0 %v1255
  %v1257 = vpop.xlane.xlu0 %1256
  %v1258 = vsel %vm1098, %v1045, -inf
  %1259 = vmax.xlane.f32.xlu0 %v1258
  %v1260 = vpop.xlane.xlu0 %1259
  %v1261 = vsel %vm1098, %v1050, -inf
  %1262 = vmax.xlane.f32.xlu0 %v1261
  %v1263 = vpop.xlane.xlu0 %1262
  %v1264 = vsel %vm1098, %v1055, -inf
  %1265 = vmax.xlane.f32.xlu0 %v1264
  %v1266 = vpop.xlane.xlu0 %1265
  %v1267 = vsel %vm1098, %v1060, -inf
  %1268 = vmax.xlane.f32.xlu0 %v1267
  %v1269 = vpop.xlane.xlu0 %1268
  %v1270 = vsel %vm1098, %v1065, -inf
  %1271 = vmax.xlane.f32.xlu0 %v1270
  %v1272 = vpop.xlane.xlu0 %1271
  %v1273 = vsel %vm1098, %v1070, -inf
  %1274 = vmax.xlane.f32.xlu0 %v1273
  %v1275 = vpop.xlane.xlu0 %1274
  %v1276 = vsel %vm1098, %v1075, -inf
  %1277 = vmax.xlane.f32.xlu0 %v1276
  %v1278 = vpop.xlane.xlu0 %1277
  %v1279 = vsel %vm1098, %v1080, -inf
  %1280 = vmax.xlane.f32.xlu0 %v1279
  %v1281 = vpop.xlane.xlu0 %1280
  %v1282 = vsel %vm1098, %v1085, -inf
  %1283 = vmax.xlane.f32.xlu0 %v1282
  %v1284 = vpop.xlane.xlu0 %1283
  %v1285 = vsel %vm1098, %v1090, -inf
  %1286 = vmax.xlane.f32.xlu0 %v1285
  %v1287 = vpop.xlane.xlu0 %1286
  %v1288 = vsel %vm1098, %v1095, -inf
  %1289 = vmax.xlane.f32.xlu0 %v1288
  %v1290 = vpop.xlane.xlu0 %1289
  %v1291 = vsub.f32 %v780, %v1101
  %v1292 = vsub.f32 %v785, %v1104
  %v1293 = vsub.f32 %v790, %v1107
  %v1294 = vsub.f32 %v795, %v1110
  %v1295 = vsub.f32 %v800, %v1113
  %v1296 = vsub.f32 %v805, %v1116
  %v1297 = vsub.f32 %v810, %v1119
  %v1298 = vsub.f32 %v815, %v1122
  %v1299 = vsub.f32 %v820, %v1125
  %v1300 = vsub.f32 %v825, %v1128
  %v1301 = vsub.f32 %v830, %v1131
  %v1302 = vsub.f32 %v835, %v1134
  %v1303 = vsub.f32 %v840, %v1137
  %v1304 = vsub.f32 %v845, %v1140
  %v1305 = vsub.f32 %v850, %v1143
  %v1306 = vsub.f32 %v855, %v1146
  %v1307 = vsub.f32 %v860, %v1149
  %v1308 = vsub.f32 %v865, %v1152
  %v1309 = vsub.f32 %v870, %v1155
  %v1310 = vsub.f32 %v875, %v1158
  %v1311 = vsub.f32 %v880, %v1161
  %v1312 = vsub.f32 %v885, %v1164
  %v1313 = vsub.f32 %v890, %v1167
  %v1314 = vsub.f32 %v895, %v1170
  %v1315 = vsub.f32 %v900, %v1173
  %v1316 = vsub.f32 %v905, %v1176
  %v1317 = vsub.f32 %v910, %v1179
  %v1318 = vsub.f32 %v915, %v1182
  %v1319 = vsub.f32 %v920, %v1185
  %v1320 = vsub.f32 %v925, %v1188
  %v1321 = vsub.f32 %v930, %v1191
  %v1322 = vsub.f32 %v935, %v1194
  %v1323 = vsub.f32 %v940, %v1197
  %v1324 = vsub.f32 %v945, %v1200
  %v1325 = vsub.f32 %v950, %v1203
  %v1326 = vsub.f32 %v955, %v1206
  %v1327 = vsub.f32 %v960, %v1209
  %v1328 = vsub.f32 %v965, %v1212
  %v1329 = vsub.f32 %v970, %v1215
  %v1330 = vsub.f32 %v975, %v1218
  %v1331 = vsub.f32 %v980, %v1221
  %v1332 = vsub.f32 %v985, %v1224
  %v1333 = vsub.f32 %v990, %v1227
  %v1334 = vsub.f32 %v995, %v1230
  %v1335 = vsub.f32 %v1000, %v1233
  %v1336 = vsub.f32 %v1005, %v1236
  %v1337 = vsub.f32 %v1010, %v1239
  %v1338 = vsub.f32 %v1015, %v1242
  %v1339 = vsub.f32 %v1020, %v1245
  %v1340 = vsub.f32 %v1025, %v1248
  %v1341 = vsub.f32 %v1030, %v1251
  %v1342 = vsub.f32 %v1035, %v1254
  %v1343 = vsub.f32 %v1040, %v1257
  %v1344 = vsub.f32 %v1045, %v1260
  %v1345 = vsub.f32 %v1050, %v1263
  %v1346 = vsub.f32 %v1055, %v1266
  %v1347 = vsub.f32 %v1060, %v1269
  %v1348 = vsub.f32 %v1065, %v1272
  %v1349 = vsub.f32 %v1070, %v1275
  %v1350 = vsub.f32 %v1075, %v1278
  %v1351 = vsub.f32 %v1080, %v1281
  %v1352 = vsub.f32 %v1085, %v1284
  %v1353 = vsub.f32 %v1090, %v1287
  %v1354 = vsub.f32 %v1095, %v1290
  %v1355 = vmul.f32 %v1291, 1.442695
  %v1356 = vpow.pop %v1355
  %v1357 = vmul.f32 %v1292, 1.442695
  %v1358 = vpow.pop %v1357
  %v1359 = vmul.f32 %v1293, 1.442695
  %v1360 = vpow.pop %v1359
  %v1361 = vmul.f32 %v1294, 1.442695
  %v1362 = vpow.pop %v1361
  %v1363 = vmul.f32 %v1295, 1.442695
  %v1364 = vpow.pop %v1363
  %v1365 = vmul.f32 %v1296, 1.442695
  %v1366 = vpow.pop %v1365
  %v1367 = vmul.f32 %v1297, 1.442695
  %v1368 = vpow.pop %v1367
  %v1369 = vmul.f32 %v1298, 1.442695
  %v1370 = vpow.pop %v1369
  %v1371 = vmul.f32 %v1299, 1.442695
  %v1372 = vpow.pop %v1371
  %v1373 = vmul.f32 %v1300, 1.442695
  %v1374 = vpow.pop %v1373
  %v1375 = vmul.f32 %v1301, 1.442695
  %v1376 = vpow.pop %v1375
  %v1377 = vmul.f32 %v1302, 1.442695
  %v1378 = vpow.pop %v1377
  %v1379 = vmul.f32 %v1303, 1.442695
  %v1380 = vpow.pop %v1379
  %v1381 = vmul.f32 %v1304, 1.442695
  %v1382 = vpow.pop %v1381
  %v1383 = vmul.f32 %v1305, 1.442695
  %v1384 = vpow.pop %v1383
  %v1385 = vmul.f32 %v1306, 1.442695
  %v1386 = vpow.pop %v1385
  %v1387 = vmul.f32 %v1307, 1.442695
  %v1388 = vpow.pop %v1387
  %v1389 = vmul.f32 %v1308, 1.442695
  %v1390 = vpow.pop %v1389
  %v1391 = vmul.f32 %v1309, 1.442695
  %v1392 = vpow.pop %v1391
  %v1393 = vmul.f32 %v1310, 1.442695
  %v1394 = vpow.pop %v1393
  %v1395 = vmul.f32 %v1311, 1.442695
  %v1396 = vpow.pop %v1395
  %v1397 = vmul.f32 %v1312, 1.442695
  %v1398 = vpow.pop %v1397
  %v1399 = vmul.f32 %v1313, 1.442695
  %v1400 = vpow.pop %v1399
  %v1401 = vmul.f32 %v1314, 1.442695
  %v1402 = vpow.pop %v1401
  %v1403 = vmul.f32 %v1315, 1.442695
  %v1404 = vpow.pop %v1403
  %v1405 = vmul.f32 %v1316, 1.442695
  %v1406 = vpow.pop %v1405
  %v1407 = vmul.f32 %v1317, 1.442695
  %v1408 = vpow.pop %v1407
  %v1409 = vmul.f32 %v1318, 1.442695
  %v1410 = vpow.pop %v1409
  %v1411 = vmul.f32 %v1319, 1.442695
  %v1412 = vpow.pop %v1411
  %v1413 = vmul.f32 %v1320, 1.442695
  %v1414 = vpow.pop %v1413
  %v1415 = vmul.f32 %v1321, 1.442695
  %v1416 = vpow.pop %v1415
  %v1417 = vmul.f32 %v1322, 1.442695
  %v1418 = vpow.pop %v1417
  %v1419 = vmul.f32 %v1323, 1.442695
  %v1420 = vpow.pop %v1419
  %v1421 = vmul.f32 %v1324, 1.442695
  %v1422 = vpow.pop %v1421
  %v1423 = vmul.f32 %v1325, 1.442695
  %v1424 = vpow.pop %v1423
  %v1425 = vmul.f32 %v1326, 1.442695
  %v1426 = vpow.pop %v1425
  %v1427 = vmul.f32 %v1327, 1.442695
  %v1428 = vpow.pop %v1427
  %v1429 = vmul.f32 %v1328, 1.442695
  %v1430 = vpow.pop %v1429
  %v1431 = vmul.f32 %v1329, 1.442695
  %v1432 = vpow.pop %v1431
  %v1433 = vmul.f32 %v1330, 1.442695
  %v1434 = vpow.pop %v1433
  %v1435 = vmul.f32 %v1331, 1.442695
  %v1436 = vpow.pop %v1435
  %v1437 = vmul.f32 %v1332, 1.442695
  %v1438 = vpow.pop %v1437
  %v1439 = vmul.f32 %v1333, 1.442695
  %v1440 = vpow.pop %v1439
  %v1441 = vmul.f32 %v1334, 1.442695
  %v1442 = vpow.pop %v1441
  %v1443 = vmul.f32 %v1335, 1.442695
  %v1444 = vpow.pop %v1443
  %v1445 = vmul.f32 %v1336, 1.442695
  %v1446 = vpow.pop %v1445
  %v1447 = vmul.f32 %v1337, 1.442695
  %v1448 = vpow.pop %v1447
  %v1449 = vmul.f32 %v1338, 1.442695
  %v1450 = vpow.pop %v1449
  %v1451 = vmul.f32 %v1339, 1.442695
  %v1452 = vpow.pop %v1451
  %v1453 = vmul.f32 %v1340, 1.442695
  %v1454 = vpow.pop %v1453
  %v1455 = vmul.f32 %v1341, 1.442695
  %v1456 = vpow.pop %v1455
  %v1457 = vmul.f32 %v1342, 1.442695
  %v1458 = vpow.pop %v1457
  %v1459 = vmul.f32 %v1343, 1.442695
  %v1460 = vpow.pop %v1459
  %v1461 = vmul.f32 %v1344, 1.442695
  %v1462 = vpow.pop %v1461
  %v1463 = vmul.f32 %v1345, 1.442695
  %v1464 = vpow.pop %v1463
  %v1465 = vmul.f32 %v1346, 1.442695
  %v1466 = vpow.pop %v1465
  %v1467 = vmul.f32 %v1347, 1.442695
  %v1468 = vpow.pop %v1467
  %v1469 = vmul.f32 %v1348, 1.442695
  %v1470 = vpow.pop %v1469
  %v1471 = vmul.f32 %v1349, 1.442695
  %v1472 = vpow.pop %v1471
  %v1473 = vmul.f32 %v1350, 1.442695
  %v1474 = vpow.pop %v1473
  %v1475 = vmul.f32 %v1351, 1.442695
  %v1476 = vpow.pop %v1475
  %v1477 = vmul.f32 %v1352, 1.442695
  %v1478 = vpow.pop %v1477
  %v1479 = vmul.f32 %v1353, 1.442695
  %v1480 = vpow.pop %v1479
  %v1481 = vmul.f32 %v1354, 1.442695
  %v1482 = vpow.pop %v1481
  %v1483 = vsel %vm1098, %v1356, 0.0
  %1484 = vadd.xlane.f32.xlu0 %v1483
  %v1485 = vpop.xlane.xlu0 %1484
  %v1486 = vsel %vm1098, %v1358, 0.0
  %1487 = vadd.xlane.f32.xlu0 %v1486
  %v1488 = vpop.xlane.xlu0 %1487
  %v1489 = vsel %vm1098, %v1360, 0.0
  %1490 = vadd.xlane.f32.xlu0 %v1489
  %v1491 = vpop.xlane.xlu0 %1490
  %v1492 = vsel %vm1098, %v1362, 0.0
  %1493 = vadd.xlane.f32.xlu0 %v1492
  %v1494 = vpop.xlane.xlu0 %1493
  %v1495 = vsel %vm1098, %v1364, 0.0
  %1496 = vadd.xlane.f32.xlu0 %v1495
  %v1497 = vpop.xlane.xlu0 %1496
  %v1498 = vsel %vm1098, %v1366, 0.0
  %1499 = vadd.xlane.f32.xlu0 %v1498
  %v1500 = vpop.xlane.xlu0 %1499
  %v1501 = vsel %vm1098, %v1368, 0.0
  %1502 = vadd.xlane.f32.xlu0 %v1501
  %v1503 = vpop.xlane.xlu0 %1502
  %v1504 = vsel %vm1098, %v1370, 0.0
  %1505 = vadd.xlane.f32.xlu0 %v1504
  %v1506 = vpop.xlane.xlu0 %1505
  %v1507 = vsel %vm1098, %v1372, 0.0
  %1508 = vadd.xlane.f32.xlu0 %v1507
  %v1509 = vpop.xlane.xlu0 %1508
  %v1510 = vsel %vm1098, %v1374, 0.0
  %1511 = vadd.xlane.f32.xlu0 %v1510
  %v1512 = vpop.xlane.xlu0 %1511
  %v1513 = vsel %vm1098, %v1376, 0.0
  %1514 = vadd.xlane.f32.xlu0 %v1513
  %v1515 = vpop.xlane.xlu0 %1514
  %v1516 = vsel %vm1098, %v1378, 0.0
  %1517 = vadd.xlane.f32.xlu0 %v1516
  %v1518 = vpop.xlane.xlu0 %1517
  %v1519 = vsel %vm1098, %v1380, 0.0
  %1520 = vadd.xlane.f32.xlu0 %v1519
  %v1521 = vpop.xlane.xlu0 %1520
  %v1522 = vsel %vm1098, %v1382, 0.0
  %1523 = vadd.xlane.f32.xlu0 %v1522
  %v1524 = vpop.xlane.xlu0 %1523
  %v1525 = vsel %vm1098, %v1384, 0.0
  %1526 = vadd.xlane.f32.xlu0 %v1525
  %v1527 = vpop.xlane.xlu0 %1526
  %v1528 = vsel %vm1098, %v1386, 0.0
  %1529 = vadd.xlane.f32.xlu0 %v1528
  %v1530 = vpop.xlane.xlu0 %1529
  %v1531 = vsel %vm1098, %v1388, 0.0
  %1532 = vadd.xlane.f32.xlu0 %v1531
  %v1533 = vpop.xlane.xlu0 %1532
  %v1534 = vsel %vm1098, %v1390, 0.0
  %1535 = vadd.xlane.f32.xlu0 %v1534
  %v1536 = vpop.xlane.xlu0 %1535
  %v1537 = vsel %vm1098, %v1392, 0.0
  %1538 = vadd.xlane.f32.xlu0 %v1537
  %v1539 = vpop.xlane.xlu0 %1538
  %v1540 = vsel %vm1098, %v1394, 0.0
  %1541 = vadd.xlane.f32.xlu0 %v1540
  %v1542 = vpop.xlane.xlu0 %1541
  %v1543 = vsel %vm1098, %v1396, 0.0
  %1544 = vadd.xlane.f32.xlu0 %v1543
  %v1545 = vpop.xlane.xlu0 %1544
  %v1546 = vsel %vm1098, %v1398, 0.0
  %1547 = vadd.xlane.f32.xlu0 %v1546
  %v1548 = vpop.xlane.xlu0 %1547
  %v1549 = vsel %vm1098, %v1400, 0.0
  %1550 = vadd.xlane.f32.xlu0 %v1549
  %v1551 = vpop.xlane.xlu0 %1550
  %v1552 = vsel %vm1098, %v1402, 0.0
  %1553 = vadd.xlane.f32.xlu0 %v1552
  %v1554 = vpop.xlane.xlu0 %1553
  %v1555 = vsel %vm1098, %v1404, 0.0
  %1556 = vadd.xlane.f32.xlu0 %v1555
  %v1557 = vpop.xlane.xlu0 %1556
  %v1558 = vsel %vm1098, %v1406, 0.0
  %1559 = vadd.xlane.f32.xlu0 %v1558
  %v1560 = vpop.xlane.xlu0 %1559
  %v1561 = vsel %vm1098, %v1408, 0.0
  %1562 = vadd.xlane.f32.xlu0 %v1561
  %v1563 = vpop.xlane.xlu0 %1562
  %v1564 = vsel %vm1098, %v1410, 0.0
  %1565 = vadd.xlane.f32.xlu0 %v1564
  %v1566 = vpop.xlane.xlu0 %1565
  %v1567 = vsel %vm1098, %v1412, 0.0
  %1568 = vadd.xlane.f32.xlu0 %v1567
  %v1569 = vpop.xlane.xlu0 %1568
  %v1570 = vsel %vm1098, %v1414, 0.0
  %1571 = vadd.xlane.f32.xlu0 %v1570
  %v1572 = vpop.xlane.xlu0 %1571
  %v1573 = vsel %vm1098, %v1416, 0.0
  %1574 = vadd.xlane.f32.xlu0 %v1573
  %v1575 = vpop.xlane.xlu0 %1574
  %v1576 = vsel %vm1098, %v1418, 0.0
  %1577 = vadd.xlane.f32.xlu0 %v1576
  %v1578 = vpop.xlane.xlu0 %1577
  %v1579 = vsel %vm1098, %v1420, 0.0
  %1580 = vadd.xlane.f32.xlu0 %v1579
  %v1581 = vpop.xlane.xlu0 %1580
  %v1582 = vsel %vm1098, %v1422, 0.0
  %1583 = vadd.xlane.f32.xlu0 %v1582
  %v1584 = vpop.xlane.xlu0 %1583
  %v1585 = vsel %vm1098, %v1424, 0.0
  %1586 = vadd.xlane.f32.xlu0 %v1585
  %v1587 = vpop.xlane.xlu0 %1586
  %v1588 = vsel %vm1098, %v1426, 0.0
  %1589 = vadd.xlane.f32.xlu0 %v1588
  %v1590 = vpop.xlane.xlu0 %1589
  %v1591 = vsel %vm1098, %v1428, 0.0
  %1592 = vadd.xlane.f32.xlu0 %v1591
  %v1593 = vpop.xlane.xlu0 %1592
  %v1594 = vsel %vm1098, %v1430, 0.0
  %1595 = vadd.xlane.f32.xlu0 %v1594
  %v1596 = vpop.xlane.xlu0 %1595
  %v1597 = vsel %vm1098, %v1432, 0.0
  %1598 = vadd.xlane.f32.xlu0 %v1597
  %v1599 = vpop.xlane.xlu0 %1598
  %v1600 = vsel %vm1098, %v1434, 0.0
  %1601 = vadd.xlane.f32.xlu0 %v1600
  %v1602 = vpop.xlane.xlu0 %1601
  %v1603 = vsel %vm1098, %v1436, 0.0
  %1604 = vadd.xlane.f32.xlu0 %v1603
  %v1605 = vpop.xlane.xlu0 %1604
  %v1606 = vsel %vm1098, %v1438, 0.0
  %1607 = vadd.xlane.f32.xlu0 %v1606
  %v1608 = vpop.xlane.xlu0 %1607
  %v1609 = vsel %vm1098, %v1440, 0.0
  %1610 = vadd.xlane.f32.xlu0 %v1609
  %v1611 = vpop.xlane.xlu0 %1610
  %v1612 = vsel %vm1098, %v1442, 0.0
  %1613 = vadd.xlane.f32.xlu0 %v1612
  %v1614 = vpop.xlane.xlu0 %1613
  %v1615 = vsel %vm1098, %v1444, 0.0
  %1616 = vadd.xlane.f32.xlu0 %v1615
  %v1617 = vpop.xlane.xlu0 %1616
  %v1618 = vsel %vm1098, %v1446, 0.0
  %1619 = vadd.xlane.f32.xlu0 %v1618
  %v1620 = vpop.xlane.xlu0 %1619
  %v1621 = vsel %vm1098, %v1448, 0.0
  %1622 = vadd.xlane.f32.xlu0 %v1621
  %v1623 = vpop.xlane.xlu0 %1622
  %v1624 = vsel %vm1098, %v1450, 0.0
  %1625 = vadd.xlane.f32.xlu0 %v1624
  %v1626 = vpop.xlane.xlu0 %1625
  %v1627 = vsel %vm1098, %v1452, 0.0
  %1628 = vadd.xlane.f32.xlu0 %v1627
  %v1629 = vpop.xlane.xlu0 %1628
  %v1630 = vsel %vm1098, %v1454, 0.0
  %1631 = vadd.xlane.f32.xlu0 %v1630
  %v1632 = vpop.xlane.xlu0 %1631
  %v1633 = vsel %vm1098, %v1456, 0.0
  %1634 = vadd.xlane.f32.xlu0 %v1633
  %v1635 = vpop.xlane.xlu0 %1634
  %v1636 = vsel %vm1098, %v1458, 0.0
  %1637 = vadd.xlane.f32.xlu0 %v1636
  %v1638 = vpop.xlane.xlu0 %1637
  %v1639 = vsel %vm1098, %v1460, 0.0
  %1640 = vadd.xlane.f32.xlu0 %v1639
  %v1641 = vpop.xlane.xlu0 %1640
  %v1642 = vsel %vm1098, %v1462, 0.0
  %1643 = vadd.xlane.f32.xlu0 %v1642
  %v1644 = vpop.xlane.xlu0 %1643
  %v1645 = vsel %vm1098, %v1464, 0.0
  %1646 = vadd.xlane.f32.xlu0 %v1645
  %v1647 = vpop.xlane.xlu0 %1646
  %v1648 = vsel %vm1098, %v1466, 0.0
  %1649 = vadd.xlane.f32.xlu0 %v1648
  %v1650 = vpop.xlane.xlu0 %1649
  %v1651 = vsel %vm1098, %v1468, 0.0
  %1652 = vadd.xlane.f32.xlu0 %v1651
  %v1653 = vpop.xlane.xlu0 %1652
  %v1654 = vsel %vm1098, %v1470, 0.0
  %1655 = vadd.xlane.f32.xlu0 %v1654
  %v1656 = vpop.xlane.xlu0 %1655
  %v1657 = vsel %vm1098, %v1472, 0.0
  %1658 = vadd.xlane.f32.xlu0 %v1657
  %v1659 = vpop.xlane.xlu0 %1658
  %v1660 = vsel %vm1098, %v1474, 0.0
  %1661 = vadd.xlane.f32.xlu0 %v1660
  %v1662 = vpop.xlane.xlu0 %1661
  %v1663 = vsel %vm1098, %v1476, 0.0
  %1664 = vadd.xlane.f32.xlu0 %v1663
  %v1665 = vpop.xlane.xlu0 %1664
  %v1666 = vsel %vm1098, %v1478, 0.0
  %1667 = vadd.xlane.f32.xlu0 %v1666
  %v1668 = vpop.xlane.xlu0 %1667
  %v1669 = vsel %vm1098, %v1480, 0.0
  %1670 = vadd.xlane.f32.xlu0 %v1669
  %v1671 = vpop.xlane.xlu0 %1670
  %v1672 = vsel %vm1098, %v1482, 0.0
  %1673 = vadd.xlane.f32.xlu0 %v1672
  %v1674 = vpop.xlane.xlu0 %1673
  %v1675 = vrcp.pop %v1485
  %v1676 = vrcp.pop %v1488
  %v1677 = vrcp.pop %v1491
  %v1678 = vrcp.pop %v1494
  %v1679 = vrcp.pop %v1497
  %v1680 = vrcp.pop %v1500
  %v1681 = vrcp.pop %v1503
  %v1682 = vrcp.pop %v1506
  %v1683 = vrcp.pop %v1509
  %v1684 = vrcp.pop %v1512
  %v1685 = vrcp.pop %v1515
  %v1686 = vrcp.pop %v1518
  %v1687 = vrcp.pop %v1521
  %v1688 = vrcp.pop %v1524
  %v1689 = vrcp.pop %v1527
  %v1690 = vrcp.pop %v1530
  %v1691 = vrcp.pop %v1533
  %v1692 = vrcp.pop %v1536
  %v1693 = vrcp.pop %v1539
  %v1694 = vrcp.pop %v1542
  %v1695 = vrcp.pop %v1545
  %v1696 = vrcp.pop %v1548
  %v1697 = vrcp.pop %v1551
  %v1698 = vrcp.pop %v1554
  %v1699 = vrcp.pop %v1557
  %v1700 = vrcp.pop %v1560
  %v1701 = vrcp.pop %v1563
  %v1702 = vrcp.pop %v1566
  %v1703 = vrcp.pop %v1569
  %v1704 = vrcp.pop %v1572
  %v1705 = vrcp.pop %v1575
  %v1706 = vrcp.pop %v1578
  %v1707 = vrcp.pop %v1581
  %v1708 = vrcp.pop %v1584
  %v1709 = vrcp.pop %v1587
  %v1710 = vrcp.pop %v1590
  %v1711 = vrcp.pop %v1593
  %v1712 = vrcp.pop %v1596
  %v1713 = vrcp.pop %v1599
  %v1714 = vrcp.pop %v1602
  %v1715 = vrcp.pop %v1605
  %v1716 = vrcp.pop %v1608
  %v1717 = vrcp.pop %v1611
  %v1718 = vrcp.pop %v1614
  %v1719 = vrcp.pop %v1617
  %v1720 = vrcp.pop %v1620
  %v1721 = vrcp.pop %v1623
  %v1722 = vrcp.pop %v1626
  %v1723 = vrcp.pop %v1629
  %v1724 = vrcp.pop %v1632
  %v1725 = vrcp.pop %v1635
  %v1726 = vrcp.pop %v1638
  %v1727 = vrcp.pop %v1641
  %v1728 = vrcp.pop %v1644
  %v1729 = vrcp.pop %v1647
  %v1730 = vrcp.pop %v1650
  %v1731 = vrcp.pop %v1653
  %v1732 = vrcp.pop %v1656
  %v1733 = vrcp.pop %v1659
  %v1734 = vrcp.pop %v1662
  %v1735 = vrcp.pop %v1665
  %v1736 = vrcp.pop %v1668
  %v1737 = vrcp.pop %v1671
  %v1738 = vrcp.pop %v1674
  %v1739 = vmul.f32 %v1356, %v1675
  %v1740 = vmul.f32 %v1358, %v1676
  %v1741 = vmul.f32 %v1360, %v1677
  %v1742 = vmul.f32 %v1362, %v1678
  %v1743 = vmul.f32 %v1364, %v1679
  %v1744 = vmul.f32 %v1366, %v1680
  %v1745 = vmul.f32 %v1368, %v1681
  %v1746 = vmul.f32 %v1370, %v1682
  %v1747 = vmul.f32 %v1372, %v1683
  %v1748 = vmul.f32 %v1374, %v1684
  %v1749 = vmul.f32 %v1376, %v1685
  %v1750 = vmul.f32 %v1378, %v1686
  %v1751 = vmul.f32 %v1380, %v1687
  %v1752 = vmul.f32 %v1382, %v1688
  %v1753 = vmul.f32 %v1384, %v1689
  %v1754 = vmul.f32 %v1386, %v1690
  %v1755 = vmul.f32 %v1388, %v1691
  %v1756 = vmul.f32 %v1390, %v1692
  %v1757 = vmul.f32 %v1392, %v1693
  %v1758 = vmul.f32 %v1394, %v1694
  %v1759 = vmul.f32 %v1396, %v1695
  %v1760 = vmul.f32 %v1398, %v1696
  %v1761 = vmul.f32 %v1400, %v1697
  %v1762 = vmul.f32 %v1402, %v1698
  %v1763 = vmul.f32 %v1404, %v1699
  %v1764 = vmul.f32 %v1406, %v1700
  %v1765 = vmul.f32 %v1408, %v1701
  %v1766 = vmul.f32 %v1410, %v1702
  %v1767 = vmul.f32 %v1412, %v1703
  %v1768 = vmul.f32 %v1414, %v1704
  %v1769 = vmul.f32 %v1416, %v1705
  %v1770 = vmul.f32 %v1418, %v1706
  %v1771 = vmul.f32 %v1420, %v1707
  %v1772 = vmul.f32 %v1422, %v1708
  %v1773 = vmul.f32 %v1424, %v1709
  %v1774 = vmul.f32 %v1426, %v1710
  %v1775 = vmul.f32 %v1428, %v1711
  %v1776 = vmul.f32 %v1430, %v1712
  %v1777 = vmul.f32 %v1432, %v1713
  %v1778 = vmul.f32 %v1434, %v1714
  %v1779 = vmul.f32 %v1436, %v1715
  %v1780 = vmul.f32 %v1438, %v1716
  %v1781 = vmul.f32 %v1440, %v1717
  %v1782 = vmul.f32 %v1442, %v1718
  %v1783 = vmul.f32 %v1444, %v1719
  %v1784 = vmul.f32 %v1446, %v1720
  %v1785 = vmul.f32 %v1448, %v1721
  %v1786 = vmul.f32 %v1450, %v1722
  %v1787 = vmul.f32 %v1452, %v1723
  %v1788 = vmul.f32 %v1454, %v1724
  %v1789 = vmul.f32 %v1456, %v1725
  %v1790 = vmul.f32 %v1458, %v1726
  %v1791 = vmul.f32 %v1460, %v1727
  %v1792 = vmul.f32 %v1462, %v1728
  %v1793 = vmul.f32 %v1464, %v1729
  %v1794 = vmul.f32 %v1466, %v1730
  %v1795 = vmul.f32 %v1468, %v1731
  %v1796 = vmul.f32 %v1470, %v1732
  %v1797 = vmul.f32 %v1472, %v1733
  %v1798 = vmul.f32 %v1474, %v1734
  %v1799 = vmul.f32 %v1476, %v1735
  %v1800 = vmul.f32 %v1478, %v1736
  %v1801 = vmul.f32 %v1480, %v1737
  %v1802 = vmul.f32 %v1482, %v1738
  %v1804 = vsel %vm1098, %v1739, 0
  %v1807 = vsel %vm1098, %v1740, 0
  %v1810 = vsel %vm1098, %v1741, 0
  %v1813 = vsel %vm1098, %v1742, 0
  %v1816 = vsel %vm1098, %v1743, 0
  %v1819 = vsel %vm1098, %v1744, 0
  %v1822 = vsel %vm1098, %v1745, 0
  %v1825 = vsel %vm1098, %v1746, 0
  %v1828 = vsel %vm1098, %v1747, 0
  %v1831 = vsel %vm1098, %v1748, 0
  %v1834 = vsel %vm1098, %v1749, 0
  %v1837 = vsel %vm1098, %v1750, 0
  %v1840 = vsel %vm1098, %v1751, 0
  %v1843 = vsel %vm1098, %v1752, 0
  %v1846 = vsel %vm1098, %v1753, 0
  %v1849 = vsel %vm1098, %v1754, 0
  %v1852 = vsel %vm1098, %v1755, 0
  %v1855 = vsel %vm1098, %v1756, 0
  %v1858 = vsel %vm1098, %v1757, 0
  %v1861 = vsel %vm1098, %v1758, 0
  %v1864 = vsel %vm1098, %v1759, 0
  %v1867 = vsel %vm1098, %v1760, 0
  %v1870 = vsel %vm1098, %v1761, 0
  %v1873 = vsel %vm1098, %v1762, 0
  %v1876 = vsel %vm1098, %v1763, 0
  %v1879 = vsel %vm1098, %v1764, 0
  %v1882 = vsel %vm1098, %v1765, 0
  %v1885 = vsel %vm1098, %v1766, 0
  %v1888 = vsel %vm1098, %v1767, 0
  %v1891 = vsel %vm1098, %v1768, 0
  %v1894 = vsel %vm1098, %v1769, 0
  %v1897 = vsel %vm1098, %v1770, 0
  %v1900 = vsel %vm1098, %v1771, 0
  %v1903 = vsel %vm1098, %v1772, 0
  %v1906 = vsel %vm1098, %v1773, 0
  %v1909 = vsel %vm1098, %v1774, 0
  %v1912 = vsel %vm1098, %v1775, 0
  %v1915 = vsel %vm1098, %v1776, 0
  %v1918 = vsel %vm1098, %v1777, 0
  %v1921 = vsel %vm1098, %v1778, 0
  %v1924 = vsel %vm1098, %v1779, 0
  %v1927 = vsel %vm1098, %v1780, 0
  %v1930 = vsel %vm1098, %v1781, 0
  %v1933 = vsel %vm1098, %v1782, 0
  %v1936 = vsel %vm1098, %v1783, 0
  %v1939 = vsel %vm1098, %v1784, 0
  %v1942 = vsel %vm1098, %v1785, 0
  %v1945 = vsel %vm1098, %v1786, 0
  %v1948 = vsel %vm1098, %v1787, 0
  %v1951 = vsel %vm1098, %v1788, 0
  %v1954 = vsel %vm1098, %v1789, 0
  %v1957 = vsel %vm1098, %v1790, 0
  %v1960 = vsel %vm1098, %v1791, 0
  %v1963 = vsel %vm1098, %v1792, 0
  %v1966 = vsel %vm1098, %v1793, 0
  %v1969 = vsel %vm1098, %v1794, 0
  %v1972 = vsel %vm1098, %v1795, 0
  %v1975 = vsel %vm1098, %v1796, 0
  %v1978 = vsel %vm1098, %v1797, 0
  %v1981 = vsel %vm1098, %v1798, 0
  %v1984 = vsel %vm1098, %v1799, 0
  %v1987 = vsel %vm1098, %v1800, 0
  %v1990 = vsel %vm1098, %v1801, 0
  %v1993 = vsel %vm1098, %v1802, 0
  %1995 = vmatprep.subr.mxu0 0.0
  %1996 = vmatpush1.msra.mxu0 %v377
  %1997 = vmatprep.subr.mxu0 0.0
  %1998 = vmatpush1.msra.mxu0 %v382
  %1999 = vmatprep.subr.mxu0 0.0
  %2000 = vmatpush1.msra.mxu0 %v387
  %2001 = vmatprep.subr.mxu0 0.0
  %2002 = vmatpush1.msra.mxu0 %v392
  %2003 = vmatprep.subr.mxu0 0.0
  %2004 = vmatpush1.msra.mxu0 %v397
  %2005 = vmatprep.subr.mxu0 0.0
  %2006 = vmatpush1.msra.mxu0 %v402
  %2007 = vmatprep.subr.mxu0 0.0
  %2008 = vmatpush1.msra.mxu0 %v407
  %2009 = vmatprep.subr.mxu0 0.0
  %2010 = vmatpush1.msra.mxu0 %v412
  %2011 = vmatprep.subr.mxu0 0.0
  %2012 = vmatpush1.msra.mxu0 0.0
  %2013 = vmatprep.subr.mxu0 0.0
  %2014 = vmatpush1.msra.mxu0 0.0
  %2015 = vmatprep.subr.mxu0 0.0
  %2016 = vmatpush1.msra.mxu0 0.0
  %2017 = vmatprep.subr.mxu0 0.0
  %2018 = vmatpush1.msra.mxu0 0.0
  %2019 = vmatprep.subr.mxu0 0.0
  %2020 = vmatpush1.msra.mxu0 0.0
  %2021 = vmatprep.subr.mxu0 0.0
  %2022 = vmatpush1.msra.mxu0 0.0
  %2023 = vmatprep.subr.mxu0 0.0
  %2024 = vmatpush1.msra.mxu0 0.0
  %2025 = vmatprep.subr.mxu0 0.0
  %2026 = vmatpush1.msra.mxu0 0.0
  %2027 = vmatprep.subr.mxu0 0.0
  %2028 = vmatpush1.msra.mxu0 0.0
  %2029 = vmatprep.subr.mxu0 0.0
  %2030 = vmatpush1.msra.mxu0 0.0
  %2031 = vmatprep.subr.mxu0 0.0
  %2032 = vmatpush1.msra.mxu0 0.0
  %2033 = vmatprep.subr.mxu0 0.0
  %2034 = vmatpush1.msra.mxu0 0.0
  %2035 = vmatprep.subr.mxu0 0.0
  %2036 = vmatpush1.msra.mxu0 0.0
  %2037 = vmatprep.subr.mxu0 0.0
  %2038 = vmatpush1.msra.mxu0 0.0
  %2039 = vmatprep.subr.mxu0 0.0
  %2040 = vmatpush1.msra.mxu0 0.0
  %2041 = vmatprep.subr.mxu0 0.0
  %2042 = vmatpush1.msra.mxu0 0.0
  %2043 = vmatprep.subr.mxu0 0.0
  %2044 = vmatpush1.msra.mxu0 0.0
  %2045 = vmatprep.subr.mxu0 0.0
  %2046 = vmatpush1.msra.mxu0 0.0
  %2047 = vmatprep.subr.mxu0 0.0
  %2048 = vmatpush1.msra.mxu0 0.0
  %2049 = vmatprep.subr.mxu0 0.0
  %2050 = vmatpush1.msra.mxu0 0.0
  %2051 = vmatprep.subr.mxu0 0.0
  %2052 = vmatpush1.msra.mxu0 0.0
  %2053 = vmatprep.subr.mxu0 0.0
  %2054 = vmatpush1.msra.mxu0 0.0
  %2055 = vmatprep.subr.mxu0 0.0
  %2056 = vmatpush1.msra.mxu0 0.0
  %2057 = vmatprep.subr.mxu0 0.0
  %2058 = vmatpush1.msra.mxu0 0.0
  %2059 = vmatprep.mubr.f32.mxu0 0.0
  %2060 = vmatmul.mubr.f32.gmra.mrb[0].mxu0 %v1804
  %v2061 = vpop.f32.mrb[0].mxu0
  %v2062 = vadd.f32 0.0, %v2061
  %v2063 = vpop.f32.mrb[0].mxu0
  %2064 = vmatprep.mubr.f32.mxu0 0.0
  %2065 = vmatmul.mubr.f32.gmra.mrb[0].mxu0 %v1807
  %v2066 = vpop.f32.mrb[0].mxu0
  %v2067 = vadd.f32 0.0, %v2066
  %v2068 = vpop.f32.mrb[0].mxu0
  %2069 = vmatprep.mubr.f32.mxu0 0.0
  %2070 = vmatmul.mubr.f32.gmra.mrb[0].mxu0 %v1810
  %v2071 = vpop.f32.mrb[0].mxu0
  %v2072 = vadd.f32 0.0, %v2071
  %v2073 = vpop.f32.mrb[0].mxu0
  %2074 = vmatprep.mubr.f32.mxu0 0.0
  %2075 = vmatmul.mubr.f32.gmra.mrb[0].mxu0 %v1813
  %v2076 = vpop.f32.mrb[0].mxu0
  %v2077 = vadd.f32 0.0, %v2076
  %v2078 = vpop.f32.mrb[0].mxu0
  %2079 = vmatprep.mubr.f32.mxu0 0.0
  %2080 = vmatmul.mubr.f32.gmra.mrb[0].mxu0 %v1816
  %v2081 = vpop.f32.mrb[0].mxu0
  %v2082 = vadd.f32 0.0, %v2081
  %v2083 = vpop.f32.mrb[0].mxu0
  %2084 = vmatprep.mubr.f32.mxu0 0.0
  %2085 = vmatmul.mubr.f32.gmra.mrb[0].mxu0 %v1819
  %v2086 = vpop.f32.mrb[0].mxu0
  %v2087 = vadd.f32 0.0, %v2086
  %v2088 = vpop.f32.mrb[0].mxu0
  %2089 = vmatprep.mubr.f32.mxu0 0.0
  %2090 = vmatmul.mubr.f32.gmra.mrb[0].mxu0 %v1822
  %v2091 = vpop.f32.mrb[0].mxu0
  %v2092 = vadd.f32 0.0, %v2091
  %v2093 = vpop.f32.mrb[0].mxu0
  %2094 = vmatprep.mubr.f32.mxu0 0.0
  %2095 = vmatmul.mubr.f32.gmra.mrb[0].mxu0 %v1825
  %v2096 = vpop.f32.mrb[0].mxu0
  %v2097 = vadd.f32 0.0, %v2096
  %v2098 = vpop.f32.mrb[0].mxu0
  %2099 = vmatprep.mubr.f32.mxu0 0.0
  %2100 = vmatmul.mubr.f32.gmra.mrb[0].mxu0 %v1828
  %v2101 = vpop.f32.mrb[0].mxu0
  %v2102 = vadd.f32 0.0, %v2101
  %v2103 = vpop.f32.mrb[0].mxu0
  %2104 = vmatprep.mubr.f32.mxu0 0.0
  %2105 = vmatmul.mubr.f32.gmra.mrb[0].mxu0 %v1831
  %v2106 = vpop.f32.mrb[0].mxu0
  %v2107 = vadd.f32 0.0, %v2106
  %v2108 = vpop.f32.mrb[0].mxu0
  %2109 = vmatprep.mubr.f32.mxu0 0.0
  %2110 = vmatmul.mubr.f32.gmra.mrb[0].mxu0 %v1834
  %v2111 = vpop.f32.mrb[0].mxu0
  %v2112 = vadd.f32 0.0, %v2111
  %v2113 = vpop.f32.mrb[0].mxu0
  %2114 = vmatprep.mubr.f32.mxu0 0.0
  %2115 = vmatmul.mubr.f32.gmra.mrb[0].mxu0 %v1837
  %v2116 = vpop.f32.mrb[0].mxu0
  %v2117 = vadd.f32 0.0, %v2116
  %v2118 = vpop.f32.mrb[0].mxu0
  %2119 = vmatprep.mubr.f32.mxu0 0.0
  %2120 = vmatmul.mubr.f32.gmra.mrb[0].mxu0 %v1840
  %v2121 = vpop.f32.mrb[0].mxu0
  %v2122 = vadd.f32 0.0, %v2121
  %v2123 = vpop.f32.mrb[0].mxu0
  %2124 = vmatprep.mubr.f32.mxu0 0.0
  %2125 = vmatmul.mubr.f32.gmra.mrb[0].mxu0 %v1843
  %v2126 = vpop.f32.mrb[0].mxu0
  %v2127 = vadd.f32 0.0, %v2126
  %v2128 = vpop.f32.mrb[0].mxu0
  %2129 = vmatprep.mubr.f32.mxu0 0.0
  %2130 = vmatmul.mubr.f32.gmra.mrb[0].mxu0 %v1846
  %v2131 = vpop.f32.mrb[0].mxu0
  %v2132 = vadd.f32 0.0, %v2131
  %v2133 = vpop.f32.mrb[0].mxu0
  %2134 = vmatprep.mubr.f32.mxu0 0.0
  %2135 = vmatmul.mubr.f32.gmra.mrb[0].mxu0 %v1849
  %v2136 = vpop.f32.mrb[0].mxu0
  %v2137 = vadd.f32 0.0, %v2136
  %v2138 = vpop.f32.mrb[0].mxu0
  %2139 = vmatprep.mubr.f32.mxu0 0.0
  %2140 = vmatmul.mubr.f32.gmra.mrb[0].mxu0 %v1852
  %v2141 = vpop.f32.mrb[0].mxu0
  %v2142 = vadd.f32 0.0, %v2141
  %v2143 = vpop.f32.mrb[0].mxu0
  %2144 = vmatprep.mubr.f32.mxu0 0.0
  %2145 = vmatmul.mubr.f32.gmra.mrb[0].mxu0 %v1855
  %v2146 = vpop.f32.mrb[0].mxu0
  %v2147 = vadd.f32 0.0, %v2146
  %v2148 = vpop.f32.mrb[0].mxu0
  %2149 = vmatprep.mubr.f32.mxu0 0.0
  %2150 = vmatmul.mubr.f32.gmra.mrb[0].mxu0 %v1858
  %v2151 = vpop.f32.mrb[0].mxu0
  %v2152 = vadd.f32 0.0, %v2151
  %v2153 = vpop.f32.mrb[0].mxu0
  %2154 = vmatprep.mubr.f32.mxu0 0.0
  %2155 = vmatmul.mubr.f32.gmra.mrb[0].mxu0 %v1861
  %v2156 = vpop.f32.mrb[0].mxu0
  %v2157 = vadd.f32 0.0, %v2156
  %v2158 = vpop.f32.mrb[0].mxu0
  %2159 = vmatprep.mubr.f32.mxu0 0.0
  %2160 = vmatmul.mubr.f32.gmra.mrb[0].mxu0 %v1864
  %v2161 = vpop.f32.mrb[0].mxu0
  %v2162 = vadd.f32 0.0, %v2161
  %v2163 = vpop.f32.mrb[0].mxu0
  %2164 = vmatprep.mubr.f32.mxu0 0.0
  %2165 = vmatmul.mubr.f32.gmra.mrb[0].mxu0 %v1867
  %v2166 = vpop.f32.mrb[0].mxu0
  %v2167 = vadd.f32 0.0, %v2166
  %v2168 = vpop.f32.mrb[0].mxu0
  %2169 = vmatprep.mubr.f32.mxu0 0.0
  %2170 = vmatmul.mubr.f32.gmra.mrb[0].mxu0 %v1870
  %v2171 = vpop.f32.mrb[0].mxu0
  %v2172 = vadd.f32 0.0, %v2171
  %v2173 = vpop.f32.mrb[0].mxu0
  %2174 = vmatprep.mubr.f32.mxu0 0.0
  %2175 = vmatmul.mubr.f32.gmra.mrb[0].mxu0 %v1873
  %v2176 = vpop.f32.mrb[0].mxu0
  %v2177 = vadd.f32 0.0, %v2176
  %v2178 = vpop.f32.mrb[0].mxu0
  %2179 = vmatprep.mubr.f32.mxu0 0.0
  %2180 = vmatmul.mubr.f32.gmra.mrb[0].mxu0 %v1876
  %v2181 = vpop.f32.mrb[0].mxu0
  %v2182 = vadd.f32 0.0, %v2181
  %v2183 = vpop.f32.mrb[0].mxu0
  %2184 = vmatprep.mubr.f32.mxu0 0.0
  %2185 = vmatmul.mubr.f32.gmra.mrb[0].mxu0 %v1879
  %v2186 = vpop.f32.mrb[0].mxu0
  %v2187 = vadd.f32 0.0, %v2186
  %v2188 = vpop.f32.mrb[0].mxu0
  %2189 = vmatprep.mubr.f32.mxu0 0.0
  %2190 = vmatmul.mubr.f32.gmra.mrb[0].mxu0 %v1882
  %v2191 = vpop.f32.mrb[0].mxu0
  %v2192 = vadd.f32 0.0, %v2191
  %v2193 = vpop.f32.mrb[0].mxu0
  %2194 = vmatprep.mubr.f32.mxu0 0.0
  %2195 = vmatmul.mubr.f32.gmra.mrb[0].mxu0 %v1885
  %v2196 = vpop.f32.mrb[0].mxu0
  %v2197 = vadd.f32 0.0, %v2196
  %v2198 = vpop.f32.mrb[0].mxu0
  %2199 = vmatprep.mubr.f32.mxu0 0.0
  %2200 = vmatmul.mubr.f32.gmra.mrb[0].mxu0 %v1888
  %v2201 = vpop.f32.mrb[0].mxu0
  %v2202 = vadd.f32 0.0, %v2201
  %v2203 = vpop.f32.mrb[0].mxu0
  %2204 = vmatprep.mubr.f32.mxu0 0.0
  %2205 = vmatmul.mubr.f32.gmra.mrb[0].mxu0 %v1891
  %v2206 = vpop.f32.mrb[0].mxu0
  %v2207 = vadd.f32 0.0, %v2206
  %v2208 = vpop.f32.mrb[0].mxu0
  %2209 = vmatprep.mubr.f32.mxu0 0.0
  %2210 = vmatmul.mubr.f32.gmra.mrb[0].mxu0 %v1894
  %v2211 = vpop.f32.mrb[0].mxu0
  %v2212 = vadd.f32 0.0, %v2211
  %v2213 = vpop.f32.mrb[0].mxu0
  %2214 = vmatprep.mubr.f32.mxu0 0.0
  %2215 = vmatmul.mubr.f32.gmra.mrb[0].mxu0 %v1897
  %v2216 = vpop.f32.mrb[0].mxu0
  %v2217 = vadd.f32 0.0, %v2216
  %v2218 = vpop.f32.mrb[0].mxu0
  %2219 = vmatprep.mubr.f32.mxu0 0.0
  %2220 = vmatmul.mubr.f32.gmra.mrb[0].mxu0 %v1900
  %v2221 = vpop.f32.mrb[0].mxu0
  %v2222 = vadd.f32 0.0, %v2221
  %v2223 = vpop.f32.mrb[0].mxu0
  %2224 = vmatprep.mubr.f32.mxu0 0.0
  %2225 = vmatmul.mubr.f32.gmra.mrb[0].mxu0 %v1903
  %v2226 = vpop.f32.mrb[0].mxu0
  %v2227 = vadd.f32 0.0, %v2226
  %v2228 = vpop.f32.mrb[0].mxu0
  %2229 = vmatprep.mubr.f32.mxu0 0.0
  %2230 = vmatmul.mubr.f32.gmra.mrb[0].mxu0 %v1906
  %v2231 = vpop.f32.mrb[0].mxu0
  %v2232 = vadd.f32 0.0, %v2231
  %v2233 = vpop.f32.mrb[0].mxu0
  %2234 = vmatprep.mubr.f32.mxu0 0.0
  %2235 = vmatmul.mubr.f32.gmra.mrb[0].mxu0 %v1909
  %v2236 = vpop.f32.mrb[0].mxu0
  %v2237 = vadd.f32 0.0, %v2236
  %v2238 = vpop.f32.mrb[0].mxu0
  %2239 = vmatprep.mubr.f32.mxu0 0.0
  %2240 = vmatmul.mubr.f32.gmra.mrb[0].mxu0 %v1912
  %v2241 = vpop.f32.mrb[0].mxu0
  %v2242 = vadd.f32 0.0, %v2241
  %v2243 = vpop.f32.mrb[0].mxu0
  %2244 = vmatprep.mubr.f32.mxu0 0.0
  %2245 = vmatmul.mubr.f32.gmra.mrb[0].mxu0 %v1915
  %v2246 = vpop.f32.mrb[0].mxu0
  %v2247 = vadd.f32 0.0, %v2246
  %v2248 = vpop.f32.mrb[0].mxu0
  %2249 = vmatprep.mubr.f32.mxu0 0.0
  %2250 = vmatmul.mubr.f32.gmra.mrb[0].mxu0 %v1918
  %v2251 = vpop.f32.mrb[0].mxu0
  %v2252 = vadd.f32 0.0, %v2251
  %v2253 = vpop.f32.mrb[0].mxu0
  %2254 = vmatprep.mubr.f32.mxu0 0.0
  %2255 = vmatmul.mubr.f32.gmra.mrb[0].mxu0 %v1921
  %v2256 = vpop.f32.mrb[0].mxu0
  %v2257 = vadd.f32 0.0, %v2256
  %v2258 = vpop.f32.mrb[0].mxu0
  %2259 = vmatprep.mubr.f32.mxu0 0.0
  %2260 = vmatmul.mubr.f32.gmra.mrb[0].mxu0 %v1924
  %v2261 = vpop.f32.mrb[0].mxu0
  %v2262 = vadd.f32 0.0, %v2261
  %v2263 = vpop.f32.mrb[0].mxu0
  %2264 = vmatprep.mubr.f32.mxu0 0.0
  %2265 = vmatmul.mubr.f32.gmra.mrb[0].mxu0 %v1927
  %v2266 = vpop.f32.mrb[0].mxu0
  %v2267 = vadd.f32 0.0, %v2266
  %v2268 = vpop.f32.mrb[0].mxu0
  %2269 = vmatprep.mubr.f32.mxu0 0.0
  %2270 = vmatmul.mubr.f32.gmra.mrb[0].mxu0 %v1930
  %v2271 = vpop.f32.mrb[0].mxu0
  %v2272 = vadd.f32 0.0, %v2271
  %v2273 = vpop.f32.mrb[0].mxu0
  %2274 = vmatprep.mubr.f32.mxu0 0.0
  %2275 = vmatmul.mubr.f32.gmra.mrb[0].mxu0 %v1933
  %v2276 = vpop.f32.mrb[0].mxu0
  %v2277 = vadd.f32 0.0, %v2276
  %v2278 = vpop.f32.mrb[0].mxu0
  %2279 = vmatprep.mubr.f32.mxu0 0.0
  %2280 = vmatmul.mubr.f32.gmra.mrb[0].mxu0 %v1936
  %v2281 = vpop.f32.mrb[0].mxu0
  %v2282 = vadd.f32 0.0, %v2281
  %v2283 = vpop.f32.mrb[0].mxu0
  %2284 = vmatprep.mubr.f32.mxu0 0.0
  %2285 = vmatmul.mubr.f32.gmra.mrb[0].mxu0 %v1939
  %v2286 = vpop.f32.mrb[0].mxu0
  %v2287 = vadd.f32 0.0, %v2286
  %v2288 = vpop.f32.mrb[0].mxu0
  %2289 = vmatprep.mubr.f32.mxu0 0.0
  %2290 = vmatmul.mubr.f32.gmra.mrb[0].mxu0 %v1942
  %v2291 = vpop.f32.mrb[0].mxu0
  %v2292 = vadd.f32 0.0, %v2291
  %v2293 = vpop.f32.mrb[0].mxu0
  %2294 = vmatprep.mubr.f32.mxu0 0.0
  %2295 = vmatmul.mubr.f32.gmra.mrb[0].mxu0 %v1945
  %v2296 = vpop.f32.mrb[0].mxu0
  %v2297 = vadd.f32 0.0, %v2296
  %v2298 = vpop.f32.mrb[0].mxu0
  %2299 = vmatprep.mubr.f32.mxu0 0.0
  %2300 = vmatmul.mubr.f32.gmra.mrb[0].mxu0 %v1948
  %v2301 = vpop.f32.mrb[0].mxu0
  %v2302 = vadd.f32 0.0, %v2301
  %v2303 = vpop.f32.mrb[0].mxu0
  %2304 = vmatprep.mubr.f32.mxu0 0.0
  %2305 = vmatmul.mubr.f32.gmra.mrb[0].mxu0 %v1951
  %v2306 = vpop.f32.mrb[0].mxu0
  %v2307 = vadd.f32 0.0, %v2306
  %v2308 = vpop.f32.mrb[0].mxu0
  %2309 = vmatprep.mubr.f32.mxu0 0.0
  %2310 = vmatmul.mubr.f32.gmra.mrb[0].mxu0 %v1954
  %v2311 = vpop.f32.mrb[0].mxu0
  %v2312 = vadd.f32 0.0, %v2311
  %v2313 = vpop.f32.mrb[0].mxu0
  %2314 = vmatprep.mubr.f32.mxu0 0.0
  %2315 = vmatmul.mubr.f32.gmra.mrb[0].mxu0 %v1957
  %v2316 = vpop.f32.mrb[0].mxu0
  %v2317 = vadd.f32 0.0, %v2316
  %v2318 = vpop.f32.mrb[0].mxu0
  %2319 = vmatprep.mubr.f32.mxu0 0.0
  %2320 = vmatmul.mubr.f32.gmra.mrb[0].mxu0 %v1960
  %v2321 = vpop.f32.mrb[0].mxu0
  %v2322 = vadd.f32 0.0, %v2321
  %v2323 = vpop.f32.mrb[0].mxu0
  %2324 = vmatprep.mubr.f32.mxu0 0.0
  %2325 = vmatmul.mubr.f32.gmra.mrb[0].mxu0 %v1963
  %v2326 = vpop.f32.mrb[0].mxu0
  %v2327 = vadd.f32 0.0, %v2326
  %v2328 = vpop.f32.mrb[0].mxu0
  %2329 = vmatprep.mubr.f32.mxu0 0.0
  %2330 = vmatmul.mubr.f32.gmra.mrb[0].mxu0 %v1966
  %v2331 = vpop.f32.mrb[0].mxu0
  %v2332 = vadd.f32 0.0, %v2331
  %v2333 = vpop.f32.mrb[0].mxu0
  %2334 = vmatprep.mubr.f32.mxu0 0.0
  %2335 = vmatmul.mubr.f32.gmra.mrb[0].mxu0 %v1969
  %v2336 = vpop.f32.mrb[0].mxu0
  %v2337 = vadd.f32 0.0, %v2336
  %v2338 = vpop.f32.mrb[0].mxu0
  %2339 = vmatprep.mubr.f32.mxu0 0.0
  %2340 = vmatmul.mubr.f32.gmra.mrb[0].mxu0 %v1972
  %v2341 = vpop.f32.mrb[0].mxu0
  %v2342 = vadd.f32 0.0, %v2341
  %v2343 = vpop.f32.mrb[0].mxu0
  %2344 = vmatprep.mubr.f32.mxu0 0.0
  %2345 = vmatmul.mubr.f32.gmra.mrb[0].mxu0 %v1975
  %v2346 = vpop.f32.mrb[0].mxu0
  %v2347 = vadd.f32 0.0, %v2346
  %v2348 = vpop.f32.mrb[0].mxu0
  %2349 = vmatprep.mubr.f32.mxu0 0.0
  %2350 = vmatmul.mubr.f32.gmra.mrb[0].mxu0 %v1978
  %v2351 = vpop.f32.mrb[0].mxu0
  %v2352 = vadd.f32 0.0, %v2351
  %v2353 = vpop.f32.mrb[0].mxu0
  %2354 = vmatprep.mubr.f32.mxu0 0.0
  %2355 = vmatmul.mubr.f32.gmra.mrb[0].mxu0 %v1981
  %v2356 = vpop.f32.mrb[0].mxu0
  %v2357 = vadd.f32 0.0, %v2356
  %v2358 = vpop.f32.mrb[0].mxu0
  %2359 = vmatprep.mubr.f32.mxu0 0.0
  %2360 = vmatmul.mubr.f32.gmra.mrb[0].mxu0 %v1984
  %v2361 = vpop.f32.mrb[0].mxu0
  %v2362 = vadd.f32 0.0, %v2361
  %v2363 = vpop.f32.mrb[0].mxu0
  %2364 = vmatprep.mubr.f32.mxu0 0.0
  %2365 = vmatmul.mubr.f32.gmra.mrb[0].mxu0 %v1987
  %v2366 = vpop.f32.mrb[0].mxu0
  %v2367 = vadd.f32 0.0, %v2366
  %v2368 = vpop.f32.mrb[0].mxu0
  %2369 = vmatprep.mubr.f32.mxu0 0.0
  %2370 = vmatmul.mubr.f32.gmra.mrb[0].mxu0 %v1990
  %v2371 = vpop.f32.mrb[0].mxu0
  %v2372 = vadd.f32 0.0, %v2371
  %v2373 = vpop.f32.mrb[0].mxu0
  %2374 = vmatprep.mubr.f32.mxu0 0.0
  %2375 = vmatmul.mubr.f32.gmra.mrb[0].mxu0 %v1993
  %v2376 = vpop.f32.mrb[0].mxu0
  %v2377 = vadd.f32 0.0, %v2376
  %v2378 = vpop.f32.mrb[0].mxu0
  %2379 = vdwg.mxu0
  %v2380 = vmul.f32 %v2062, %v461
  %v2381 = vmul.f32 %v2067, %v461
  %v2382 = vmul.f32 %v2072, %v461
  %v2383 = vmul.f32 %v2077, %v461
  %v2384 = vmul.f32 %v2082, %v461
  %v2385 = vmul.f32 %v2087, %v461
  %v2386 = vmul.f32 %v2092, %v461
  %v2387 = vmul.f32 %v2097, %v461
  %v2388 = vadd.f32 %v2380, 0.0
  %v2389 = vadd.f32 %v2381, 0.0
  %v2390 = vadd.f32 %v2382, 0.0
  %v2391 = vadd.f32 %v2383, 0.0
  %v2392 = vadd.f32 %v2384, 0.0
  %v2393 = vadd.f32 %v2385, 0.0
  %v2394 = vadd.f32 %v2386, 0.0
  %v2395 = vadd.f32 %v2387, 0.0
  %v2396 = vmul.f32 %v2102, %v466
  %v2397 = vmul.f32 %v2107, %v466
  %v2398 = vmul.f32 %v2112, %v466
  %v2399 = vmul.f32 %v2117, %v466
  %v2400 = vmul.f32 %v2122, %v466
  %v2401 = vmul.f32 %v2127, %v466
  %v2402 = vmul.f32 %v2132, %v466
  %v2403 = vmul.f32 %v2137, %v466
  %v2404 = vadd.f32 %v2388, %v2396
  %v2405 = vadd.f32 %v2389, %v2397
  %v2406 = vadd.f32 %v2390, %v2398
  %v2407 = vadd.f32 %v2391, %v2399
  %v2408 = vadd.f32 %v2392, %v2400
  %v2409 = vadd.f32 %v2393, %v2401
  %v2410 = vadd.f32 %v2394, %v2402
  %v2411 = vadd.f32 %v2395, %v2403
  %v2412 = vmul.f32 %v2142, %v471
  %v2413 = vmul.f32 %v2147, %v471
  %v2414 = vmul.f32 %v2152, %v471
  %v2415 = vmul.f32 %v2157, %v471
  %v2416 = vmul.f32 %v2162, %v471
  %v2417 = vmul.f32 %v2167, %v471
  %v2418 = vmul.f32 %v2172, %v471
  %v2419 = vmul.f32 %v2177, %v471
  %v2420 = vadd.f32 %v2404, %v2412
  %v2421 = vadd.f32 %v2405, %v2413
  %v2422 = vadd.f32 %v2406, %v2414
  %v2423 = vadd.f32 %v2407, %v2415
  %v2424 = vadd.f32 %v2408, %v2416
  %v2425 = vadd.f32 %v2409, %v2417
  %v2426 = vadd.f32 %v2410, %v2418
  %v2427 = vadd.f32 %v2411, %v2419
  %v2428 = vmul.f32 %v2182, %v476
  %v2429 = vmul.f32 %v2187, %v476
  %v2430 = vmul.f32 %v2192, %v476
  %v2431 = vmul.f32 %v2197, %v476
  %v2432 = vmul.f32 %v2202, %v476
  %v2433 = vmul.f32 %v2207, %v476
  %v2434 = vmul.f32 %v2212, %v476
  %v2435 = vmul.f32 %v2217, %v476
  %v2436 = vadd.f32 %v2420, %v2428
  %v2437 = vadd.f32 %v2421, %v2429
  %v2438 = vadd.f32 %v2422, %v2430
  %v2439 = vadd.f32 %v2423, %v2431
  %v2440 = vadd.f32 %v2424, %v2432
  %v2441 = vadd.f32 %v2425, %v2433
  %v2442 = vadd.f32 %v2426, %v2434
  %v2443 = vadd.f32 %v2427, %v2435
  %v2444 = vmul.f32 %v2222, %v481
  %v2445 = vmul.f32 %v2227, %v481
  %v2446 = vmul.f32 %v2232, %v481
  %v2447 = vmul.f32 %v2237, %v481
  %v2448 = vmul.f32 %v2242, %v481
  %v2449 = vmul.f32 %v2247, %v481
  %v2450 = vmul.f32 %v2252, %v481
  %v2451 = vmul.f32 %v2257, %v481
  %v2452 = vadd.f32 %v2436, %v2444
  %v2453 = vadd.f32 %v2437, %v2445
  %v2454 = vadd.f32 %v2438, %v2446
  %v2455 = vadd.f32 %v2439, %v2447
  %v2456 = vadd.f32 %v2440, %v2448
  %v2457 = vadd.f32 %v2441, %v2449
  %v2458 = vadd.f32 %v2442, %v2450
  %v2459 = vadd.f32 %v2443, %v2451
  %v2460 = vmul.f32 %v2262, %v486
  %v2461 = vmul.f32 %v2267, %v486
  %v2462 = vmul.f32 %v2272, %v486
  %v2463 = vmul.f32 %v2277, %v486
  %v2464 = vmul.f32 %v2282, %v486
  %v2465 = vmul.f32 %v2287, %v486
  %v2466 = vmul.f32 %v2292, %v486
  %v2467 = vmul.f32 %v2297, %v486
  %v2468 = vadd.f32 %v2452, %v2460
  %v2469 = vadd.f32 %v2453, %v2461
  %v2470 = vadd.f32 %v2454, %v2462
  %v2471 = vadd.f32 %v2455, %v2463
  %v2472 = vadd.f32 %v2456, %v2464
  %v2473 = vadd.f32 %v2457, %v2465
  %v2474 = vadd.f32 %v2458, %v2466
  %v2475 = vadd.f32 %v2459, %v2467
  %v2476 = vmul.f32 %v2302, %v491
  %v2477 = vmul.f32 %v2307, %v491
  %v2478 = vmul.f32 %v2312, %v491
  %v2479 = vmul.f32 %v2317, %v491
  %v2480 = vmul.f32 %v2322, %v491
  %v2481 = vmul.f32 %v2327, %v491
  %v2482 = vmul.f32 %v2332, %v491
  %v2483 = vmul.f32 %v2337, %v491
  %v2484 = vadd.f32 %v2468, %v2476
  %v2485 = vadd.f32 %v2469, %v2477
  %v2486 = vadd.f32 %v2470, %v2478
  %v2487 = vadd.f32 %v2471, %v2479
  %v2488 = vadd.f32 %v2472, %v2480
  %v2489 = vadd.f32 %v2473, %v2481
  %v2490 = vadd.f32 %v2474, %v2482
  %v2491 = vadd.f32 %v2475, %v2483
  %v2492 = vmul.f32 %v2342, %v496
  %v2493 = vmul.f32 %v2347, %v496
  %v2494 = vmul.f32 %v2352, %v496
  %v2495 = vmul.f32 %v2357, %v496
  %v2496 = vmul.f32 %v2362, %v496
  %v2497 = vmul.f32 %v2367, %v496
  %v2498 = vmul.f32 %v2372, %v496
  %v2499 = vmul.f32 %v2377, %v496
  %v2500 = vadd.f32 %v2484, %v2492
  %v2501 = vadd.f32 %v2485, %v2493
  %v2502 = vadd.f32 %v2486, %v2494
  %v2503 = vadd.f32 %v2487, %v2495
  %v2504 = vadd.f32 %v2488, %v2496
  %v2505 = vadd.f32 %v2489, %v2497
  %v2506 = vadd.f32 %v2490, %v2498
  %v2507 = vadd.f32 %v2491, %v2499
  %v2509 = vsel %vm116, %v272, 0
  %v2512 = vsel %vm116, %v277, 0
  %v2515 = vsel %vm116, %v282, 0
  %v2518 = vsel %vm116, %v287, 0
  %v2521 = vsel %vm116, %v292, 0
  %v2524 = vsel %vm116, %v297, 0
  %v2527 = vsel %vm116, %v302, 0
  %v2530 = vsel %vm116, %v307, 0
  %2532 = vmatprep.subr.mxu0 0.0
  %2533 = vmatpush1.xpose.msra.mxu0 %v2509
  %2534 = vmatprep.subr.mxu0 0.0
  %2535 = vmatpush1.xpose.msra.mxu0 %v2512
  %2536 = vmatprep.subr.mxu0 0.0
  %2537 = vmatpush1.xpose.msra.mxu0 %v2515
  %2538 = vmatprep.subr.mxu0 0.0
  %2539 = vmatpush1.xpose.msra.mxu0 %v2518
  %2540 = vmatprep.subr.mxu0 0.0
  %2541 = vmatpush1.xpose.msra.mxu0 %v2521
  %2542 = vmatprep.subr.mxu0 0.0
  %2543 = vmatpush1.xpose.msra.mxu0 %v2524
  %2544 = vmatprep.subr.mxu0 0.0
  %2545 = vmatpush1.xpose.msra.mxu0 %v2527
  %2546 = vmatprep.subr.mxu0 0.0
  %2547 = vmatpush1.xpose.msra.mxu0 %v2530
  %2548 = vmatprep.subr.mxu0 0.0
  %2549 = vmatpush1.xpose.msra.mxu0 0.0
  %2550 = vmatprep.subr.mxu0 0.0
  %2551 = vmatpush1.xpose.msra.mxu0 0.0
  %2552 = vmatprep.subr.mxu0 0.0
  %2553 = vmatpush1.xpose.msra.mxu0 0.0
  %2554 = vmatprep.subr.mxu0 0.0
  %2555 = vmatpush1.xpose.msra.mxu0 0.0
  %2556 = vmatprep.subr.mxu0 0.0
  %2557 = vmatpush1.xpose.msra.mxu0 0.0
  %2558 = vmatprep.subr.mxu0 0.0
  %2559 = vmatpush1.xpose.msra.mxu0 0.0
  %2560 = vmatprep.subr.mxu0 0.0
  %2561 = vmatpush1.xpose.msra.mxu0 0.0
  %2562 = vmatprep.subr.mxu0 0.0
  %2563 = vmatpush1.xpose.msra.mxu0 0.0
  %2564 = vmatprep.subr.mxu0 0.0
  %2565 = vmatpush1.xpose.msra.mxu0 0.0
  %2566 = vmatprep.subr.mxu0 0.0
  %2567 = vmatpush1.xpose.msra.mxu0 0.0
  %2568 = vmatprep.subr.mxu0 0.0
  %2569 = vmatpush1.xpose.msra.mxu0 0.0
  %2570 = vmatprep.subr.mxu0 0.0
  %2571 = vmatpush1.xpose.msra.mxu0 0.0
  %2572 = vmatprep.subr.mxu0 0.0
  %2573 = vmatpush1.xpose.msra.mxu0 0.0
  %2574 = vmatprep.subr.mxu0 0.0
  %2575 = vmatpush1.xpose.msra.mxu0 0.0
  %2576 = vmatprep.subr.mxu0 0.0
  %2577 = vmatpush1.xpose.msra.mxu0 0.0
  %2578 = vmatprep.subr.mxu0 0.0
  %2579 = vmatpush1.xpose.msra.mxu0 0.0
  %2580 = vmatprep.subr.mxu0 0.0
  %2581 = vmatpush1.xpose.msra.mxu0 0.0
  %2582 = vmatprep.subr.mxu0 0.0
  %2583 = vmatpush1.xpose.msra.mxu0 0.0
  %2584 = vmatprep.subr.mxu0 0.0
  %2585 = vmatpush1.xpose.msra.mxu0 0.0
  %2586 = vmatprep.subr.mxu0 0.0
  %2587 = vmatpush1.xpose.msra.mxu0 0.0
  %2588 = vmatprep.subr.mxu0 0.0
  %2589 = vmatpush1.xpose.msra.mxu0 0.0
  %2590 = vmatprep.subr.mxu0 0.0
  %2591 = vmatpush1.xpose.msra.mxu0 0.0
  %2592 = vmatprep.subr.mxu0 0.0
  %2593 = vmatpush1.xpose.msra.mxu0 0.0
  %2594 = vmatprep.subr.mxu0 0.0
  %2595 = vmatpush1.xpose.msra.mxu0 0.0
  %2596 = vmatprep.mubr.f32.mxu0 0.0
  %2597 = vmatmul.mubr.f32.gmra.mrb[0].mxu0 %v498
  %v2598 = vpop.f32.mrb[0].mxu0
  %v2599 = vadd.f32 0.0, %v2598
  %v2600 = vpop.f32.mrb[0].mxu0
  %2601 = vmatprep.mubr.f32.mxu0 0.0
  %2602 = vmatmul.mubr.f32.gmra.mrb[0].mxu0 %v501
  %v2603 = vpop.f32.mrb[0].mxu0
  %v2604 = vadd.f32 0.0, %v2603
  %v2605 = vpop.f32.mrb[0].mxu0
  %2606 = vmatprep.mubr.f32.mxu0 0.0
  %2607 = vmatmul.mubr.f32.gmra.mrb[0].mxu0 %v504
  %v2608 = vpop.f32.mrb[0].mxu0
  %v2609 = vadd.f32 0.0, %v2608
  %v2610 = vpop.f32.mrb[0].mxu0
  %2611 = vmatprep.mubr.f32.mxu0 0.0
  %2612 = vmatmul.mubr.f32.gmra.mrb[0].mxu0 %v507
  %v2613 = vpop.f32.mrb[0].mxu0
  %v2614 = vadd.f32 0.0, %v2613
  %v2615 = vpop.f32.mrb[0].mxu0
  %2616 = vmatprep.mubr.f32.mxu0 0.0
  %2617 = vmatmul.mubr.f32.gmra.mrb[0].mxu0 %v510
  %v2618 = vpop.f32.mrb[0].mxu0
  %v2619 = vadd.f32 0.0, %v2618
  %v2620 = vpop.f32.mrb[0].mxu0
  %2621 = vmatprep.mubr.f32.mxu0 0.0
  %2622 = vmatmul.mubr.f32.gmra.mrb[0].mxu0 %v513
  %v2623 = vpop.f32.mrb[0].mxu0
  %v2624 = vadd.f32 0.0, %v2623
  %v2625 = vpop.f32.mrb[0].mxu0
  %2626 = vmatprep.mubr.f32.mxu0 0.0
  %2627 = vmatmul.mubr.f32.gmra.mrb[0].mxu0 %v516
  %v2628 = vpop.f32.mrb[0].mxu0
  %v2629 = vadd.f32 0.0, %v2628
  %v2630 = vpop.f32.mrb[0].mxu0
  %2631 = vmatprep.mubr.f32.mxu0 0.0
  %2632 = vmatmul.mubr.f32.gmra.mrb[0].mxu0 %v519
  %v2633 = vpop.f32.mrb[0].mxu0
  %v2634 = vadd.f32 0.0, %v2633
  %v2635 = vpop.f32.mrb[0].mxu0
  %2636 = vmatprep.mubr.f32.mxu0 0.0
  %2637 = vmatmul.mubr.f32.gmra.mrb[0].mxu0 %v522
  %v2638 = vpop.f32.mrb[0].mxu0
  %v2639 = vadd.f32 0.0, %v2638
  %v2640 = vpop.f32.mrb[0].mxu0
  %2641 = vmatprep.mubr.f32.mxu0 0.0
  %2642 = vmatmul.mubr.f32.gmra.mrb[0].mxu0 %v525
  %v2643 = vpop.f32.mrb[0].mxu0
  %v2644 = vadd.f32 0.0, %v2643
  %v2645 = vpop.f32.mrb[0].mxu0
  %2646 = vmatprep.mubr.f32.mxu0 0.0
  %2647 = vmatmul.mubr.f32.gmra.mrb[0].mxu0 %v528
  %v2648 = vpop.f32.mrb[0].mxu0
  %v2649 = vadd.f32 0.0, %v2648
  %v2650 = vpop.f32.mrb[0].mxu0
  %2651 = vmatprep.mubr.f32.mxu0 0.0
  %2652 = vmatmul.mubr.f32.gmra.mrb[0].mxu0 %v531
  %v2653 = vpop.f32.mrb[0].mxu0
  %v2654 = vadd.f32 0.0, %v2653
  %v2655 = vpop.f32.mrb[0].mxu0
  %2656 = vmatprep.mubr.f32.mxu0 0.0
  %2657 = vmatmul.mubr.f32.gmra.mrb[0].mxu0 %v534
  %v2658 = vpop.f32.mrb[0].mxu0
  %v2659 = vadd.f32 0.0, %v2658
  %v2660 = vpop.f32.mrb[0].mxu0
  %2661 = vmatprep.mubr.f32.mxu0 0.0
  %2662 = vmatmul.mubr.f32.gmra.mrb[0].mxu0 %v537
  %v2663 = vpop.f32.mrb[0].mxu0
  %v2664 = vadd.f32 0.0, %v2663
  %v2665 = vpop.f32.mrb[0].mxu0
  %2666 = vmatprep.mubr.f32.mxu0 0.0
  %2667 = vmatmul.mubr.f32.gmra.mrb[0].mxu0 %v540
  %v2668 = vpop.f32.mrb[0].mxu0
  %v2669 = vadd.f32 0.0, %v2668
  %v2670 = vpop.f32.mrb[0].mxu0
  %2671 = vmatprep.mubr.f32.mxu0 0.0
  %2672 = vmatmul.mubr.f32.gmra.mrb[0].mxu0 %v543
  %v2673 = vpop.f32.mrb[0].mxu0
  %v2674 = vadd.f32 0.0, %v2673
  %v2675 = vpop.f32.mrb[0].mxu0
  %2676 = vmatprep.mubr.f32.mxu0 0.0
  %2677 = vmatmul.mubr.f32.gmra.mrb[0].mxu0 %v546
  %v2678 = vpop.f32.mrb[0].mxu0
  %v2679 = vadd.f32 0.0, %v2678
  %v2680 = vpop.f32.mrb[0].mxu0
  %2681 = vmatprep.mubr.f32.mxu0 0.0
  %2682 = vmatmul.mubr.f32.gmra.mrb[0].mxu0 %v549
  %v2683 = vpop.f32.mrb[0].mxu0
  %v2684 = vadd.f32 0.0, %v2683
  %v2685 = vpop.f32.mrb[0].mxu0
  %2686 = vmatprep.mubr.f32.mxu0 0.0
  %2687 = vmatmul.mubr.f32.gmra.mrb[0].mxu0 %v552
  %v2688 = vpop.f32.mrb[0].mxu0
  %v2689 = vadd.f32 0.0, %v2688
  %v2690 = vpop.f32.mrb[0].mxu0
  %2691 = vmatprep.mubr.f32.mxu0 0.0
  %2692 = vmatmul.mubr.f32.gmra.mrb[0].mxu0 %v555
  %v2693 = vpop.f32.mrb[0].mxu0
  %v2694 = vadd.f32 0.0, %v2693
  %v2695 = vpop.f32.mrb[0].mxu0
  %2696 = vmatprep.mubr.f32.mxu0 0.0
  %2697 = vmatmul.mubr.f32.gmra.mrb[0].mxu0 %v558
  %v2698 = vpop.f32.mrb[0].mxu0
  %v2699 = vadd.f32 0.0, %v2698
  %v2700 = vpop.f32.mrb[0].mxu0
  %2701 = vmatprep.mubr.f32.mxu0 0.0
  %2702 = vmatmul.mubr.f32.gmra.mrb[0].mxu0 %v561
  %v2703 = vpop.f32.mrb[0].mxu0
  %v2704 = vadd.f32 0.0, %v2703
  %v2705 = vpop.f32.mrb[0].mxu0
  %2706 = vmatprep.mubr.f32.mxu0 0.0
  %2707 = vmatmul.mubr.f32.gmra.mrb[0].mxu0 %v564
  %v2708 = vpop.f32.mrb[0].mxu0
  %v2709 = vadd.f32 0.0, %v2708
  %v2710 = vpop.f32.mrb[0].mxu0
  %2711 = vmatprep.mubr.f32.mxu0 0.0
  %2712 = vmatmul.mubr.f32.gmra.mrb[0].mxu0 %v567
  %v2713 = vpop.f32.mrb[0].mxu0
  %v2714 = vadd.f32 0.0, %v2713
  %v2715 = vpop.f32.mrb[0].mxu0
  %2716 = vmatprep.mubr.f32.mxu0 0.0
  %2717 = vmatmul.mubr.f32.gmra.mrb[0].mxu0 %v570
  %v2718 = vpop.f32.mrb[0].mxu0
  %v2719 = vadd.f32 0.0, %v2718
  %v2720 = vpop.f32.mrb[0].mxu0
  %2721 = vmatprep.mubr.f32.mxu0 0.0
  %2722 = vmatmul.mubr.f32.gmra.mrb[0].mxu0 %v573
  %v2723 = vpop.f32.mrb[0].mxu0
  %v2724 = vadd.f32 0.0, %v2723
  %v2725 = vpop.f32.mrb[0].mxu0
  %2726 = vmatprep.mubr.f32.mxu0 0.0
  %2727 = vmatmul.mubr.f32.gmra.mrb[0].mxu0 %v576
  %v2728 = vpop.f32.mrb[0].mxu0
  %v2729 = vadd.f32 0.0, %v2728
  %v2730 = vpop.f32.mrb[0].mxu0
  %2731 = vmatprep.mubr.f32.mxu0 0.0
  %2732 = vmatmul.mubr.f32.gmra.mrb[0].mxu0 %v579
  %v2733 = vpop.f32.mrb[0].mxu0
  %v2734 = vadd.f32 0.0, %v2733
  %v2735 = vpop.f32.mrb[0].mxu0
  %2736 = vmatprep.mubr.f32.mxu0 0.0
  %2737 = vmatmul.mubr.f32.gmra.mrb[0].mxu0 %v582
  %v2738 = vpop.f32.mrb[0].mxu0
  %v2739 = vadd.f32 0.0, %v2738
  %v2740 = vpop.f32.mrb[0].mxu0
  %2741 = vmatprep.mubr.f32.mxu0 0.0
  %2742 = vmatmul.mubr.f32.gmra.mrb[0].mxu0 %v585
  %v2743 = vpop.f32.mrb[0].mxu0
  %v2744 = vadd.f32 0.0, %v2743
  %v2745 = vpop.f32.mrb[0].mxu0
  %2746 = vmatprep.mubr.f32.mxu0 0.0
  %2747 = vmatmul.mubr.f32.gmra.mrb[0].mxu0 %v588
  %v2748 = vpop.f32.mrb[0].mxu0
  %v2749 = vadd.f32 0.0, %v2748
  %v2750 = vpop.f32.mrb[0].mxu0
  %2751 = vmatprep.mubr.f32.mxu0 0.0
  %2752 = vmatmul.mubr.f32.gmra.mrb[0].mxu0 %v591
  %v2753 = vpop.f32.mrb[0].mxu0
  %v2754 = vadd.f32 0.0, %v2753
  %v2755 = vpop.f32.mrb[0].mxu0
  %2756 = vmatprep.mubr.f32.mxu0 0.0
  %2757 = vmatmul.mubr.f32.gmra.mrb[0].mxu0 %v594
  %v2758 = vpop.f32.mrb[0].mxu0
  %v2759 = vadd.f32 0.0, %v2758
  %v2760 = vpop.f32.mrb[0].mxu0
  %2761 = vmatprep.mubr.f32.mxu0 0.0
  %2762 = vmatmul.mubr.f32.gmra.mrb[0].mxu0 %v597
  %v2763 = vpop.f32.mrb[0].mxu0
  %v2764 = vadd.f32 0.0, %v2763
  %v2765 = vpop.f32.mrb[0].mxu0
  %2766 = vmatprep.mubr.f32.mxu0 0.0
  %2767 = vmatmul.mubr.f32.gmra.mrb[0].mxu0 %v600
  %v2768 = vpop.f32.mrb[0].mxu0
  %v2769 = vadd.f32 0.0, %v2768
  %v2770 = vpop.f32.mrb[0].mxu0
  %2771 = vmatprep.mubr.f32.mxu0 0.0
  %2772 = vmatmul.mubr.f32.gmra.mrb[0].mxu0 %v603
  %v2773 = vpop.f32.mrb[0].mxu0
  %v2774 = vadd.f32 0.0, %v2773
  %v2775 = vpop.f32.mrb[0].mxu0
  %2776 = vmatprep.mubr.f32.mxu0 0.0
  %2777 = vmatmul.mubr.f32.gmra.mrb[0].mxu0 %v606
  %v2778 = vpop.f32.mrb[0].mxu0
  %v2779 = vadd.f32 0.0, %v2778
  %v2780 = vpop.f32.mrb[0].mxu0
  %2781 = vmatprep.mubr.f32.mxu0 0.0
  %2782 = vmatmul.mubr.f32.gmra.mrb[0].mxu0 %v609
  %v2783 = vpop.f32.mrb[0].mxu0
  %v2784 = vadd.f32 0.0, %v2783
  %v2785 = vpop.f32.mrb[0].mxu0
  %2786 = vmatprep.mubr.f32.mxu0 0.0
  %2787 = vmatmul.mubr.f32.gmra.mrb[0].mxu0 %v612
  %v2788 = vpop.f32.mrb[0].mxu0
  %v2789 = vadd.f32 0.0, %v2788
  %v2790 = vpop.f32.mrb[0].mxu0
  %2791 = vmatprep.mubr.f32.mxu0 0.0
  %2792 = vmatmul.mubr.f32.gmra.mrb[0].mxu0 %v615
  %v2793 = vpop.f32.mrb[0].mxu0
  %v2794 = vadd.f32 0.0, %v2793
  %v2795 = vpop.f32.mrb[0].mxu0
  %2796 = vmatprep.mubr.f32.mxu0 0.0
  %2797 = vmatmul.mubr.f32.gmra.mrb[0].mxu0 %v618
  %v2798 = vpop.f32.mrb[0].mxu0
  %v2799 = vadd.f32 0.0, %v2798
  %v2800 = vpop.f32.mrb[0].mxu0
  %2801 = vmatprep.mubr.f32.mxu0 0.0
  %2802 = vmatmul.mubr.f32.gmra.mrb[0].mxu0 %v621
  %v2803 = vpop.f32.mrb[0].mxu0
  %v2804 = vadd.f32 0.0, %v2803
  %v2805 = vpop.f32.mrb[0].mxu0
  %2806 = vmatprep.mubr.f32.mxu0 0.0
  %2807 = vmatmul.mubr.f32.gmra.mrb[0].mxu0 %v624
  %v2808 = vpop.f32.mrb[0].mxu0
  %v2809 = vadd.f32 0.0, %v2808
  %v2810 = vpop.f32.mrb[0].mxu0
  %2811 = vmatprep.mubr.f32.mxu0 0.0
  %2812 = vmatmul.mubr.f32.gmra.mrb[0].mxu0 %v627
  %v2813 = vpop.f32.mrb[0].mxu0
  %v2814 = vadd.f32 0.0, %v2813
  %v2815 = vpop.f32.mrb[0].mxu0
  %2816 = vmatprep.mubr.f32.mxu0 0.0
  %2817 = vmatmul.mubr.f32.gmra.mrb[0].mxu0 %v630
  %v2818 = vpop.f32.mrb[0].mxu0
  %v2819 = vadd.f32 0.0, %v2818
  %v2820 = vpop.f32.mrb[0].mxu0
  %2821 = vmatprep.mubr.f32.mxu0 0.0
  %2822 = vmatmul.mubr.f32.gmra.mrb[0].mxu0 %v633
  %v2823 = vpop.f32.mrb[0].mxu0
  %v2824 = vadd.f32 0.0, %v2823
  %v2825 = vpop.f32.mrb[0].mxu0
  %2826 = vmatprep.mubr.f32.mxu0 0.0
  %2827 = vmatmul.mubr.f32.gmra.mrb[0].mxu0 %v636
  %v2828 = vpop.f32.mrb[0].mxu0
  %v2829 = vadd.f32 0.0, %v2828
  %v2830 = vpop.f32.mrb[0].mxu0
  %2831 = vmatprep.mubr.f32.mxu0 0.0
  %2832 = vmatmul.mubr.f32.gmra.mrb[0].mxu0 %v639
  %v2833 = vpop.f32.mrb[0].mxu0
  %v2834 = vadd.f32 0.0, %v2833
  %v2835 = vpop.f32.mrb[0].mxu0
  %2836 = vmatprep.mubr.f32.mxu0 0.0
  %2837 = vmatmul.mubr.f32.gmra.mrb[0].mxu0 %v642
  %v2838 = vpop.f32.mrb[0].mxu0
  %v2839 = vadd.f32 0.0, %v2838
  %v2840 = vpop.f32.mrb[0].mxu0
  %2841 = vmatprep.mubr.f32.mxu0 0.0
  %2842 = vmatmul.mubr.f32.gmra.mrb[0].mxu0 %v645
  %v2843 = vpop.f32.mrb[0].mxu0
  %v2844 = vadd.f32 0.0, %v2843
  %v2845 = vpop.f32.mrb[0].mxu0
  %2846 = vmatprep.mubr.f32.mxu0 0.0
  %2847 = vmatmul.mubr.f32.gmra.mrb[0].mxu0 %v648
  %v2848 = vpop.f32.mrb[0].mxu0
  %v2849 = vadd.f32 0.0, %v2848
  %v2850 = vpop.f32.mrb[0].mxu0
  %2851 = vmatprep.mubr.f32.mxu0 0.0
  %2852 = vmatmul.mubr.f32.gmra.mrb[0].mxu0 %v651
  %v2853 = vpop.f32.mrb[0].mxu0
  %v2854 = vadd.f32 0.0, %v2853
  %v2855 = vpop.f32.mrb[0].mxu0
  %2856 = vmatprep.mubr.f32.mxu0 0.0
  %2857 = vmatmul.mubr.f32.gmra.mrb[0].mxu0 %v654
  %v2858 = vpop.f32.mrb[0].mxu0
  %v2859 = vadd.f32 0.0, %v2858
  %v2860 = vpop.f32.mrb[0].mxu0
  %2861 = vmatprep.mubr.f32.mxu0 0.0
  %2862 = vmatmul.mubr.f32.gmra.mrb[0].mxu0 %v657
  %v2863 = vpop.f32.mrb[0].mxu0
  %v2864 = vadd.f32 0.0, %v2863
  %v2865 = vpop.f32.mrb[0].mxu0
  %2866 = vmatprep.mubr.f32.mxu0 0.0
  %2867 = vmatmul.mubr.f32.gmra.mrb[0].mxu0 %v660
  %v2868 = vpop.f32.mrb[0].mxu0
  %v2869 = vadd.f32 0.0, %v2868
  %v2870 = vpop.f32.mrb[0].mxu0
  %2871 = vmatprep.mubr.f32.mxu0 0.0
  %2872 = vmatmul.mubr.f32.gmra.mrb[0].mxu0 %v663
  %v2873 = vpop.f32.mrb[0].mxu0
  %v2874 = vadd.f32 0.0, %v2873
  %v2875 = vpop.f32.mrb[0].mxu0
  %2876 = vmatprep.mubr.f32.mxu0 0.0
  %2877 = vmatmul.mubr.f32.gmra.mrb[0].mxu0 %v666
  %v2878 = vpop.f32.mrb[0].mxu0
  %v2879 = vadd.f32 0.0, %v2878
  %v2880 = vpop.f32.mrb[0].mxu0
  %2881 = vmatprep.mubr.f32.mxu0 0.0
  %2882 = vmatmul.mubr.f32.gmra.mrb[0].mxu0 %v669
  %v2883 = vpop.f32.mrb[0].mxu0
  %v2884 = vadd.f32 0.0, %v2883
  %v2885 = vpop.f32.mrb[0].mxu0
  %2886 = vmatprep.mubr.f32.mxu0 0.0
  %2887 = vmatmul.mubr.f32.gmra.mrb[0].mxu0 %v672
  %v2888 = vpop.f32.mrb[0].mxu0
  %v2889 = vadd.f32 0.0, %v2888
  %v2890 = vpop.f32.mrb[0].mxu0
  %2891 = vmatprep.mubr.f32.mxu0 0.0
  %2892 = vmatmul.mubr.f32.gmra.mrb[0].mxu0 %v675
  %v2893 = vpop.f32.mrb[0].mxu0
  %v2894 = vadd.f32 0.0, %v2893
  %v2895 = vpop.f32.mrb[0].mxu0
  %2896 = vmatprep.mubr.f32.mxu0 0.0
  %2897 = vmatmul.mubr.f32.gmra.mrb[0].mxu0 %v678
  %v2898 = vpop.f32.mrb[0].mxu0
  %v2899 = vadd.f32 0.0, %v2898
  %v2900 = vpop.f32.mrb[0].mxu0
  %2901 = vmatprep.mubr.f32.mxu0 0.0
  %2902 = vmatmul.mubr.f32.gmra.mrb[0].mxu0 %v681
  %v2903 = vpop.f32.mrb[0].mxu0
  %v2904 = vadd.f32 0.0, %v2903
  %v2905 = vpop.f32.mrb[0].mxu0
  %2906 = vmatprep.mubr.f32.mxu0 0.0
  %2907 = vmatmul.mubr.f32.gmra.mrb[0].mxu0 %v684
  %v2908 = vpop.f32.mrb[0].mxu0
  %v2909 = vadd.f32 0.0, %v2908
  %v2910 = vpop.f32.mrb[0].mxu0
  %2911 = vmatprep.mubr.f32.mxu0 0.0
  %2912 = vmatmul.mubr.f32.gmra.mrb[0].mxu0 %v687
  %v2913 = vpop.f32.mrb[0].mxu0
  %v2914 = vadd.f32 0.0, %v2913
  %v2915 = vpop.f32.mrb[0].mxu0
  %2916 = vdwg.mxu0
  %v2917 = vsel %vm1098, %v2599, -inf
  %2918 = vmax.xlane.f32.xlu0 %v2917
  %v2919 = vpop.xlane.xlu0 %2918
  %v2920 = vsel %vm1098, %v2604, -inf
  %2921 = vmax.xlane.f32.xlu0 %v2920
  %v2922 = vpop.xlane.xlu0 %2921
  %v2923 = vsel %vm1098, %v2609, -inf
  %2924 = vmax.xlane.f32.xlu0 %v2923
  %v2925 = vpop.xlane.xlu0 %2924
  %v2926 = vsel %vm1098, %v2614, -inf
  %2927 = vmax.xlane.f32.xlu0 %v2926
  %v2928 = vpop.xlane.xlu0 %2927
  %v2929 = vsel %vm1098, %v2619, -inf
  %2930 = vmax.xlane.f32.xlu0 %v2929
  %v2931 = vpop.xlane.xlu0 %2930
  %v2932 = vsel %vm1098, %v2624, -inf
  %2933 = vmax.xlane.f32.xlu0 %v2932
  %v2934 = vpop.xlane.xlu0 %2933
  %v2935 = vsel %vm1098, %v2629, -inf
  %2936 = vmax.xlane.f32.xlu0 %v2935
  %v2937 = vpop.xlane.xlu0 %2936
  %v2938 = vsel %vm1098, %v2634, -inf
  %2939 = vmax.xlane.f32.xlu0 %v2938
  %v2940 = vpop.xlane.xlu0 %2939
  %v2941 = vsel %vm1098, %v2639, -inf
  %2942 = vmax.xlane.f32.xlu0 %v2941
  %v2943 = vpop.xlane.xlu0 %2942
  %v2944 = vsel %vm1098, %v2644, -inf
  %2945 = vmax.xlane.f32.xlu0 %v2944
  %v2946 = vpop.xlane.xlu0 %2945
  %v2947 = vsel %vm1098, %v2649, -inf
  %2948 = vmax.xlane.f32.xlu0 %v2947
  %v2949 = vpop.xlane.xlu0 %2948
  %v2950 = vsel %vm1098, %v2654, -inf
  %2951 = vmax.xlane.f32.xlu0 %v2950
  %v2952 = vpop.xlane.xlu0 %2951
  %v2953 = vsel %vm1098, %v2659, -inf
  %2954 = vmax.xlane.f32.xlu0 %v2953
  %v2955 = vpop.xlane.xlu0 %2954
  %v2956 = vsel %vm1098, %v2664, -inf
  %2957 = vmax.xlane.f32.xlu0 %v2956
  %v2958 = vpop.xlane.xlu0 %2957
  %v2959 = vsel %vm1098, %v2669, -inf
  %2960 = vmax.xlane.f32.xlu0 %v2959
  %v2961 = vpop.xlane.xlu0 %2960
  %v2962 = vsel %vm1098, %v2674, -inf
  %2963 = vmax.xlane.f32.xlu0 %v2962
  %v2964 = vpop.xlane.xlu0 %2963
  %v2965 = vsel %vm1098, %v2679, -inf
  %2966 = vmax.xlane.f32.xlu0 %v2965
  %v2967 = vpop.xlane.xlu0 %2966
  %v2968 = vsel %vm1098, %v2684, -inf
  %2969 = vmax.xlane.f32.xlu0 %v2968
  %v2970 = vpop.xlane.xlu0 %2969
  %v2971 = vsel %vm1098, %v2689, -inf
  %2972 = vmax.xlane.f32.xlu0 %v2971
  %v2973 = vpop.xlane.xlu0 %2972
  %v2974 = vsel %vm1098, %v2694, -inf
  %2975 = vmax.xlane.f32.xlu0 %v2974
  %v2976 = vpop.xlane.xlu0 %2975
  %v2977 = vsel %vm1098, %v2699, -inf
  %2978 = vmax.xlane.f32.xlu0 %v2977
  %v2979 = vpop.xlane.xlu0 %2978
  %v2980 = vsel %vm1098, %v2704, -inf
  %2981 = vmax.xlane.f32.xlu0 %v2980
  %v2982 = vpop.xlane.xlu0 %2981
  %v2983 = vsel %vm1098, %v2709, -inf
  %2984 = vmax.xlane.f32.xlu0 %v2983
  %v2985 = vpop.xlane.xlu0 %2984
  %v2986 = vsel %vm1098, %v2714, -inf
  %2987 = vmax.xlane.f32.xlu0 %v2986
  %v2988 = vpop.xlane.xlu0 %2987
  %v2989 = vsel %vm1098, %v2719, -inf
  %2990 = vmax.xlane.f32.xlu0 %v2989
  %v2991 = vpop.xlane.xlu0 %2990
  %v2992 = vsel %vm1098, %v2724, -inf
  %2993 = vmax.xlane.f32.xlu0 %v2992
  %v2994 = vpop.xlane.xlu0 %2993
  %v2995 = vsel %vm1098, %v2729, -inf
  %2996 = vmax.xlane.f32.xlu0 %v2995
  %v2997 = vpop.xlane.xlu0 %2996
  %v2998 = vsel %vm1098, %v2734, -inf
  %2999 = vmax.xlane.f32.xlu0 %v2998
  %v3000 = vpop.xlane.xlu0 %2999
  %v3001 = vsel %vm1098, %v2739, -inf
  %3002 = vmax.xlane.f32.xlu0 %v3001
  %v3003 = vpop.xlane.xlu0 %3002
  %v3004 = vsel %vm1098, %v2744, -inf
  %3005 = vmax.xlane.f32.xlu0 %v3004
  %v3006 = vpop.xlane.xlu0 %3005
  %v3007 = vsel %vm1098, %v2749, -inf
  %3008 = vmax.xlane.f32.xlu0 %v3007
  %v3009 = vpop.xlane.xlu0 %3008
  %v3010 = vsel %vm1098, %v2754, -inf
  %3011 = vmax.xlane.f32.xlu0 %v3010
  %v3012 = vpop.xlane.xlu0 %3011
  %v3013 = vsel %vm1098, %v2759, -inf
  %3014 = vmax.xlane.f32.xlu0 %v3013
  %v3015 = vpop.xlane.xlu0 %3014
  %v3016 = vsel %vm1098, %v2764, -inf
  %3017 = vmax.xlane.f32.xlu0 %v3016
  %v3018 = vpop.xlane.xlu0 %3017
  %v3019 = vsel %vm1098, %v2769, -inf
  %3020 = vmax.xlane.f32.xlu0 %v3019
  %v3021 = vpop.xlane.xlu0 %3020
  %v3022 = vsel %vm1098, %v2774, -inf
  %3023 = vmax.xlane.f32.xlu0 %v3022
  %v3024 = vpop.xlane.xlu0 %3023
  %v3025 = vsel %vm1098, %v2779, -inf
  %3026 = vmax.xlane.f32.xlu0 %v3025
  %v3027 = vpop.xlane.xlu0 %3026
  %v3028 = vsel %vm1098, %v2784, -inf
  %3029 = vmax.xlane.f32.xlu0 %v3028
  %v3030 = vpop.xlane.xlu0 %3029
  %v3031 = vsel %vm1098, %v2789, -inf
  %3032 = vmax.xlane.f32.xlu0 %v3031
  %v3033 = vpop.xlane.xlu0 %3032
  %v3034 = vsel %vm1098, %v2794, -inf
  %3035 = vmax.xlane.f32.xlu0 %v3034
  %v3036 = vpop.xlane.xlu0 %3035
  %v3037 = vsel %vm1098, %v2799, -inf
  %3038 = vmax.xlane.f32.xlu0 %v3037
  %v3039 = vpop.xlane.xlu0 %3038
  %v3040 = vsel %vm1098, %v2804, -inf
  %3041 = vmax.xlane.f32.xlu0 %v3040
  %v3042 = vpop.xlane.xlu0 %3041
  %v3043 = vsel %vm1098, %v2809, -inf
  %3044 = vmax.xlane.f32.xlu0 %v3043
  %v3045 = vpop.xlane.xlu0 %3044
  %v3046 = vsel %vm1098, %v2814, -inf
  %3047 = vmax.xlane.f32.xlu0 %v3046
  %v3048 = vpop.xlane.xlu0 %3047
  %v3049 = vsel %vm1098, %v2819, -inf
  %3050 = vmax.xlane.f32.xlu0 %v3049
  %v3051 = vpop.xlane.xlu0 %3050
  %v3052 = vsel %vm1098, %v2824, -inf
  %3053 = vmax.xlane.f32.xlu0 %v3052
  %v3054 = vpop.xlane.xlu0 %3053
  %v3055 = vsel %vm1098, %v2829, -inf
  %3056 = vmax.xlane.f32.xlu0 %v3055
  %v3057 = vpop.xlane.xlu0 %3056
  %v3058 = vsel %vm1098, %v2834, -inf
  %3059 = vmax.xlane.f32.xlu0 %v3058
  %v3060 = vpop.xlane.xlu0 %3059
  %v3061 = vsel %vm1098, %v2839, -inf
  %3062 = vmax.xlane.f32.xlu0 %v3061
  %v3063 = vpop.xlane.xlu0 %3062
  %v3064 = vsel %vm1098, %v2844, -inf
  %3065 = vmax.xlane.f32.xlu0 %v3064
  %v3066 = vpop.xlane.xlu0 %3065
  %v3067 = vsel %vm1098, %v2849, -inf
  %3068 = vmax.xlane.f32.xlu0 %v3067
  %v3069 = vpop.xlane.xlu0 %3068
  %v3070 = vsel %vm1098, %v2854, -inf
  %3071 = vmax.xlane.f32.xlu0 %v3070
  %v3072 = vpop.xlane.xlu0 %3071
  %v3073 = vsel %vm1098, %v2859, -inf
  %3074 = vmax.xlane.f32.xlu0 %v3073
  %v3075 = vpop.xlane.xlu0 %3074
  %v3076 = vsel %vm1098, %v2864, -inf
  %3077 = vmax.xlane.f32.xlu0 %v3076
  %v3078 = vpop.xlane.xlu0 %3077
  %v3079 = vsel %vm1098, %v2869, -inf
  %3080 = vmax.xlane.f32.xlu0 %v3079
  %v3081 = vpop.xlane.xlu0 %3080
  %v3082 = vsel %vm1098, %v2874, -inf
  %3083 = vmax.xlane.f32.xlu0 %v3082
  %v3084 = vpop.xlane.xlu0 %3083
  %v3085 = vsel %vm1098, %v2879, -inf
  %3086 = vmax.xlane.f32.xlu0 %v3085
  %v3087 = vpop.xlane.xlu0 %3086
  %v3088 = vsel %vm1098, %v2884, -inf
  %3089 = vmax.xlane.f32.xlu0 %v3088
  %v3090 = vpop.xlane.xlu0 %3089
  %v3091 = vsel %vm1098, %v2889, -inf
  %3092 = vmax.xlane.f32.xlu0 %v3091
  %v3093 = vpop.xlane.xlu0 %3092
  %v3094 = vsel %vm1098, %v2894, -inf
  %3095 = vmax.xlane.f32.xlu0 %v3094
  %v3096 = vpop.xlane.xlu0 %3095
  %v3097 = vsel %vm1098, %v2899, -inf
  %3098 = vmax.xlane.f32.xlu0 %v3097
  %v3099 = vpop.xlane.xlu0 %3098
  %v3100 = vsel %vm1098, %v2904, -inf
  %3101 = vmax.xlane.f32.xlu0 %v3100
  %v3102 = vpop.xlane.xlu0 %3101
  %v3103 = vsel %vm1098, %v2909, -inf
  %3104 = vmax.xlane.f32.xlu0 %v3103
  %v3105 = vpop.xlane.xlu0 %3104
  %v3106 = vsel %vm1098, %v2914, -inf
  %3107 = vmax.xlane.f32.xlu0 %v3106
  %v3108 = vpop.xlane.xlu0 %3107
  %v3109 = vsub.f32 %v2599, %v2919
  %v3110 = vsub.f32 %v2604, %v2922
  %v3111 = vsub.f32 %v2609, %v2925
  %v3112 = vsub.f32 %v2614, %v2928
  %v3113 = vsub.f32 %v2619, %v2931
  %v3114 = vsub.f32 %v2624, %v2934
  %v3115 = vsub.f32 %v2629, %v2937
  %v3116 = vsub.f32 %v2634, %v2940
  %v3117 = vsub.f32 %v2639, %v2943
  %v3118 = vsub.f32 %v2644, %v2946
  %v3119 = vsub.f32 %v2649, %v2949
  %v3120 = vsub.f32 %v2654, %v2952
  %v3121 = vsub.f32 %v2659, %v2955
  %v3122 = vsub.f32 %v2664, %v2958
  %v3123 = vsub.f32 %v2669, %v2961
  %v3124 = vsub.f32 %v2674, %v2964
  %v3125 = vsub.f32 %v2679, %v2967
  %v3126 = vsub.f32 %v2684, %v2970
  %v3127 = vsub.f32 %v2689, %v2973
  %v3128 = vsub.f32 %v2694, %v2976
  %v3129 = vsub.f32 %v2699, %v2979
  %v3130 = vsub.f32 %v2704, %v2982
  %v3131 = vsub.f32 %v2709, %v2985
  %v3132 = vsub.f32 %v2714, %v2988
  %v3133 = vsub.f32 %v2719, %v2991
  %v3134 = vsub.f32 %v2724, %v2994
  %v3135 = vsub.f32 %v2729, %v2997
  %v3136 = vsub.f32 %v2734, %v3000
  %v3137 = vsub.f32 %v2739, %v3003
  %v3138 = vsub.f32 %v2744, %v3006
  %v3139 = vsub.f32 %v2749, %v3009
  %v3140 = vsub.f32 %v2754, %v3012
  %v3141 = vsub.f32 %v2759, %v3015
  %v3142 = vsub.f32 %v2764, %v3018
  %v3143 = vsub.f32 %v2769, %v3021
  %v3144 = vsub.f32 %v2774, %v3024
  %v3145 = vsub.f32 %v2779, %v3027
  %v3146 = vsub.f32 %v2784, %v3030
  %v3147 = vsub.f32 %v2789, %v3033
  %v3148 = vsub.f32 %v2794, %v3036
  %v3149 = vsub.f32 %v2799, %v3039
  %v3150 = vsub.f32 %v2804, %v3042
  %v3151 = vsub.f32 %v2809, %v3045
  %v3152 = vsub.f32 %v2814, %v3048
  %v3153 = vsub.f32 %v2819, %v3051
  %v3154 = vsub.f32 %v2824, %v3054
  %v3155 = vsub.f32 %v2829, %v3057
  %v3156 = vsub.f32 %v2834, %v3060
  %v3157 = vsub.f32 %v2839, %v3063
  %v3158 = vsub.f32 %v2844, %v3066
  %v3159 = vsub.f32 %v2849, %v3069
  %v3160 = vsub.f32 %v2854, %v3072
  %v3161 = vsub.f32 %v2859, %v3075
  %v3162 = vsub.f32 %v2864, %v3078
  %v3163 = vsub.f32 %v2869, %v3081
  %v3164 = vsub.f32 %v2874, %v3084
  %v3165 = vsub.f32 %v2879, %v3087
  %v3166 = vsub.f32 %v2884, %v3090
  %v3167 = vsub.f32 %v2889, %v3093
  %v3168 = vsub.f32 %v2894, %v3096
  %v3169 = vsub.f32 %v2899, %v3099
  %v3170 = vsub.f32 %v2904, %v3102
  %v3171 = vsub.f32 %v2909, %v3105
  %v3172 = vsub.f32 %v2914, %v3108
  %v3173 = vmul.f32 %v3109, 1.442695
  %v3174 = vpow.pop %v3173
  %v3175 = vmul.f32 %v3110, 1.442695
  %v3176 = vpow.pop %v3175
  %v3177 = vmul.f32 %v3111, 1.442695
  %v3178 = vpow.pop %v3177
  %v3179 = vmul.f32 %v3112, 1.442695
  %v3180 = vpow.pop %v3179
  %v3181 = vmul.f32 %v3113, 1.442695
  %v3182 = vpow.pop %v3181
  %v3183 = vmul.f32 %v3114, 1.442695
  %v3184 = vpow.pop %v3183
  %v3185 = vmul.f32 %v3115, 1.442695
  %v3186 = vpow.pop %v3185
  %v3187 = vmul.f32 %v3116, 1.442695
  %v3188 = vpow.pop %v3187
  %v3189 = vmul.f32 %v3117, 1.442695
  %v3190 = vpow.pop %v3189
  %v3191 = vmul.f32 %v3118, 1.442695
  %v3192 = vpow.pop %v3191
  %v3193 = vmul.f32 %v3119, 1.442695
  %v3194 = vpow.pop %v3193
  %v3195 = vmul.f32 %v3120, 1.442695
  %v3196 = vpow.pop %v3195
  %v3197 = vmul.f32 %v3121, 1.442695
  %v3198 = vpow.pop %v3197
  %v3199 = vmul.f32 %v3122, 1.442695
  %v3200 = vpow.pop %v3199
  %v3201 = vmul.f32 %v3123, 1.442695
  %v3202 = vpow.pop %v3201
  %v3203 = vmul.f32 %v3124, 1.442695
  %v3204 = vpow.pop %v3203
  %v3205 = vmul.f32 %v3125, 1.442695
  %v3206 = vpow.pop %v3205
  %v3207 = vmul.f32 %v3126, 1.442695
  %v3208 = vpow.pop %v3207
  %v3209 = vmul.f32 %v3127, 1.442695
  %v3210 = vpow.pop %v3209
  %v3211 = vmul.f32 %v3128, 1.442695
  %v3212 = vpow.pop %v3211
  %v3213 = vmul.f32 %v3129, 1.442695
  %v3214 = vpow.pop %v3213
  %v3215 = vmul.f32 %v3130, 1.442695
  %v3216 = vpow.pop %v3215
  %v3217 = vmul.f32 %v3131, 1.442695
  %v3218 = vpow.pop %v3217
  %v3219 = vmul.f32 %v3132, 1.442695
  %v3220 = vpow.pop %v3219
  %v3221 = vmul.f32 %v3133, 1.442695
  %v3222 = vpow.pop %v3221
  %v3223 = vmul.f32 %v3134, 1.442695
  %v3224 = vpow.pop %v3223
  %v3225 = vmul.f32 %v3135, 1.442695
  %v3226 = vpow.pop %v3225
  %v3227 = vmul.f32 %v3136, 1.442695
  %v3228 = vpow.pop %v3227
  %v3229 = vmul.f32 %v3137, 1.442695
  %v3230 = vpow.pop %v3229
  %v3231 = vmul.f32 %v3138, 1.442695
  %v3232 = vpow.pop %v3231
  %v3233 = vmul.f32 %v3139, 1.442695
  %v3234 = vpow.pop %v3233
  %v3235 = vmul.f32 %v3140, 1.442695
  %v3236 = vpow.pop %v3235
  %v3237 = vmul.f32 %v3141, 1.442695
  %v3238 = vpow.pop %v3237
  %v3239 = vmul.f32 %v3142, 1.442695
  %v3240 = vpow.pop %v3239
  %v3241 = vmul.f32 %v3143, 1.442695
  %v3242 = vpow.pop %v3241
  %v3243 = vmul.f32 %v3144, 1.442695
  %v3244 = vpow.pop %v3243
  %v3245 = vmul.f32 %v3145, 1.442695
  %v3246 = vpow.pop %v3245
  %v3247 = vmul.f32 %v3146, 1.442695
  %v3248 = vpow.pop %v3247
  %v3249 = vmul.f32 %v3147, 1.442695
  %v3250 = vpow.pop %v3249
  %v3251 = vmul.f32 %v3148, 1.442695
  %v3252 = vpow.pop %v3251
  %v3253 = vmul.f32 %v3149, 1.442695
  %v3254 = vpow.pop %v3253
  %v3255 = vmul.f32 %v3150, 1.442695
  %v3256 = vpow.pop %v3255
  %v3257 = vmul.f32 %v3151, 1.442695
  %v3258 = vpow.pop %v3257
  %v3259 = vmul.f32 %v3152, 1.442695
  %v3260 = vpow.pop %v3259
  %v3261 = vmul.f32 %v3153, 1.442695
  %v3262 = vpow.pop %v3261
  %v3263 = vmul.f32 %v3154, 1.442695
  %v3264 = vpow.pop %v3263
  %v3265 = vmul.f32 %v3155, 1.442695
  %v3266 = vpow.pop %v3265
  %v3267 = vmul.f32 %v3156, 1.442695
  %v3268 = vpow.pop %v3267
  %v3269 = vmul.f32 %v3157, 1.442695
  %v3270 = vpow.pop %v3269
  %v3271 = vmul.f32 %v3158, 1.442695
  %v3272 = vpow.pop %v3271
  %v3273 = vmul.f32 %v3159, 1.442695
  %v3274 = vpow.pop %v3273
  %v3275 = vmul.f32 %v3160, 1.442695
  %v3276 = vpow.pop %v3275
  %v3277 = vmul.f32 %v3161, 1.442695
  %v3278 = vpow.pop %v3277
  %v3279 = vmul.f32 %v3162, 1.442695
  %v3280 = vpow.pop %v3279
  %v3281 = vmul.f32 %v3163, 1.442695
  %v3282 = vpow.pop %v3281
  %v3283 = vmul.f32 %v3164, 1.442695
  %v3284 = vpow.pop %v3283
  %v3285 = vmul.f32 %v3165, 1.442695
  %v3286 = vpow.pop %v3285
  %v3287 = vmul.f32 %v3166, 1.442695
  %v3288 = vpow.pop %v3287
  %v3289 = vmul.f32 %v3167, 1.442695
  %v3290 = vpow.pop %v3289
  %v3291 = vmul.f32 %v3168, 1.442695
  %v3292 = vpow.pop %v3291
  %v3293 = vmul.f32 %v3169, 1.442695
  %v3294 = vpow.pop %v3293
  %v3295 = vmul.f32 %v3170, 1.442695
  %v3296 = vpow.pop %v3295
  %v3297 = vmul.f32 %v3171, 1.442695
  %v3298 = vpow.pop %v3297
  %v3299 = vmul.f32 %v3172, 1.442695
  %v3300 = vpow.pop %v3299
  %v3301 = vsel %vm1098, %v3174, 0.0
  %3302 = vadd.xlane.f32.xlu0 %v3301
  %v3303 = vpop.xlane.xlu0 %3302
  %v3304 = vsel %vm1098, %v3176, 0.0
  %3305 = vadd.xlane.f32.xlu0 %v3304
  %v3306 = vpop.xlane.xlu0 %3305
  %v3307 = vsel %vm1098, %v3178, 0.0
  %3308 = vadd.xlane.f32.xlu0 %v3307
  %v3309 = vpop.xlane.xlu0 %3308
  %v3310 = vsel %vm1098, %v3180, 0.0
  %3311 = vadd.xlane.f32.xlu0 %v3310
  %v3312 = vpop.xlane.xlu0 %3311
  %v3313 = vsel %vm1098, %v3182, 0.0
  %3314 = vadd.xlane.f32.xlu0 %v3313
  %v3315 = vpop.xlane.xlu0 %3314
  %v3316 = vsel %vm1098, %v3184, 0.0
  %3317 = vadd.xlane.f32.xlu0 %v3316
  %v3318 = vpop.xlane.xlu0 %3317
  %v3319 = vsel %vm1098, %v3186, 0.0
  %3320 = vadd.xlane.f32.xlu0 %v3319
  %v3321 = vpop.xlane.xlu0 %3320
  %v3322 = vsel %vm1098, %v3188, 0.0
  %3323 = vadd.xlane.f32.xlu0 %v3322
  %v3324 = vpop.xlane.xlu0 %3323
  %v3325 = vsel %vm1098, %v3190, 0.0
  %3326 = vadd.xlane.f32.xlu0 %v3325
  %v3327 = vpop.xlane.xlu0 %3326
  %v3328 = vsel %vm1098, %v3192, 0.0
  %3329 = vadd.xlane.f32.xlu0 %v3328
  %v3330 = vpop.xlane.xlu0 %3329
  %v3331 = vsel %vm1098, %v3194, 0.0
  %3332 = vadd.xlane.f32.xlu0 %v3331
  %v3333 = vpop.xlane.xlu0 %3332
  %v3334 = vsel %vm1098, %v3196, 0.0
  %3335 = vadd.xlane.f32.xlu0 %v3334
  %v3336 = vpop.xlane.xlu0 %3335
  %v3337 = vsel %vm1098, %v3198, 0.0
  %3338 = vadd.xlane.f32.xlu0 %v3337
  %v3339 = vpop.xlane.xlu0 %3338
  %v3340 = vsel %vm1098, %v3200, 0.0
  %3341 = vadd.xlane.f32.xlu0 %v3340
  %v3342 = vpop.xlane.xlu0 %3341
  %v3343 = vsel %vm1098, %v3202, 0.0
  %3344 = vadd.xlane.f32.xlu0 %v3343
  %v3345 = vpop.xlane.xlu0 %3344
  %v3346 = vsel %vm1098, %v3204, 0.0
  %3347 = vadd.xlane.f32.xlu0 %v3346
  %v3348 = vpop.xlane.xlu0 %3347
  %v3349 = vsel %vm1098, %v3206, 0.0
  %3350 = vadd.xlane.f32.xlu0 %v3349
  %v3351 = vpop.xlane.xlu0 %3350
  %v3352 = vsel %vm1098, %v3208, 0.0
  %3353 = vadd.xlane.f32.xlu0 %v3352
  %v3354 = vpop.xlane.xlu0 %3353
  %v3355 = vsel %vm1098, %v3210, 0.0
  %3356 = vadd.xlane.f32.xlu0 %v3355
  %v3357 = vpop.xlane.xlu0 %3356
  %v3358 = vsel %vm1098, %v3212, 0.0
  %3359 = vadd.xlane.f32.xlu0 %v3358
  %v3360 = vpop.xlane.xlu0 %3359
  %v3361 = vsel %vm1098, %v3214, 0.0
  %3362 = vadd.xlane.f32.xlu0 %v3361
  %v3363 = vpop.xlane.xlu0 %3362
  %v3364 = vsel %vm1098, %v3216, 0.0
  %3365 = vadd.xlane.f32.xlu0 %v3364
  %v3366 = vpop.xlane.xlu0 %3365
  %v3367 = vsel %vm1098, %v3218, 0.0
  %3368 = vadd.xlane.f32.xlu0 %v3367
  %v3369 = vpop.xlane.xlu0 %3368
  %v3370 = vsel %vm1098, %v3220, 0.0
  %3371 = vadd.xlane.f32.xlu0 %v3370
  %v3372 = vpop.xlane.xlu0 %3371
  %v3373 = vsel %vm1098, %v3222, 0.0
  %3374 = vadd.xlane.f32.xlu0 %v3373
  %v3375 = vpop.xlane.xlu0 %3374
  %v3376 = vsel %vm1098, %v3224, 0.0
  %3377 = vadd.xlane.f32.xlu0 %v3376
  %v3378 = vpop.xlane.xlu0 %3377
  %v3379 = vsel %vm1098, %v3226, 0.0
  %3380 = vadd.xlane.f32.xlu0 %v3379
  %v3381 = vpop.xlane.xlu0 %3380
  %v3382 = vsel %vm1098, %v3228, 0.0
  %3383 = vadd.xlane.f32.xlu0 %v3382
  %v3384 = vpop.xlane.xlu0 %3383
  %v3385 = vsel %vm1098, %v3230, 0.0
  %3386 = vadd.xlane.f32.xlu0 %v3385
  %v3387 = vpop.xlane.xlu0 %3386
  %v3388 = vsel %vm1098, %v3232, 0.0
  %3389 = vadd.xlane.f32.xlu0 %v3388
  %v3390 = vpop.xlane.xlu0 %3389
  %v3391 = vsel %vm1098, %v3234, 0.0
  %3392 = vadd.xlane.f32.xlu0 %v3391
  %v3393 = vpop.xlane.xlu0 %3392
  %v3394 = vsel %vm1098, %v3236, 0.0
  %3395 = vadd.xlane.f32.xlu0 %v3394
  %v3396 = vpop.xlane.xlu0 %3395
  %v3397 = vsel %vm1098, %v3238, 0.0
  %3398 = vadd.xlane.f32.xlu0 %v3397
  %v3399 = vpop.xlane.xlu0 %3398
  %v3400 = vsel %vm1098, %v3240, 0.0
  %3401 = vadd.xlane.f32.xlu0 %v3400
  %v3402 = vpop.xlane.xlu0 %3401
  %v3403 = vsel %vm1098, %v3242, 0.0
  %3404 = vadd.xlane.f32.xlu0 %v3403
  %v3405 = vpop.xlane.xlu0 %3404
  %v3406 = vsel %vm1098, %v3244, 0.0
  %3407 = vadd.xlane.f32.xlu0 %v3406
  %v3408 = vpop.xlane.xlu0 %3407
  %v3409 = vsel %vm1098, %v3246, 0.0
  %3410 = vadd.xlane.f32.xlu0 %v3409
  %v3411 = vpop.xlane.xlu0 %3410
  %v3412 = vsel %vm1098, %v3248, 0.0
  %3413 = vadd.xlane.f32.xlu0 %v3412
  %v3414 = vpop.xlane.xlu0 %3413
  %v3415 = vsel %vm1098, %v3250, 0.0
  %3416 = vadd.xlane.f32.xlu0 %v3415
  %v3417 = vpop.xlane.xlu0 %3416
  %v3418 = vsel %vm1098, %v3252, 0.0
  %3419 = vadd.xlane.f32.xlu0 %v3418
  %v3420 = vpop.xlane.xlu0 %3419
  %v3421 = vsel %vm1098, %v3254, 0.0
  %3422 = vadd.xlane.f32.xlu0 %v3421
  %v3423 = vpop.xlane.xlu0 %3422
  %v3424 = vsel %vm1098, %v3256, 0.0
  %3425 = vadd.xlane.f32.xlu0 %v3424
  %v3426 = vpop.xlane.xlu0 %3425
  %v3427 = vsel %vm1098, %v3258, 0.0
  %3428 = vadd.xlane.f32.xlu0 %v3427
  %v3429 = vpop.xlane.xlu0 %3428
  %v3430 = vsel %vm1098, %v3260, 0.0
  %3431 = vadd.xlane.f32.xlu0 %v3430
  %v3432 = vpop.xlane.xlu0 %3431
  %v3433 = vsel %vm1098, %v3262, 0.0
  %3434 = vadd.xlane.f32.xlu0 %v3433
  %v3435 = vpop.xlane.xlu0 %3434
  %v3436 = vsel %vm1098, %v3264, 0.0
  %3437 = vadd.xlane.f32.xlu0 %v3436
  %v3438 = vpop.xlane.xlu0 %3437
  %v3439 = vsel %vm1098, %v3266, 0.0
  %3440 = vadd.xlane.f32.xlu0 %v3439
  %v3441 = vpop.xlane.xlu0 %3440
  %v3442 = vsel %vm1098, %v3268, 0.0
  %3443 = vadd.xlane.f32.xlu0 %v3442
  %v3444 = vpop.xlane.xlu0 %3443
  %v3445 = vsel %vm1098, %v3270, 0.0
  %3446 = vadd.xlane.f32.xlu0 %v3445
  %v3447 = vpop.xlane.xlu0 %3446
  %v3448 = vsel %vm1098, %v3272, 0.0
  %3449 = vadd.xlane.f32.xlu0 %v3448
  %v3450 = vpop.xlane.xlu0 %3449
  %v3451 = vsel %vm1098, %v3274, 0.0
  %3452 = vadd.xlane.f32.xlu0 %v3451
  %v3453 = vpop.xlane.xlu0 %3452
  %v3454 = vsel %vm1098, %v3276, 0.0
  %3455 = vadd.xlane.f32.xlu0 %v3454
  %v3456 = vpop.xlane.xlu0 %3455
  %v3457 = vsel %vm1098, %v3278, 0.0
  %3458 = vadd.xlane.f32.xlu0 %v3457
  %v3459 = vpop.xlane.xlu0 %3458
  %v3460 = vsel %vm1098, %v3280, 0.0
  %3461 = vadd.xlane.f32.xlu0 %v3460
  %v3462 = vpop.xlane.xlu0 %3461
  %v3463 = vsel %vm1098, %v3282, 0.0
  %3464 = vadd.xlane.f32.xlu0 %v3463
  %v3465 = vpop.xlane.xlu0 %3464
  %v3466 = vsel %vm1098, %v3284, 0.0
  %3467 = vadd.xlane.f32.xlu0 %v3466
  %v3468 = vpop.xlane.xlu0 %3467
  %v3469 = vsel %vm1098, %v3286, 0.0
  %3470 = vadd.xlane.f32.xlu0 %v3469
  %v3471 = vpop.xlane.xlu0 %3470
  %v3472 = vsel %vm1098, %v3288, 0.0
  %3473 = vadd.xlane.f32.xlu0 %v3472
  %v3474 = vpop.xlane.xlu0 %3473
  %v3475 = vsel %vm1098, %v3290, 0.0
  %3476 = vadd.xlane.f32.xlu0 %v3475
  %v3477 = vpop.xlane.xlu0 %3476
  %v3478 = vsel %vm1098, %v3292, 0.0
  %3479 = vadd.xlane.f32.xlu0 %v3478
  %v3480 = vpop.xlane.xlu0 %3479
  %v3481 = vsel %vm1098, %v3294, 0.0
  %3482 = vadd.xlane.f32.xlu0 %v3481
  %v3483 = vpop.xlane.xlu0 %3482
  %v3484 = vsel %vm1098, %v3296, 0.0
  %3485 = vadd.xlane.f32.xlu0 %v3484
  %v3486 = vpop.xlane.xlu0 %3485
  %v3487 = vsel %vm1098, %v3298, 0.0
  %3488 = vadd.xlane.f32.xlu0 %v3487
  %v3489 = vpop.xlane.xlu0 %3488
  %v3490 = vsel %vm1098, %v3300, 0.0
  %3491 = vadd.xlane.f32.xlu0 %v3490
  %v3492 = vpop.xlane.xlu0 %3491
  %v3493 = vrcp.pop %v3303
  %v3494 = vrcp.pop %v3306
  %v3495 = vrcp.pop %v3309
  %v3496 = vrcp.pop %v3312
  %v3497 = vrcp.pop %v3315
  %v3498 = vrcp.pop %v3318
  %v3499 = vrcp.pop %v3321
  %v3500 = vrcp.pop %v3324
  %v3501 = vrcp.pop %v3327
  %v3502 = vrcp.pop %v3330
  %v3503 = vrcp.pop %v3333
  %v3504 = vrcp.pop %v3336
  %v3505 = vrcp.pop %v3339
  %v3506 = vrcp.pop %v3342
  %v3507 = vrcp.pop %v3345
  %v3508 = vrcp.pop %v3348
  %v3509 = vrcp.pop %v3351
  %v3510 = vrcp.pop %v3354
  %v3511 = vrcp.pop %v3357
  %v3512 = vrcp.pop %v3360
  %v3513 = vrcp.pop %v3363
  %v3514 = vrcp.pop %v3366
  %v3515 = vrcp.pop %v3369
  %v3516 = vrcp.pop %v3372
  %v3517 = vrcp.pop %v3375
  %v3518 = vrcp.pop %v3378
  %v3519 = vrcp.pop %v3381
  %v3520 = vrcp.pop %v3384
  %v3521 = vrcp.pop %v3387
  %v3522 = vrcp.pop %v3390
  %v3523 = vrcp.pop %v3393
  %v3524 = vrcp.pop %v3396
  %v3525 = vrcp.pop %v3399
  %v3526 = vrcp.pop %v3402
  %v3527 = vrcp.pop %v3405
  %v3528 = vrcp.pop %v3408
  %v3529 = vrcp.pop %v3411
  %v3530 = vrcp.pop %v3414
  %v3531 = vrcp.pop %v3417
  %v3532 = vrcp.pop %v3420
  %v3533 = vrcp.pop %v3423
  %v3534 = vrcp.pop %v3426
  %v3535 = vrcp.pop %v3429
  %v3536 = vrcp.pop %v3432
  %v3537 = vrcp.pop %v3435
  %v3538 = vrcp.pop %v3438
  %v3539 = vrcp.pop %v3441
  %v3540 = vrcp.pop %v3444
  %v3541 = vrcp.pop %v3447
  %v3542 = vrcp.pop %v3450
  %v3543 = vrcp.pop %v3453
  %v3544 = vrcp.pop %v3456
  %v3545 = vrcp.pop %v3459
  %v3546 = vrcp.pop %v3462
  %v3547 = vrcp.pop %v3465
  %v3548 = vrcp.pop %v3468
  %v3549 = vrcp.pop %v3471
  %v3550 = vrcp.pop %v3474
  %v3551 = vrcp.pop %v3477
  %v3552 = vrcp.pop %v3480
  %v3553 = vrcp.pop %v3483
  %v3554 = vrcp.pop %v3486
  %v3555 = vrcp.pop %v3489
  %v3556 = vrcp.pop %v3492
  %v3557 = vmul.f32 %v3174, %v3493
  %v3558 = vmul.f32 %v3176, %v3494
  %v3559 = vmul.f32 %v3178, %v3495
  %v3560 = vmul.f32 %v3180, %v3496
  %v3561 = vmul.f32 %v3182, %v3497
  %v3562 = vmul.f32 %v3184, %v3498
  %v3563 = vmul.f32 %v3186, %v3499
  %v3564 = vmul.f32 %v3188, %v3500
  %v3565 = vmul.f32 %v3190, %v3501
  %v3566 = vmul.f32 %v3192, %v3502
  %v3567 = vmul.f32 %v3194, %v3503
  %v3568 = vmul.f32 %v3196, %v3504
  %v3569 = vmul.f32 %v3198, %v3505
  %v3570 = vmul.f32 %v3200, %v3506
  %v3571 = vmul.f32 %v3202, %v3507
  %v3572 = vmul.f32 %v3204, %v3508
  %v3573 = vmul.f32 %v3206, %v3509
  %v3574 = vmul.f32 %v3208, %v3510
  %v3575 = vmul.f32 %v3210, %v3511
  %v3576 = vmul.f32 %v3212, %v3512
  %v3577 = vmul.f32 %v3214, %v3513
  %v3578 = vmul.f32 %v3216, %v3514
  %v3579 = vmul.f32 %v3218, %v3515
  %v3580 = vmul.f32 %v3220, %v3516
  %v3581 = vmul.f32 %v3222, %v3517
  %v3582 = vmul.f32 %v3224, %v3518
  %v3583 = vmul.f32 %v3226, %v3519
  %v3584 = vmul.f32 %v3228, %v3520
  %v3585 = vmul.f32 %v3230, %v3521
  %v3586 = vmul.f32 %v3232, %v3522
  %v3587 = vmul.f32 %v3234, %v3523
  %v3588 = vmul.f32 %v3236, %v3524
  %v3589 = vmul.f32 %v3238, %v3525
  %v3590 = vmul.f32 %v3240, %v3526
  %v3591 = vmul.f32 %v3242, %v3527
  %v3592 = vmul.f32 %v3244, %v3528
  %v3593 = vmul.f32 %v3246, %v3529
  %v3594 = vmul.f32 %v3248, %v3530
  %v3595 = vmul.f32 %v3250, %v3531
  %v3596 = vmul.f32 %v3252, %v3532
  %v3597 = vmul.f32 %v3254, %v3533
  %v3598 = vmul.f32 %v3256, %v3534
  %v3599 = vmul.f32 %v3258, %v3535
  %v3600 = vmul.f32 %v3260, %v3536
  %v3601 = vmul.f32 %v3262, %v3537
  %v3602 = vmul.f32 %v3264, %v3538
  %v3603 = vmul.f32 %v3266, %v3539
  %v3604 = vmul.f32 %v3268, %v3540
  %v3605 = vmul.f32 %v3270, %v3541
  %v3606 = vmul.f32 %v3272, %v3542
  %v3607 = vmul.f32 %v3274, %v3543
  %v3608 = vmul.f32 %v3276, %v3544
  %v3609 = vmul.f32 %v3278, %v3545
  %v3610 = vmul.f32 %v3280, %v3546
  %v3611 = vmul.f32 %v3282, %v3547
  %v3612 = vmul.f32 %v3284, %v3548
  %v3613 = vmul.f32 %v3286, %v3549
  %v3614 = vmul.f32 %v3288, %v3550
  %v3615 = vmul.f32 %v3290, %v3551
  %v3616 = vmul.f32 %v3292, %v3552
  %v3617 = vmul.f32 %v3294, %v3553
  %v3618 = vmul.f32 %v3296, %v3554
  %v3619 = vmul.f32 %v3298, %v3555
  %v3620 = vmul.f32 %v3300, %v3556
  %v3622 = vsel %vm1098, %v3557, 0
  %v3625 = vsel %vm1098, %v3558, 0
  %v3628 = vsel %vm1098, %v3559, 0
  %v3631 = vsel %vm1098, %v3560, 0
  %v3634 = vsel %vm1098, %v3561, 0
  %v3637 = vsel %vm1098, %v3562, 0
  %v3640 = vsel %vm1098, %v3563, 0
  %v3643 = vsel %vm1098, %v3564, 0
  %v3646 = vsel %vm1098, %v3565, 0
  %v3649 = vsel %vm1098, %v3566, 0
  %v3652 = vsel %vm1098, %v3567, 0
  %v3655 = vsel %vm1098, %v3568, 0
  %v3658 = vsel %vm1098, %v3569, 0
  %v3661 = vsel %vm1098, %v3570, 0
  %v3664 = vsel %vm1098, %v3571, 0
  %v3667 = vsel %vm1098, %v3572, 0
  %v3670 = vsel %vm1098, %v3573, 0
  %v3673 = vsel %vm1098, %v3574, 0
  %v3676 = vsel %vm1098, %v3575, 0
  %v3679 = vsel %vm1098, %v3576, 0
  %v3682 = vsel %vm1098, %v3577, 0
  %v3685 = vsel %vm1098, %v3578, 0
  %v3688 = vsel %vm1098, %v3579, 0
  %v3691 = vsel %vm1098, %v3580, 0
  %v3694 = vsel %vm1098, %v3581, 0
  %v3697 = vsel %vm1098, %v3582, 0
  %v3700 = vsel %vm1098, %v3583, 0
  %v3703 = vsel %vm1098, %v3584, 0
  %v3706 = vsel %vm1098, %v3585, 0
  %v3709 = vsel %vm1098, %v3586, 0
  %v3712 = vsel %vm1098, %v3587, 0
  %v3715 = vsel %vm1098, %v3588, 0
  %v3718 = vsel %vm1098, %v3589, 0
  %v3721 = vsel %vm1098, %v3590, 0
  %v3724 = vsel %vm1098, %v3591, 0
  %v3727 = vsel %vm1098, %v3592, 0
  %v3730 = vsel %vm1098, %v3593, 0
  %v3733 = vsel %vm1098, %v3594, 0
  %v3736 = vsel %vm1098, %v3595, 0
  %v3739 = vsel %vm1098, %v3596, 0
  %v3742 = vsel %vm1098, %v3597, 0
  %v3745 = vsel %vm1098, %v3598, 0
  %v3748 = vsel %vm1098, %v3599, 0
  %v3751 = vsel %vm1098, %v3600, 0
  %v3754 = vsel %vm1098, %v3601, 0
  %v3757 = vsel %vm1098, %v3602, 0
  %v3760 = vsel %vm1098, %v3603, 0
  %v3763 = vsel %vm1098, %v3604, 0
  %v3766 = vsel %vm1098, %v3605, 0
  %v3769 = vsel %vm1098, %v3606, 0
  %v3772 = vsel %vm1098, %v3607, 0
  %v3775 = vsel %vm1098, %v3608, 0
  %v3778 = vsel %vm1098, %v3609, 0
  %v3781 = vsel %vm1098, %v3610, 0
  %v3784 = vsel %vm1098, %v3611, 0
  %v3787 = vsel %vm1098, %v3612, 0
  %v3790 = vsel %vm1098, %v3613, 0
  %v3793 = vsel %vm1098, %v3614, 0
  %v3796 = vsel %vm1098, %v3615, 0
  %v3799 = vsel %vm1098, %v3616, 0
  %v3802 = vsel %vm1098, %v3617, 0
  %v3805 = vsel %vm1098, %v3618, 0
  %v3808 = vsel %vm1098, %v3619, 0
  %v3811 = vsel %vm1098, %v3620, 0
  %3813 = vmatprep.subr.mxu0 0.0
  %3814 = vmatpush1.msra.mxu0 %v417
  %3815 = vmatprep.subr.mxu0 0.0
  %3816 = vmatpush1.msra.mxu0 %v422
  %3817 = vmatprep.subr.mxu0 0.0
  %3818 = vmatpush1.msra.mxu0 %v427
  %3819 = vmatprep.subr.mxu0 0.0
  %3820 = vmatpush1.msra.mxu0 %v432
  %3821 = vmatprep.subr.mxu0 0.0
  %3822 = vmatpush1.msra.mxu0 %v437
  %3823 = vmatprep.subr.mxu0 0.0
  %3824 = vmatpush1.msra.mxu0 %v442
  %3825 = vmatprep.subr.mxu0 0.0
  %3826 = vmatpush1.msra.mxu0 %v447
  %3827 = vmatprep.subr.mxu0 0.0
  %3828 = vmatpush1.msra.mxu0 %v452
  %3829 = vmatprep.subr.mxu0 0.0
  %3830 = vmatpush1.msra.mxu0 0.0
  %3831 = vmatprep.subr.mxu0 0.0
  %3832 = vmatpush1.msra.mxu0 0.0
  %3833 = vmatprep.subr.mxu0 0.0
  %3834 = vmatpush1.msra.mxu0 0.0
  %3835 = vmatprep.subr.mxu0 0.0
  %3836 = vmatpush1.msra.mxu0 0.0
  %3837 = vmatprep.subr.mxu0 0.0
  %3838 = vmatpush1.msra.mxu0 0.0
  %3839 = vmatprep.subr.mxu0 0.0
  %3840 = vmatpush1.msra.mxu0 0.0
  %3841 = vmatprep.subr.mxu0 0.0
  %3842 = vmatpush1.msra.mxu0 0.0
  %3843 = vmatprep.subr.mxu0 0.0
  %3844 = vmatpush1.msra.mxu0 0.0
  %3845 = vmatprep.subr.mxu0 0.0
  %3846 = vmatpush1.msra.mxu0 0.0
  %3847 = vmatprep.subr.mxu0 0.0
  %3848 = vmatpush1.msra.mxu0 0.0
  %3849 = vmatprep.subr.mxu0 0.0
  %3850 = vmatpush1.msra.mxu0 0.0
  %3851 = vmatprep.subr.mxu0 0.0
  %3852 = vmatpush1.msra.mxu0 0.0
  %3853 = vmatprep.subr.mxu0 0.0
  %3854 = vmatpush1.msra.mxu0 0.0
  %3855 = vmatprep.subr.mxu0 0.0
  %3856 = vmatpush1.msra.mxu0 0.0
  %3857 = vmatprep.subr.mxu0 0.0
  %3858 = vmatpush1.msra.mxu0 0.0
  %3859 = vmatprep.subr.mxu0 0.0
  %3860 = vmatpush1.msra.mxu0 0.0
  %3861 = vmatprep.subr.mxu0 0.0
  %3862 = vmatpush1.msra.mxu0 0.0
  %3863 = vmatprep.subr.mxu0 0.0
  %3864 = vmatpush1.msra.mxu0 0.0
  %3865 = vmatprep.subr.mxu0 0.0
  %3866 = vmatpush1.msra.mxu0 0.0
  %3867 = vmatprep.subr.mxu0 0.0
  %3868 = vmatpush1.msra.mxu0 0.0
  %3869 = vmatprep.subr.mxu0 0.0
  %3870 = vmatpush1.msra.mxu0 0.0
  %3871 = vmatprep.subr.mxu0 0.0
  %3872 = vmatpush1.msra.mxu0 0.0
  %3873 = vmatprep.subr.mxu0 0.0
  %3874 = vmatpush1.msra.mxu0 0.0
  %3875 = vmatprep.subr.mxu0 0.0
  %3876 = vmatpush1.msra.mxu0 0.0
  %3877 = vmatprep.mubr.f32.mxu0 0.0
  %3878 = vmatmul.mubr.f32.gmra.mrb[0].mxu0 %v3622
  %v3879 = vpop.f32.mrb[0].mxu0
  %v3880 = vadd.f32 0.0, %v3879
  %v3881 = vpop.f32.mrb[0].mxu0
  %3882 = vmatprep.mubr.f32.mxu0 0.0
  %3883 = vmatmul.mubr.f32.gmra.mrb[0].mxu0 %v3625
  %v3884 = vpop.f32.mrb[0].mxu0
  %v3885 = vadd.f32 0.0, %v3884
  %v3886 = vpop.f32.mrb[0].mxu0
  %3887 = vmatprep.mubr.f32.mxu0 0.0
  %3888 = vmatmul.mubr.f32.gmra.mrb[0].mxu0 %v3628
  %v3889 = vpop.f32.mrb[0].mxu0
  %v3890 = vadd.f32 0.0, %v3889
  %v3891 = vpop.f32.mrb[0].mxu0
  %3892 = vmatprep.mubr.f32.mxu0 0.0
  %3893 = vmatmul.mubr.f32.gmra.mrb[0].mxu0 %v3631
  %v3894 = vpop.f32.mrb[0].mxu0
  %v3895 = vadd.f32 0.0, %v3894
  %v3896 = vpop.f32.mrb[0].mxu0
  %3897 = vmatprep.mubr.f32.mxu0 0.0
  %3898 = vmatmul.mubr.f32.gmra.mrb[0].mxu0 %v3634
  %v3899 = vpop.f32.mrb[0].mxu0
  %v3900 = vadd.f32 0.0, %v3899
  %v3901 = vpop.f32.mrb[0].mxu0
  %3902 = vmatprep.mubr.f32.mxu0 0.0
  %3903 = vmatmul.mubr.f32.gmra.mrb[0].mxu0 %v3637
  %v3904 = vpop.f32.mrb[0].mxu0
  %v3905 = vadd.f32 0.0, %v3904
  %v3906 = vpop.f32.mrb[0].mxu0
  %3907 = vmatprep.mubr.f32.mxu0 0.0
  %3908 = vmatmul.mubr.f32.gmra.mrb[0].mxu0 %v3640
  %v3909 = vpop.f32.mrb[0].mxu0
  %v3910 = vadd.f32 0.0, %v3909
  %v3911 = vpop.f32.mrb[0].mxu0
  %3912 = vmatprep.mubr.f32.mxu0 0.0
  %3913 = vmatmul.mubr.f32.gmra.mrb[0].mxu0 %v3643
  %v3914 = vpop.f32.mrb[0].mxu0
  %v3915 = vadd.f32 0.0, %v3914
  %v3916 = vpop.f32.mrb[0].mxu0
  %3917 = vmatprep.mubr.f32.mxu0 0.0
  %3918 = vmatmul.mubr.f32.gmra.mrb[0].mxu0 %v3646
  %v3919 = vpop.f32.mrb[0].mxu0
  %v3920 = vadd.f32 0.0, %v3919
  %v3921 = vpop.f32.mrb[0].mxu0
  %3922 = vmatprep.mubr.f32.mxu0 0.0
  %3923 = vmatmul.mubr.f32.gmra.mrb[0].mxu0 %v3649
  %v3924 = vpop.f32.mrb[0].mxu0
  %v3925 = vadd.f32 0.0, %v3924
  %v3926 = vpop.f32.mrb[0].mxu0
  %3927 = vmatprep.mubr.f32.mxu0 0.0
  %3928 = vmatmul.mubr.f32.gmra.mrb[0].mxu0 %v3652
  %v3929 = vpop.f32.mrb[0].mxu0
  %v3930 = vadd.f32 0.0, %v3929
  %v3931 = vpop.f32.mrb[0].mxu0
  %3932 = vmatprep.mubr.f32.mxu0 0.0
  %3933 = vmatmul.mubr.f32.gmra.mrb[0].mxu0 %v3655
  %v3934 = vpop.f32.mrb[0].mxu0
  %v3935 = vadd.f32 0.0, %v3934
  %v3936 = vpop.f32.mrb[0].mxu0
  %3937 = vmatprep.mubr.f32.mxu0 0.0
  %3938 = vmatmul.mubr.f32.gmra.mrb[0].mxu0 %v3658
  %v3939 = vpop.f32.mrb[0].mxu0
  %v3940 = vadd.f32 0.0, %v3939
  %v3941 = vpop.f32.mrb[0].mxu0
  %3942 = vmatprep.mubr.f32.mxu0 0.0
  %3943 = vmatmul.mubr.f32.gmra.mrb[0].mxu0 %v3661
  %v3944 = vpop.f32.mrb[0].mxu0
  %v3945 = vadd.f32 0.0, %v3944
  %v3946 = vpop.f32.mrb[0].mxu0
  %3947 = vmatprep.mubr.f32.mxu0 0.0
  %3948 = vmatmul.mubr.f32.gmra.mrb[0].mxu0 %v3664
  %v3949 = vpop.f32.mrb[0].mxu0
  %v3950 = vadd.f32 0.0, %v3949
  %v3951 = vpop.f32.mrb[0].mxu0
  %3952 = vmatprep.mubr.f32.mxu0 0.0
  %3953 = vmatmul.mubr.f32.gmra.mrb[0].mxu0 %v3667
  %v3954 = vpop.f32.mrb[0].mxu0
  %v3955 = vadd.f32 0.0, %v3954
  %v3956 = vpop.f32.mrb[0].mxu0
  %3957 = vmatprep.mubr.f32.mxu0 0.0
  %3958 = vmatmul.mubr.f32.gmra.mrb[0].mxu0 %v3670
  %v3959 = vpop.f32.mrb[0].mxu0
  %v3960 = vadd.f32 0.0, %v3959
  %v3961 = vpop.f32.mrb[0].mxu0
  %3962 = vmatprep.mubr.f32.mxu0 0.0
  %3963 = vmatmul.mubr.f32.gmra.mrb[0].mxu0 %v3673
  %v3964 = vpop.f32.mrb[0].mxu0
  %v3965 = vadd.f32 0.0, %v3964
  %v3966 = vpop.f32.mrb[0].mxu0
  %3967 = vmatprep.mubr.f32.mxu0 0.0
  %3968 = vmatmul.mubr.f32.gmra.mrb[0].mxu0 %v3676
  %v3969 = vpop.f32.mrb[0].mxu0
  %v3970 = vadd.f32 0.0, %v3969
  %v3971 = vpop.f32.mrb[0].mxu0
  %3972 = vmatprep.mubr.f32.mxu0 0.0
  %3973 = vmatmul.mubr.f32.gmra.mrb[0].mxu0 %v3679
  %v3974 = vpop.f32.mrb[0].mxu0
  %v3975 = vadd.f32 0.0, %v3974
  %v3976 = vpop.f32.mrb[0].mxu0
  %3977 = vmatprep.mubr.f32.mxu0 0.0
  %3978 = vmatmul.mubr.f32.gmra.mrb[0].mxu0 %v3682
  %v3979 = vpop.f32.mrb[0].mxu0
  %v3980 = vadd.f32 0.0, %v3979
  %v3981 = vpop.f32.mrb[0].mxu0
  %3982 = vmatprep.mubr.f32.mxu0 0.0
  %3983 = vmatmul.mubr.f32.gmra.mrb[0].mxu0 %v3685
  %v3984 = vpop.f32.mrb[0].mxu0
  %v3985 = vadd.f32 0.0, %v3984
  %v3986 = vpop.f32.mrb[0].mxu0
  %3987 = vmatprep.mubr.f32.mxu0 0.0
  %3988 = vmatmul.mubr.f32.gmra.mrb[0].mxu0 %v3688
  %v3989 = vpop.f32.mrb[0].mxu0
  %v3990 = vadd.f32 0.0, %v3989
  %v3991 = vpop.f32.mrb[0].mxu0
  %3992 = vmatprep.mubr.f32.mxu0 0.0
  %3993 = vmatmul.mubr.f32.gmra.mrb[0].mxu0 %v3691
  %v3994 = vpop.f32.mrb[0].mxu0
  %v3995 = vadd.f32 0.0, %v3994
  %v3996 = vpop.f32.mrb[0].mxu0
  %3997 = vmatprep.mubr.f32.mxu0 0.0
  %3998 = vmatmul.mubr.f32.gmra.mrb[0].mxu0 %v3694
  %v3999 = vpop.f32.mrb[0].mxu0
  %v4000 = vadd.f32 0.0, %v3999
  %v4001 = vpop.f32.mrb[0].mxu0
  %4002 = vmatprep.mubr.f32.mxu0 0.0
  %4003 = vmatmul.mubr.f32.gmra.mrb[0].mxu0 %v3697
  %v4004 = vpop.f32.mrb[0].mxu0
  %v4005 = vadd.f32 0.0, %v4004
  %v4006 = vpop.f32.mrb[0].mxu0
  %4007 = vmatprep.mubr.f32.mxu0 0.0
  %4008 = vmatmul.mubr.f32.gmra.mrb[0].mxu0 %v3700
  %v4009 = vpop.f32.mrb[0].mxu0
  %v4010 = vadd.f32 0.0, %v4009
  %v4011 = vpop.f32.mrb[0].mxu0
  %4012 = vmatprep.mubr.f32.mxu0 0.0
  %4013 = vmatmul.mubr.f32.gmra.mrb[0].mxu0 %v3703
  %v4014 = vpop.f32.mrb[0].mxu0
  %v4015 = vadd.f32 0.0, %v4014
  %v4016 = vpop.f32.mrb[0].mxu0
  %4017 = vmatprep.mubr.f32.mxu0 0.0
  %4018 = vmatmul.mubr.f32.gmra.mrb[0].mxu0 %v3706
  %v4019 = vpop.f32.mrb[0].mxu0
  %v4020 = vadd.f32 0.0, %v4019
  %v4021 = vpop.f32.mrb[0].mxu0
  %4022 = vmatprep.mubr.f32.mxu0 0.0
  %4023 = vmatmul.mubr.f32.gmra.mrb[0].mxu0 %v3709
  %v4024 = vpop.f32.mrb[0].mxu0
  %v4025 = vadd.f32 0.0, %v4024
  %v4026 = vpop.f32.mrb[0].mxu0
  %4027 = vmatprep.mubr.f32.mxu0 0.0
  %4028 = vmatmul.mubr.f32.gmra.mrb[0].mxu0 %v3712
  %v4029 = vpop.f32.mrb[0].mxu0
  %v4030 = vadd.f32 0.0, %v4029
  %v4031 = vpop.f32.mrb[0].mxu0
  %4032 = vmatprep.mubr.f32.mxu0 0.0
  %4033 = vmatmul.mubr.f32.gmra.mrb[0].mxu0 %v3715
  %v4034 = vpop.f32.mrb[0].mxu0
  %v4035 = vadd.f32 0.0, %v4034
  %v4036 = vpop.f32.mrb[0].mxu0
  %4037 = vmatprep.mubr.f32.mxu0 0.0
  %4038 = vmatmul.mubr.f32.gmra.mrb[0].mxu0 %v3718
  %v4039 = vpop.f32.mrb[0].mxu0
  %v4040 = vadd.f32 0.0, %v4039
  %v4041 = vpop.f32.mrb[0].mxu0
  %4042 = vmatprep.mubr.f32.mxu0 0.0
  %4043 = vmatmul.mubr.f32.gmra.mrb[0].mxu0 %v3721
  %v4044 = vpop.f32.mrb[0].mxu0
  %v4045 = vadd.f32 0.0, %v4044
  %v4046 = vpop.f32.mrb[0].mxu0
  %4047 = vmatprep.mubr.f32.mxu0 0.0
  %4048 = vmatmul.mubr.f32.gmra.mrb[0].mxu0 %v3724
  %v4049 = vpop.f32.mrb[0].mxu0
  %v4050 = vadd.f32 0.0, %v4049
  %v4051 = vpop.f32.mrb[0].mxu0
  %4052 = vmatprep.mubr.f32.mxu0 0.0
  %4053 = vmatmul.mubr.f32.gmra.mrb[0].mxu0 %v3727
  %v4054 = vpop.f32.mrb[0].mxu0
  %v4055 = vadd.f32 0.0, %v4054
  %v4056 = vpop.f32.mrb[0].mxu0
  %4057 = vmatprep.mubr.f32.mxu0 0.0
  %4058 = vmatmul.mubr.f32.gmra.mrb[0].mxu0 %v3730
  %v4059 = vpop.f32.mrb[0].mxu0
  %v4060 = vadd.f32 0.0, %v4059
  %v4061 = vpop.f32.mrb[0].mxu0
  %4062 = vmatprep.mubr.f32.mxu0 0.0
  %4063 = vmatmul.mubr.f32.gmra.mrb[0].mxu0 %v3733
  %v4064 = vpop.f32.mrb[0].mxu0
  %v4065 = vadd.f32 0.0, %v4064
  %v4066 = vpop.f32.mrb[0].mxu0
  %4067 = vmatprep.mubr.f32.mxu0 0.0
  %4068 = vmatmul.mubr.f32.gmra.mrb[0].mxu0 %v3736
  %v4069 = vpop.f32.mrb[0].mxu0
  %v4070 = vadd.f32 0.0, %v4069
  %v4071 = vpop.f32.mrb[0].mxu0
  %4072 = vmatprep.mubr.f32.mxu0 0.0
  %4073 = vmatmul.mubr.f32.gmra.mrb[0].mxu0 %v3739
  %v4074 = vpop.f32.mrb[0].mxu0
  %v4075 = vadd.f32 0.0, %v4074
  %v4076 = vpop.f32.mrb[0].mxu0
  %4077 = vmatprep.mubr.f32.mxu0 0.0
  %4078 = vmatmul.mubr.f32.gmra.mrb[0].mxu0 %v3742
  %v4079 = vpop.f32.mrb[0].mxu0
  %v4080 = vadd.f32 0.0, %v4079
  %v4081 = vpop.f32.mrb[0].mxu0
  %4082 = vmatprep.mubr.f32.mxu0 0.0
  %4083 = vmatmul.mubr.f32.gmra.mrb[0].mxu0 %v3745
  %v4084 = vpop.f32.mrb[0].mxu0
  %v4085 = vadd.f32 0.0, %v4084
  %v4086 = vpop.f32.mrb[0].mxu0
  %4087 = vmatprep.mubr.f32.mxu0 0.0
  %4088 = vmatmul.mubr.f32.gmra.mrb[0].mxu0 %v3748
  %v4089 = vpop.f32.mrb[0].mxu0
  %v4090 = vadd.f32 0.0, %v4089
  %v4091 = vpop.f32.mrb[0].mxu0
  %4092 = vmatprep.mubr.f32.mxu0 0.0
  %4093 = vmatmul.mubr.f32.gmra.mrb[0].mxu0 %v3751
  %v4094 = vpop.f32.mrb[0].mxu0
  %v4095 = vadd.f32 0.0, %v4094
  %v4096 = vpop.f32.mrb[0].mxu0
  %4097 = vmatprep.mubr.f32.mxu0 0.0
  %4098 = vmatmul.mubr.f32.gmra.mrb[0].mxu0 %v3754
  %v4099 = vpop.f32.mrb[0].mxu0
  %v4100 = vadd.f32 0.0, %v4099
  %v4101 = vpop.f32.mrb[0].mxu0
  %4102 = vmatprep.mubr.f32.mxu0 0.0
  %4103 = vmatmul.mubr.f32.gmra.mrb[0].mxu0 %v3757
  %v4104 = vpop.f32.mrb[0].mxu0
  %v4105 = vadd.f32 0.0, %v4104
  %v4106 = vpop.f32.mrb[0].mxu0
  %4107 = vmatprep.mubr.f32.mxu0 0.0
  %4108 = vmatmul.mubr.f32.gmra.mrb[0].mxu0 %v3760
  %v4109 = vpop.f32.mrb[0].mxu0
  %v4110 = vadd.f32 0.0, %v4109
  %v4111 = vpop.f32.mrb[0].mxu0
  %4112 = vmatprep.mubr.f32.mxu0 0.0
  %4113 = vmatmul.mubr.f32.gmra.mrb[0].mxu0 %v3763
  %v4114 = vpop.f32.mrb[0].mxu0
  %v4115 = vadd.f32 0.0, %v4114
  %v4116 = vpop.f32.mrb[0].mxu0
  %4117 = vmatprep.mubr.f32.mxu0 0.0
  %4118 = vmatmul.mubr.f32.gmra.mrb[0].mxu0 %v3766
  %v4119 = vpop.f32.mrb[0].mxu0
  %v4120 = vadd.f32 0.0, %v4119
  %v4121 = vpop.f32.mrb[0].mxu0
  %4122 = vmatprep.mubr.f32.mxu0 0.0
  %4123 = vmatmul.mubr.f32.gmra.mrb[0].mxu0 %v3769
  %v4124 = vpop.f32.mrb[0].mxu0
  %v4125 = vadd.f32 0.0, %v4124
  %v4126 = vpop.f32.mrb[0].mxu0
  %4127 = vmatprep.mubr.f32.mxu0 0.0
  %4128 = vmatmul.mubr.f32.gmra.mrb[0].mxu0 %v3772
  %v4129 = vpop.f32.mrb[0].mxu0
  %v4130 = vadd.f32 0.0, %v4129
  %v4131 = vpop.f32.mrb[0].mxu0
  %4132 = vmatprep.mubr.f32.mxu0 0.0
  %4133 = vmatmul.mubr.f32.gmra.mrb[0].mxu0 %v3775
  %v4134 = vpop.f32.mrb[0].mxu0
  %v4135 = vadd.f32 0.0, %v4134
  %v4136 = vpop.f32.mrb[0].mxu0
  %4137 = vmatprep.mubr.f32.mxu0 0.0
  %4138 = vmatmul.mubr.f32.gmra.mrb[0].mxu0 %v3778
  %v4139 = vpop.f32.mrb[0].mxu0
  %v4140 = vadd.f32 0.0, %v4139
  %v4141 = vpop.f32.mrb[0].mxu0
  %4142 = vmatprep.mubr.f32.mxu0 0.0
  %4143 = vmatmul.mubr.f32.gmra.mrb[0].mxu0 %v3781
  %v4144 = vpop.f32.mrb[0].mxu0
  %v4145 = vadd.f32 0.0, %v4144
  %v4146 = vpop.f32.mrb[0].mxu0
  %4147 = vmatprep.mubr.f32.mxu0 0.0
  %4148 = vmatmul.mubr.f32.gmra.mrb[0].mxu0 %v3784
  %v4149 = vpop.f32.mrb[0].mxu0
  %v4150 = vadd.f32 0.0, %v4149
  %v4151 = vpop.f32.mrb[0].mxu0
  %4152 = vmatprep.mubr.f32.mxu0 0.0
  %4153 = vmatmul.mubr.f32.gmra.mrb[0].mxu0 %v3787
  %v4154 = vpop.f32.mrb[0].mxu0
  %v4155 = vadd.f32 0.0, %v4154
  %v4156 = vpop.f32.mrb[0].mxu0
  %4157 = vmatprep.mubr.f32.mxu0 0.0
  %4158 = vmatmul.mubr.f32.gmra.mrb[0].mxu0 %v3790
  %v4159 = vpop.f32.mrb[0].mxu0
  %v4160 = vadd.f32 0.0, %v4159
  %v4161 = vpop.f32.mrb[0].mxu0
  %4162 = vmatprep.mubr.f32.mxu0 0.0
  %4163 = vmatmul.mubr.f32.gmra.mrb[0].mxu0 %v3793
  %v4164 = vpop.f32.mrb[0].mxu0
  %v4165 = vadd.f32 0.0, %v4164
  %v4166 = vpop.f32.mrb[0].mxu0
  %4167 = vmatprep.mubr.f32.mxu0 0.0
  %4168 = vmatmul.mubr.f32.gmra.mrb[0].mxu0 %v3796
  %v4169 = vpop.f32.mrb[0].mxu0
  %v4170 = vadd.f32 0.0, %v4169
  %v4171 = vpop.f32.mrb[0].mxu0
  %4172 = vmatprep.mubr.f32.mxu0 0.0
  %4173 = vmatmul.mubr.f32.gmra.mrb[0].mxu0 %v3799
  %v4174 = vpop.f32.mrb[0].mxu0
  %v4175 = vadd.f32 0.0, %v4174
  %v4176 = vpop.f32.mrb[0].mxu0
  %4177 = vmatprep.mubr.f32.mxu0 0.0
  %4178 = vmatmul.mubr.f32.gmra.mrb[0].mxu0 %v3802
  %v4179 = vpop.f32.mrb[0].mxu0
  %v4180 = vadd.f32 0.0, %v4179
  %v4181 = vpop.f32.mrb[0].mxu0
  %4182 = vmatprep.mubr.f32.mxu0 0.0
  %4183 = vmatmul.mubr.f32.gmra.mrb[0].mxu0 %v3805
  %v4184 = vpop.f32.mrb[0].mxu0
  %v4185 = vadd.f32 0.0, %v4184
  %v4186 = vpop.f32.mrb[0].mxu0
  %4187 = vmatprep.mubr.f32.mxu0 0.0
  %4188 = vmatmul.mubr.f32.gmra.mrb[0].mxu0 %v3808
  %v4189 = vpop.f32.mrb[0].mxu0
  %v4190 = vadd.f32 0.0, %v4189
  %v4191 = vpop.f32.mrb[0].mxu0
  %4192 = vmatprep.mubr.f32.mxu0 0.0
  %4193 = vmatmul.mubr.f32.gmra.mrb[0].mxu0 %v3811
  %v4194 = vpop.f32.mrb[0].mxu0
  %v4195 = vadd.f32 0.0, %v4194
  %v4196 = vpop.f32.mrb[0].mxu0
  %4197 = vdwg.mxu0
  %v4198 = vmul.f32 %v3880, %v461
  %v4199 = vmul.f32 %v3885, %v461
  %v4200 = vmul.f32 %v3890, %v461
  %v4201 = vmul.f32 %v3895, %v461
  %v4202 = vmul.f32 %v3900, %v461
  %v4203 = vmul.f32 %v3905, %v461
  %v4204 = vmul.f32 %v3910, %v461
  %v4205 = vmul.f32 %v3915, %v461
  %v4206 = vadd.f32 %v4198, 0.0
  %v4207 = vadd.f32 %v4199, 0.0
  %v4208 = vadd.f32 %v4200, 0.0
  %v4209 = vadd.f32 %v4201, 0.0
  %v4210 = vadd.f32 %v4202, 0.0
  %v4211 = vadd.f32 %v4203, 0.0
  %v4212 = vadd.f32 %v4204, 0.0
  %v4213 = vadd.f32 %v4205, 0.0
  %v4214 = vmul.f32 %v3920, %v466
  %v4215 = vmul.f32 %v3925, %v466
  %v4216 = vmul.f32 %v3930, %v466
  %v4217 = vmul.f32 %v3935, %v466
  %v4218 = vmul.f32 %v3940, %v466
  %v4219 = vmul.f32 %v3945, %v466
  %v4220 = vmul.f32 %v3950, %v466
  %v4221 = vmul.f32 %v3955, %v466
  %v4222 = vadd.f32 %v4206, %v4214
  %v4223 = vadd.f32 %v4207, %v4215
  %v4224 = vadd.f32 %v4208, %v4216
  %v4225 = vadd.f32 %v4209, %v4217
  %v4226 = vadd.f32 %v4210, %v4218
  %v4227 = vadd.f32 %v4211, %v4219
  %v4228 = vadd.f32 %v4212, %v4220
  %v4229 = vadd.f32 %v4213, %v4221
  %v4230 = vmul.f32 %v3960, %v471
  %v4231 = vmul.f32 %v3965, %v471
  %v4232 = vmul.f32 %v3970, %v471
  %v4233 = vmul.f32 %v3975, %v471
  %v4234 = vmul.f32 %v3980, %v471
  %v4235 = vmul.f32 %v3985, %v471
  %v4236 = vmul.f32 %v3990, %v471
  %v4237 = vmul.f32 %v3995, %v471
  %v4238 = vadd.f32 %v4222, %v4230
  %v4239 = vadd.f32 %v4223, %v4231
  %v4240 = vadd.f32 %v4224, %v4232
  %v4241 = vadd.f32 %v4225, %v4233
  %v4242 = vadd.f32 %v4226, %v4234
  %v4243 = vadd.f32 %v4227, %v4235
  %v4244 = vadd.f32 %v4228, %v4236
  %v4245 = vadd.f32 %v4229, %v4237
  %v4246 = vmul.f32 %v4000, %v476
  %v4247 = vmul.f32 %v4005, %v476
  %v4248 = vmul.f32 %v4010, %v476
  %v4249 = vmul.f32 %v4015, %v476
  %v4250 = vmul.f32 %v4020, %v476
  %v4251 = vmul.f32 %v4025, %v476
  %v4252 = vmul.f32 %v4030, %v476
  %v4253 = vmul.f32 %v4035, %v476
  %v4254 = vadd.f32 %v4238, %v4246
  %v4255 = vadd.f32 %v4239, %v4247
  %v4256 = vadd.f32 %v4240, %v4248
  %v4257 = vadd.f32 %v4241, %v4249
  %v4258 = vadd.f32 %v4242, %v4250
  %v4259 = vadd.f32 %v4243, %v4251
  %v4260 = vadd.f32 %v4244, %v4252
  %v4261 = vadd.f32 %v4245, %v4253
  %v4262 = vmul.f32 %v4040, %v481
  %v4263 = vmul.f32 %v4045, %v481
  %v4264 = vmul.f32 %v4050, %v481
  %v4265 = vmul.f32 %v4055, %v481
  %v4266 = vmul.f32 %v4060, %v481
  %v4267 = vmul.f32 %v4065, %v481
  %v4268 = vmul.f32 %v4070, %v481
  %v4269 = vmul.f32 %v4075, %v481
  %v4270 = vadd.f32 %v4254, %v4262
  %v4271 = vadd.f32 %v4255, %v4263
  %v4272 = vadd.f32 %v4256, %v4264
  %v4273 = vadd.f32 %v4257, %v4265
  %v4274 = vadd.f32 %v4258, %v4266
  %v4275 = vadd.f32 %v4259, %v4267
  %v4276 = vadd.f32 %v4260, %v4268
  %v4277 = vadd.f32 %v4261, %v4269
  %v4278 = vmul.f32 %v4080, %v486
  %v4279 = vmul.f32 %v4085, %v486
  %v4280 = vmul.f32 %v4090, %v486
  %v4281 = vmul.f32 %v4095, %v486
  %v4282 = vmul.f32 %v4100, %v486
  %v4283 = vmul.f32 %v4105, %v486
  %v4284 = vmul.f32 %v4110, %v486
  %v4285 = vmul.f32 %v4115, %v486
  %v4286 = vadd.f32 %v4270, %v4278
  %v4287 = vadd.f32 %v4271, %v4279
  %v4288 = vadd.f32 %v4272, %v4280
  %v4289 = vadd.f32 %v4273, %v4281
  %v4290 = vadd.f32 %v4274, %v4282
  %v4291 = vadd.f32 %v4275, %v4283
  %v4292 = vadd.f32 %v4276, %v4284
  %v4293 = vadd.f32 %v4277, %v4285
  %v4294 = vmul.f32 %v4120, %v491
  %v4295 = vmul.f32 %v4125, %v491
  %v4296 = vmul.f32 %v4130, %v491
  %v4297 = vmul.f32 %v4135, %v491
  %v4298 = vmul.f32 %v4140, %v491
  %v4299 = vmul.f32 %v4145, %v491
  %v4300 = vmul.f32 %v4150, %v491
  %v4301 = vmul.f32 %v4155, %v491
  %v4302 = vadd.f32 %v4286, %v4294
  %v4303 = vadd.f32 %v4287, %v4295
  %v4304 = vadd.f32 %v4288, %v4296
  %v4305 = vadd.f32 %v4289, %v4297
  %v4306 = vadd.f32 %v4290, %v4298
  %v4307 = vadd.f32 %v4291, %v4299
  %v4308 = vadd.f32 %v4292, %v4300
  %v4309 = vadd.f32 %v4293, %v4301
  %v4310 = vmul.f32 %v4160, %v496
  %v4311 = vmul.f32 %v4165, %v496
  %v4312 = vmul.f32 %v4170, %v496
  %v4313 = vmul.f32 %v4175, %v496
  %v4314 = vmul.f32 %v4180, %v496
  %v4315 = vmul.f32 %v4185, %v496
  %v4316 = vmul.f32 %v4190, %v496
  %v4317 = vmul.f32 %v4195, %v496
  %v4318 = vadd.f32 %v4302, %v4310
  %v4319 = vadd.f32 %v4303, %v4311
  %v4320 = vadd.f32 %v4304, %v4312
  %v4321 = vadd.f32 %v4305, %v4313
  %v4322 = vadd.f32 %v4306, %v4314
  %v4323 = vadd.f32 %v4307, %v4315
  %v4324 = vadd.f32 %v4308, %v4316
  %v4325 = vadd.f32 %v4309, %v4317
  %v4327 = vlaneseq
  %v4328 = vshrl.u32 %v4327, 7
  %v4329 = vsub.s32 0, %v4328
  %v4330 = vrot.slane %v99, %v4329
  %v4333 = vsel %vm116, %v2500, 0
  %v4336 = vsel %vm116, %v2501, 0
  %v4339 = vsel %vm116, %v2502, 0
  %v4342 = vsel %vm116, %v2503, 0
  %v4345 = vsel %vm116, %v2504, 0
  %v4348 = vsel %vm116, %v2505, 0
  %v4351 = vsel %vm116, %v2506, 0
  %v4354 = vsel %vm116, %v2507, 0
  %v4357 = vsel %vm116, %v4318, 0
  %v4360 = vsel %vm116, %v4319, 0
  %v4363 = vsel %vm116, %v4320, 0
  %v4366 = vsel %vm116, %v4321, 0
  %v4369 = vsel %vm116, %v4322, 0
  %v4372 = vsel %vm116, %v4323, 0
  %v4375 = vsel %vm116, %v4324, 0
  %v4378 = vsel %vm116, %v4325, 0
  %4380 = vmatprep.subr.mxu0 0.0
  %4381 = vmatpush1.msra.mxu0 %v95
  %4382 = vmatprep.subr.mxu0 0.0
  %4383 = vmatpush1.msra.mxu0 %v96
  %4384 = vmatprep.subr.mxu0 0.0
  %4385 = vmatpush1.msra.mxu0 %v97
  %4386 = vmatprep.subr.mxu0 0.0
  %4387 = vmatpush1.msra.mxu0 %v98
  %4388 = vmatprep.subr.mxu0 0.0
  %4389 = vmatpush1.msra.mxu0 0.0
  %4390 = vmatprep.subr.mxu0 0.0
  %4391 = vmatpush1.msra.mxu0 0.0
  %4392 = vmatprep.subr.mxu0 0.0
  %4393 = vmatpush1.msra.mxu0 0.0
  %4394 = vmatprep.subr.mxu0 0.0
  %4395 = vmatpush1.msra.mxu0 0.0
  %4396 = vmatprep.subr.mxu0 0.0
  %4397 = vmatpush1.msra.mxu0 0.0
  %4398 = vmatprep.subr.mxu0 0.0
  %4399 = vmatpush1.msra.mxu0 0.0
  %4400 = vmatprep.subr.mxu0 0.0
  %4401 = vmatpush1.msra.mxu0 0.0
  %4402 = vmatprep.subr.mxu0 0.0
  %4403 = vmatpush1.msra.mxu0 0.0
  %4404 = vmatprep.subr.mxu0 0.0
  %4405 = vmatpush1.msra.mxu0 0.0
  %4406 = vmatprep.subr.mxu0 0.0
  %4407 = vmatpush1.msra.mxu0 0.0
  %4408 = vmatprep.subr.mxu0 0.0
  %4409 = vmatpush1.msra.mxu0 0.0
  %4410 = vmatprep.subr.mxu0 0.0
  %4411 = vmatpush1.msra.mxu0 0.0
  %4412 = vmatprep.subr.mxu0 0.0
  %4413 = vmatpush1.msra.mxu0 0.0
  %4414 = vmatprep.subr.mxu0 0.0
  %4415 = vmatpush1.msra.mxu0 0.0
  %4416 = vmatprep.subr.mxu0 0.0
  %4417 = vmatpush1.msra.mxu0 0.0
  %4418 = vmatprep.subr.mxu0 0.0
  %4419 = vmatpush1.msra.mxu0 0.0
  %4420 = vmatprep.subr.mxu0 0.0
  %4421 = vmatpush1.msra.mxu0 0.0
  %4422 = vmatprep.subr.mxu0 0.0
  %4423 = vmatpush1.msra.mxu0 0.0
  %4424 = vmatprep.subr.mxu0 0.0
  %4425 = vmatpush1.msra.mxu0 0.0
  %4426 = vmatprep.subr.mxu0 0.0
  %4427 = vmatpush1.msra.mxu0 0.0
  %4428 = vmatprep.subr.mxu0 0.0
  %4429 = vmatpush1.msra.mxu0 0.0
  %4430 = vmatprep.subr.mxu0 0.0
  %4431 = vmatpush1.msra.mxu0 0.0
  %4432 = vmatprep.subr.mxu0 0.0
  %4433 = vmatpush1.msra.mxu0 0.0
  %4434 = vmatprep.subr.mxu0 0.0
  %4435 = vmatpush1.msra.mxu0 0.0
  %4436 = vmatprep.subr.mxu0 0.0
  %4437 = vmatpush1.msra.mxu0 0.0
  %4438 = vmatprep.subr.mxu0 0.0
  %4439 = vmatpush1.msra.mxu0 0.0
  %4440 = vmatprep.subr.mxu0 0.0
  %4441 = vmatpush1.msra.mxu0 0.0
  %4442 = vmatprep.subr.mxu0 0.0
  %4443 = vmatpush1.msra.mxu0 0.0
  %4444 = vmatprep.mubr.f32.mxu0 0.0
  %4445 = vmatmul.mubr.f32.gmra.mrb[0].mxu0 %v4333
  %v4446 = vpop.f32.mrb[0].mxu0
  %v4447 = vadd.f32 %v4330, %v4446
  %v4448 = vpop.f32.mrb[0].mxu0
  %4449 = vmatprep.mubr.f32.mxu0 0.0
  %4450 = vmatmul.mubr.f32.gmra.mrb[0].mxu0 %v4336
  %v4451 = vpop.f32.mrb[0].mxu0
  %v4452 = vadd.f32 %v4330, %v4451
  %v4453 = vpop.f32.mrb[0].mxu0
  %4454 = vmatprep.mubr.f32.mxu0 0.0
  %4455 = vmatmul.mubr.f32.gmra.mrb[0].mxu0 %v4339
  %v4456 = vpop.f32.mrb[0].mxu0
  %v4457 = vadd.f32 %v4330, %v4456
  %v4458 = vpop.f32.mrb[0].mxu0
  %4459 = vmatprep.mubr.f32.mxu0 0.0
  %4460 = vmatmul.mubr.f32.gmra.mrb[0].mxu0 %v4342
  %v4461 = vpop.f32.mrb[0].mxu0
  %v4462 = vadd.f32 %v4330, %v4461
  %v4463 = vpop.f32.mrb[0].mxu0
  %4464 = vmatprep.mubr.f32.mxu0 0.0
  %4465 = vmatmul.mubr.f32.gmra.mrb[0].mxu0 %v4345
  %v4466 = vpop.f32.mrb[0].mxu0
  %v4467 = vadd.f32 %v4330, %v4466
  %v4468 = vpop.f32.mrb[0].mxu0
  %4469 = vmatprep.mubr.f32.mxu0 0.0
  %4470 = vmatmul.mubr.f32.gmra.mrb[0].mxu0 %v4348
  %v4471 = vpop.f32.mrb[0].mxu0
  %v4472 = vadd.f32 %v4330, %v4471
  %v4473 = vpop.f32.mrb[0].mxu0
  %4474 = vmatprep.mubr.f32.mxu0 0.0
  %4475 = vmatmul.mubr.f32.gmra.mrb[0].mxu0 %v4351
  %v4476 = vpop.f32.mrb[0].mxu0
  %v4477 = vadd.f32 %v4330, %v4476
  %v4478 = vpop.f32.mrb[0].mxu0
  %4479 = vmatprep.mubr.f32.mxu0 0.0
  %4480 = vmatmul.mubr.f32.gmra.mrb[0].mxu0 %v4354
  %v4481 = vpop.f32.mrb[0].mxu0
  %v4482 = vadd.f32 %v4330, %v4481
  %v4483 = vpop.f32.mrb[0].mxu0
  %4484 = vmatprep.mubr.f32.mxu0 0.0
  %4485 = vmatmul.mubr.f32.gmra.mrb[0].mxu0 %v4357
  %v4486 = vpop.f32.mrb[0].mxu0
  %v4487 = vadd.f32 %v4330, %v4486
  %v4488 = vpop.f32.mrb[0].mxu0
  %4489 = vmatprep.mubr.f32.mxu0 0.0
  %4490 = vmatmul.mubr.f32.gmra.mrb[0].mxu0 %v4360
  %v4491 = vpop.f32.mrb[0].mxu0
  %v4492 = vadd.f32 %v4330, %v4491
  %v4493 = vpop.f32.mrb[0].mxu0
  %4494 = vmatprep.mubr.f32.mxu0 0.0
  %4495 = vmatmul.mubr.f32.gmra.mrb[0].mxu0 %v4363
  %v4496 = vpop.f32.mrb[0].mxu0
  %v4497 = vadd.f32 %v4330, %v4496
  %v4498 = vpop.f32.mrb[0].mxu0
  %4499 = vmatprep.mubr.f32.mxu0 0.0
  %4500 = vmatmul.mubr.f32.gmra.mrb[0].mxu0 %v4366
  %v4501 = vpop.f32.mrb[0].mxu0
  %v4502 = vadd.f32 %v4330, %v4501
  %v4503 = vpop.f32.mrb[0].mxu0
  %4504 = vmatprep.mubr.f32.mxu0 0.0
  %4505 = vmatmul.mubr.f32.gmra.mrb[0].mxu0 %v4369
  %v4506 = vpop.f32.mrb[0].mxu0
  %v4507 = vadd.f32 %v4330, %v4506
  %v4508 = vpop.f32.mrb[0].mxu0
  %4509 = vmatprep.mubr.f32.mxu0 0.0
  %4510 = vmatmul.mubr.f32.gmra.mrb[0].mxu0 %v4372
  %v4511 = vpop.f32.mrb[0].mxu0
  %v4512 = vadd.f32 %v4330, %v4511
  %v4513 = vpop.f32.mrb[0].mxu0
  %4514 = vmatprep.mubr.f32.mxu0 0.0
  %4515 = vmatmul.mubr.f32.gmra.mrb[0].mxu0 %v4375
  %v4516 = vpop.f32.mrb[0].mxu0
  %v4517 = vadd.f32 %v4330, %v4516
  %v4518 = vpop.f32.mrb[0].mxu0
  %4519 = vmatprep.mubr.f32.mxu0 0.0
  %4520 = vmatmul.mubr.f32.gmra.mrb[0].mxu0 %v4378
  %v4521 = vpop.f32.mrb[0].mxu0
  %v4522 = vadd.f32 %v4330, %v4521
  %v4523 = vpop.f32.mrb[0].mxu0
  %4524 = vdwg.mxu0
  %4525 = vst.msk [vmem:[%s6] sm:$0xff] %vm116, %v4447
  %4526 = vst.msk [vmem:[%s6 + $0x8] sm:$0xff] %vm116, %v4452
  %4527 = vst.msk [vmem:[%s6 + $0x10] sm:$0xff] %vm116, %v4457
  %4528 = vst.msk [vmem:[%s6 + $0x18] sm:$0xff] %vm116, %v4462
  %4529 = vst.msk [vmem:[%s6 + $0x20] sm:$0xff] %vm116, %v4467
  %4530 = vst.msk [vmem:[%s6 + $0x28] sm:$0xff] %vm116, %v4472
  %4531 = vst.msk [vmem:[%s6 + $0x30] sm:$0xff] %vm116, %v4477
  %4532 = vst.msk [vmem:[%s6 + $0x38] sm:$0xff] %vm116, %v4482
  %4533 = vst.msk [vmem:[%s6 + $0x40] sm:$0xff] %vm116, %v4487
  %4534 = vst.msk [vmem:[%s6 + $0x48] sm:$0xff] %vm116, %v4492
  %4535 = vst.msk [vmem:[%s6 + $0x50] sm:$0xff] %vm116, %v4497
  %4536 = vst.msk [vmem:[%s6 + $0x58] sm:$0xff] %vm116, %v4502
  %4537 = vst.msk [vmem:[%s6 + $0x60] sm:$0xff] %vm116, %v4507
  %4538 = vst.msk [vmem:[%s6 + $0x68] sm:$0xff] %vm116, %v4512
  %4539 = vst.msk [vmem:[%s6 + $0x70] sm:$0xff] %vm116, %v4517
  %4540 = vst.msk [vmem:[%s6 + $0x78] sm:$0xff] %vm116, %v4522
  // Predicated region
  $region26: #{tpu_custom_call.1} parent=0 // pred_check
    _
  $region27: #{tpu_custom_call.1} parent=0 // pred_check_branch
    %4542 = sbr.rel (0) target = $region29
  $region28: #{tpu_custom_call.1} parent=0 // pred_region
    _
  $region29: #{tpu_custom_call.1} parent=0 // pred_fallthru
    _
  // Predicated region
  $region30: #{tpu_custom_call.1} parent=0 // pred_check
    _
  $region31: #{tpu_custom_call.1} parent=0 // pred_check_branch
    %4544 = sbr.rel (0) target = $region33
  $region32: #{tpu_custom_call.1} parent=0 // pred_region
    _
  $region33: #{tpu_custom_call.1} parent=0 // pred_fallthru
    _

</llo_original>
